<compile_context>
chip_gen: v7x
topology: tpu7x:2x2x1
jax: 0.10.0
libtpu: 0.0.40
codegen_flags: <defaults>
</compile_context>

<pallas_src>
import functools
import math

import jax
import jax.numpy as jnp
from jax import lax
from jax.experimental import pallas as pl
from jax.experimental.pallas import tpu as pltpu


# MXU operand dtype: bf16 inputs + f32 accumulation.
_MXU_DTYPE = jnp.bfloat16
_LN_EPS = 1e-5


# ----------------------------------------------------------------------------
# In-kernel math helpers (all f32 elementwise)
# ----------------------------------------------------------------------------
def _erf(x):
    # Abramowitz & Stegun 7.1.26 polynomial (max abs err ~1.5e-7).
    a1, a2, a3, a4, a5 = 0.254829592, -0.284496736, 1.421413741, -1.453152027, 1.061405429
    p = 0.3275911
    sgn = jnp.where(x >= 0.0, 1.0, -1.0)
    ax = jnp.abs(x)
    t = 1.0 / (1.0 + p * ax)
    poly = ((((a5 * t + a4) * t + a3) * t + a2) * t + a1) * t
    return sgn * (1.0 - poly * jnp.exp(-ax * ax))


def _gelu(x):
    # torch.nn.GELU() (erf form)
    return 0.5 * x * (1.0 + _erf(x * 0.7071067811865476))


def _layernorm(x, gamma, beta, eps):
    mean = jnp.mean(x, axis=-1, keepdims=True)
    c = x - mean
    var = jnp.mean(c * c, axis=-1, keepdims=True)
    return c * lax.rsqrt(var + eps) * gamma + beta


def _mlp_body(x_f32, gamma, beta, w1_ref, b1_ref, w2_ref, b2_ref, eps):
    xn = _layernorm(x_f32, gamma, beta, eps).astype(_MXU_DTYPE)
    h = _gelu(jnp.dot(xn, w1_ref[...], preferred_element_type=jnp.float32) + b1_ref[...])
    return jnp.dot(h.astype(_MXU_DTYPE), w2_ref[...],
                   preferred_element_type=jnp.float32) + b2_ref[...]


# ----------------------------------------------------------------------------
# Kernels
# ----------------------------------------------------------------------------
def _fused_self_attn_kernel(x_ref, mask_ref, adjt_ref, g1_ref, b1_ref,
                            wqkv_ref, bqkv_ref, w1t_ref, w2t_ref,
                            wproj_ref, bproj_ref, aw_ref, o_ref,
                            *, n_head, head_dim, seq_len, eps, scale):
    # One grid step = one batch element.
    # x_ref:(1,T,C) f32, mask_ref:(1,T,T) f32, adjt_ref:(1,F,T*T) bf16,
    # wqkv_ref:(3,H,C,D) bf16, bqkv_ref:(3,H,1,D) f32, w1t_ref:(2H,F) bf16,
    # w2t_ref:(H,2H) bf16, wproj_ref:(H,D,C) bf16, bproj_ref:(1,C) f32,
    # aw_ref:(1,1) f32 in SMEM.  Output: (1,T,C) f32 = x + attn_out (residual fused).
    x = x_ref[0]                                              # (T, C) f32
    mask = mask_ref[0]                                        # (T, T)
    xn = _layernorm(x, g1_ref[...], b1_ref[...], eps).astype(_MXU_DTYPE)

    # adj MLP in F-major layout -> fix (H, T, T); head index is a leading-dim slice.
    g = jnp.dot(w1t_ref[...], adjt_ref[0],
                preferred_element_type=jnp.float32)           # (2H, T*T)
    g = _gelu(g).astype(_MXU_DTYPE)
    fix = jnp.dot(w2t_ref[...], g,
                  preferred_element_type=jnp.float32) * aw_ref[0, 0]   # (H, T*T)
    fix = fix.reshape(n_head, seq_len, seq_len)               # VMEM-local reshape only

    acc = jnp.zeros((seq_len, n_head * head_dim), jnp.float32)
    for h in range(n_head):                                   # static unroll
        q = jnp.dot(xn, wqkv_ref[0, h], preferred_element_type=jnp.float32) + bqkv_ref[0, h]
        k = jnp.dot(xn, wqkv_ref[1, h], preferred_element_type=jnp.float32) + bqkv_ref[1, h]
        v = jnp.dot(xn, wqkv_ref[2, h], preferred_element_type=jnp.float32) + bqkv_ref[2, h]
        att = lax.dot_general(q.astype(_MXU_DTYPE), k.astype(_MXU_DTYPE),
                              (((1,), (1,)), ((), ())),
                              preferred_element_type=jnp.float32) * scale
        att = jnp.where(mask == 0.0, -1e9, att)
        att = att - jnp.max(att, axis=-1, keepdims=True)
        e = jnp.exp(att)
        att = e / jnp.sum(e, axis=-1, keepdims=True)          # exact softmax
        att = att + fix[h]                                    # adj fix added post-softmax
        y_h = jnp.dot(att.astype(_MXU_DTYPE), v.astype(_MXU_DTYPE),
                      preferred_element_type=jnp.float32)     # (T, D)
        acc = acc + jnp.dot(y_h.astype(_MXU_DTYPE), wproj_ref[h],
                            preferred_element_type=jnp.float32)   # (T, C)
    o_ref[0] = x + acc + bproj_ref[...]


def _ln_mlp_res_kernel(x_ref, gamma_ref, beta_ref, w1_ref, b1_ref, w2_ref, b2_ref,
                       o_ref, *, eps):
    # out = x + fc2(gelu(fc1(LN(x))))   (4C intermediate stays in VMEM)
    x = x_ref[0]
    o_ref[0] = x + _mlp_body(x, gamma_ref[...], beta_ref[...],
                             w1_ref, b1_ref, w2_ref, b2_ref, eps)


def _cross_ln_mlp_res_kernel(x_ref, graph_ref, vw_ref, vb_ref, pw_ref, pb_ref,
                             gamma_ref, beta_ref, w1_ref, b1_ref, w2_ref, b2_ref,
                             o_ref, *, eps):
    # Cross-attention collapses exactly to proj(value(graph)) broadcast over T
    # (softmax over a single key == 1).  Fused with its residual add, LN4 and MLP2.
    gvec = graph_ref[0].astype(_MXU_DTYPE)                    # (1, C)
    v = jnp.dot(gvec, vw_ref[...], preferred_element_type=jnp.float32) + vb_ref[...]
    cross = jnp.dot(v.astype(_MXU_DTYPE), pw_ref[...],
                    preferred_element_type=jnp.float32) + pb_ref[...]   # (1, C)
    x = x_ref[0] + cross                                      # residual add (broadcast over T)
    o_ref[0] = x + _mlp_body(x, gamma_ref[...], beta_ref[...],
                             w1_ref, b1_ref, w2_ref, b2_ref, eps)


# ----------------------------------------------------------------------------
# pallas_call wrappers
# ----------------------------------------------------------------------------
def _cparams(semantics, est_bytes):
    # Explicit scoped-VMEM budget sized from the actual resident blocks; clamped
    # below v7x's 64 MiB physical VMEM and above the v5e 16 MiB default.
    limit = int(min(48 * 2 ** 20, max(8 * 2 ** 20, 3 * int(est_bytes))))
    return pltpu.CompilerParams(dimension_semantics=semantics, vmem_limit_bytes=limit)


def _t_tile(t, target=512):
    """Largest sequence tile <= target dividing t (multiple of 8 when tiling)."""
    if t <= target:
        return t
    for cand in range(target - (target % 8), 7, -8):
        if t % cand == 0:
            return cand
    return t


def pallas_block_attn(x, mask, adjT, p, n_head, eps=_LN_EPS):
    b, t, c = x.shape
    d = c // n_head
    f = adjT.shape[1]
    tt = adjT.shape[2]
    kern = functools.partial(_fused_self_attn_kernel, n_head=n_head, head_dim=d,
                             seq_len=t, eps=eps, scale=1.0 / math.sqrt(d))
    est = (2 * t * c * 4 + t * t * 4 + f * tt * 2        # x in/out, mask, adjT
           + 4 * c * c * 2                               # qkv + proj weights (bf16)
           + 3 * n_head * tt * 4                         # G / fix intermediates
           + 8 * c * 4)                                  # biases / LN params
    return pl.pallas_call(
        kern,
        out_shape=jax.ShapeDtypeStruct((b, t, c), jnp.float32),
        grid=(b,),
        in_specs=[
            pl.BlockSpec((1, t, c), lambda i: (i, 0, 0)),             # x
            pl.BlockSpec((1, t, t), lambda i: (i, 0, 0)),             # pad mask
            pl.BlockSpec((1, f, tt), lambda i: (i, 0, 0)),            # adjT (bf16)
            pl.BlockSpec((1, c), lambda i: (0, 0)),                   # ln1 gamma
            pl.BlockSpec((1, c), lambda i: (0, 0)),                   # ln1 beta
            pl.BlockSpec((3, n_head, c, d), lambda i: (0, 0, 0, 0)),  # wqkv (bf16)
            pl.BlockSpec((3, n_head, 1, d), lambda i: (0, 0, 0, 0)),  # bqkv
            pl.BlockSpec((2 * n_head, f), lambda i: (0, 0)),          # adj_proj1^T (bf16)
            pl.BlockSpec((n_head, 2 * n_head), lambda i: (0, 0)),     # adj_proj2^T (bf16)
            pl.BlockSpec((n_head, d, c), lambda i: (0, 0, 0)),        # wproj (bf16)
            pl.BlockSpec((1, c), lambda i: (0, 0)),                   # bproj
            pl.BlockSpec(memory_space=pltpu.MemorySpace.SMEM),        # adj_weight (1,1)
        ],
        out_specs=pl.BlockSpec((1, t, c), lambda i: (i, 0, 0)),
        compiler_params=_cparams(("parallel",), est),
    )(x, mask, adjT, p["ln1_g"], p["ln1_b"], p["wqkv"], p["bqkv"],
      p["w1t"], p["w2t"], p["wproj"], p["bproj"], p["adj_weight"])


def pallas_ln_mlp(x, gamma, beta, w1, b1, w2, b2, eps=_LN_EPS):
    bsz, t, c = x.shape
    hdim = w1.shape[1]
    tt = _t_tile(t)
    est = 2 * tt * c * 4 + tt * hdim * 4 + 2 * c * hdim * 2 + (hdim + 4 * c) * 4
    kern = functools.partial(_ln_mlp_res_kernel, eps=eps)
    return pl.pallas_call(
        kern,
        out_shape=jax.ShapeDtypeStruct((bsz, t, c), jnp.float32),
        grid=(bsz, t // tt),
        in_specs=[
            pl.BlockSpec((1, tt, c), lambda i, j: (i, j, 0)),
            pl.BlockSpec((1, c), lambda i, j: (0, 0)),
            pl.BlockSpec((1, c), lambda i, j: (0, 0)),
            pl.BlockSpec((c, hdim), lambda i, j: (0, 0)),
            pl.BlockSpec((1, hdim), lambda i, j: (0, 0)),
            pl.BlockSpec((hdim, c), lambda i, j: (0, 0)),
            pl.BlockSpec((1, c), lambda i, j: (0, 0)),
        ],
        out_specs=pl.BlockSpec((1, tt, c), lambda i, j: (i, j, 0)),
        compiler_params=_cparams(("parallel", "parallel"), est),
    )(x, gamma, beta, w1, b1, w2, b2)


def pallas_cross_mlp(x, graph, vw, vb, pw, pb, gamma, beta, w1, b1, w2, b2, eps=_LN_EPS):
    bsz, t, c = x.shape
    hdim = w1.shape[1]
    tt = _t_tile(t)
    est = (2 * tt * c * 4 + tt * hdim * 4 + 2 * c * hdim * 2 + 2 * c * c * 2
           + (hdim + 8 * c) * 4)
    kern = functools.partial(_cross_ln_mlp_res_kernel, eps=eps)
    return pl.pallas_call(
        kern,
        out_shape=jax.ShapeDtypeStruct((bsz, t, c), jnp.float32),
        grid=(bsz, t // tt),
        in_specs=[
            pl.BlockSpec((1, tt, c), lambda i, j: (i, j, 0)),   # x
            pl.BlockSpec((1, 1, c), lambda i, j: (i, 0, 0)),    # graph (B,1,C)
            pl.BlockSpec((c, c), lambda i, j: (0, 0)),          # cross value w (bf16)
            pl.BlockSpec((1, c), lambda i, j: (0, 0)),          # cross value b
            pl.BlockSpec((c, c), lambda i, j: (0, 0)),          # cross proj w (bf16)
            pl.BlockSpec((1, c), lambda i, j: (0, 0)),          # cross proj b
            pl.BlockSpec((1, c), lambda i, j: (0, 0)),          # ln4 gamma
            pl.BlockSpec((1, c), lambda i, j: (0, 0)),          # ln4 beta
            pl.BlockSpec((c, hdim), lambda i, j: (0, 0)),       # fc1 w (bf16)
            pl.BlockSpec((1, hdim), lambda i, j: (0, 0)),       # fc1 b
            pl.BlockSpec((hdim, c), lambda i, j: (0, 0)),       # fc2 w (bf16)
            pl.BlockSpec((1, c), lambda i, j: (0, 0)),          # fc2 b
        ],
        out_specs=pl.BlockSpec((1, tt, c), lambda i, j: (i, j, 0)),
        compiler_params=_cparams(("parallel", "parallel"), est),
    )(x, graph, vw, vb, pw, pb, gamma, beta, w1, b1, w2, b2)


# ----------------------------------------------------------------------------
# Module forward (glue)
# ----------------------------------------------------------------------------
def encoder_block_forward(x, mask, adjT, graph, p, n_head):
    # x = x + attn1(ln1(x))        -> fused attention kernel (residual inside)
    x = pallas_block_attn(x, mask, adjT, p, n_head)
    # x = x + mlp(ln2(x))
    x = pallas_ln_mlp(x, p["ln2_g"], p["ln2_b"],
                      p["mlp_w1"], p["mlp_b1"], p["mlp_w2"], p["mlp_b2"])
    # x = x + attn2(ln3(x), graph);  x = x + mlp2(ln4(x))   -> fused cross+MLP2 kernel
    x = pallas_cross_mlp(x, graph, p["cross_vw"], p["cross_vb"],
                         p["cross_pw"], p["cross_pb"],
                         p["ln4_g"], p["ln4_b"],
                         p["mlp2_w1"], p["mlp2_b1"], p["mlp2_w2"], p["mlp2_b2"])
    return x


def transformer_formula_encoder(x, x_padding_judge, adj, graph, params, n_head):
    b, t, c = x.shape
    f = adj.shape[-1]
    # Pad mask (B,T,T) and F-major flattened adj (B,F,T*T) built ONCE (layer-invariant).
    keep = 1.0 - x_padding_judge
    mask = keep[:, :, None] * keep[:, None, :]
    adjT = jnp.transpose(adj, (0, 3, 1, 2)).reshape(b, f, t * t).astype(_MXU_DTYPE)
    for p in params:
        x = encoder_block_forward(x, mask, adjT, graph, p, n_head)
    return x


# ----------------------------------------------------------------------------
# Deterministic synthetic parameter initialization + host-side layout prep
# ----------------------------------------------------------------------------
def init_params(key, n_layer, n_embd, n_head):
    """Parameters in standard (in, out) layouts, matching the torch module's shapes."""
    def nrm(k, shape, scale=0.02):
        return (scale * jax.random.normal(k, shape)).astype(jnp.float32)

    c, h = n_embd, n_head
    params = []
    for _ in range(n_layer):
        keys = jax.random.split(key, 12)
        key = keys[-1]
        params.append(dict(
            ln1_g=jnp.ones((1, c), jnp.float32), ln1_b=jnp.zeros((1, c), jnp.float32),
            ln2_g=jnp.ones((1, c), jnp.float32), ln2_b=jnp.zeros((1, c), jnp.float32),
            ln4_g=jnp.ones((1, c), jnp.float32), ln4_b=jnp.zeros((1, c), jnp.float32),
            qkv_w=nrm(keys[0], (c, 3 * c)), qkv_b=jnp.zeros((3 * c,), jnp.float32),
            proj_w=nrm(keys[1], (c, c)), proj_b=jnp.zeros((1, c), jnp.float32),
            adj1_w=nrm(keys[2], (12, 2 * h)),           # adj_proj1 (no bias)
            adj2_w=nrm(keys[3], (2 * h, h)),            # adj_proj2 (no bias)
            adj_weight=jnp.asarray(1e-5, jnp.float32),  # self-attn adj_weight init
            # Cross-attention: only value + proj affect the forward output.
            cross_v_w=nrm(keys[4], (c, c)), cross_v_b=jnp.zeros((1, c), jnp.float32),
            cross_p_w=nrm(keys[5], (c, c)), cross_p_b=jnp.zeros((1, c), jnp.float32),
            mlp_fc1_w=nrm(keys[6], (c, 4 * c)), mlp_fc1_b=jnp.zeros((1, 4 * c), jnp.float32),
            mlp_fc2_w=nrm(keys[7], (4 * c, c)), mlp_fc2_b=jnp.zeros((1, c), jnp.float32),
            mlp2_fc1_w=nrm(keys[8], (c, 4 * c)), mlp2_fc1_b=jnp.zeros((1, 4 * c), jnp.float32),
            mlp2_fc2_w=nrm(keys[9], (4 * c, c)), mlp2_fc2_b=jnp.zeros((1, c), jnp.float32),
        ))
    return params


def prepare_params(params, n_head):
    """One-time host-side prep: per-head weight layouts + bf16 casts (weight DMA/VMEM /2)."""
    out = []
    for p in params:
        c = p["qkv_w"].shape[0]
        d = c // n_head
        wqkv = jnp.transpose(p["qkv_w"].reshape(c, 3, n_head, d),
                             (1, 2, 0, 3)).astype(_MXU_DTYPE)          # (3,H,C,D)
        bqkv = p["qkv_b"].reshape(3, n_head, d)[:, :, None, :].astype(jnp.float32)
        wproj = p["proj_w"].reshape(n_head, d, c).astype(_MXU_DTYPE)   # (H,D,C)
        out.append(dict(
            ln1_g=p["ln1_g"], ln1_b=p["ln1_b"],
            ln2_g=p["ln2_g"], ln2_b=p["ln2_b"],
            ln4_g=p["ln4_g"], ln4_b=p["ln4_b"],
            wqkv=wqkv, bqkv=bqkv, wproj=wproj, bproj=p["proj_b"],
            w1t=jnp.transpose(p["adj1_w"]).astype(_MXU_DTYPE),         # (2H, F)
            w2t=jnp.transpose(p["adj2_w"]).astype(_MXU_DTYPE),         # (H, 2H)
            adj_weight=jnp.reshape(p["adj_weight"], (1, 1)).astype(jnp.float32),
            cross_vw=p["cross_v_w"].astype(_MXU_DTYPE), cross_vb=p["cross_v_b"],
            cross_pw=p["cross_p_w"].astype(_MXU_DTYPE), cross_pb=p["cross_p_b"],
            mlp_w1=p["mlp_fc1_w"].astype(_MXU_DTYPE), mlp_b1=p["mlp_fc1_b"],
            mlp_w2=p["mlp_fc2_w"].astype(_MXU_DTYPE), mlp_b2=p["mlp_fc2_b"],
            mlp2_w1=p["mlp2_fc1_w"].astype(_MXU_DTYPE), mlp2_b1=p["mlp2_fc1_b"],
            mlp2_w2=p["mlp2_fc2_w"].astype(_MXU_DTYPE), mlp2_b2=p["mlp2_fc2_b"],
        ))
    return out


# ----------------------------------------------------------------------------
# Main
# ----------------------------------------------------------------------------
if __name__ == "__main__":
    B, T, C, H, n_layer = 2, 8, 32, 4, 2

    key = jax.random.PRNGKey(0)
    k_x, k_g, k_adj, k_p = jax.random.split(key, 4)

    x = jax.random.normal(k_x, (B, T, C), dtype=jnp.float32)
    graph = jax.random.normal(k_g, (B, 1, C), dtype=jnp.float32)
    adj = jax.random.normal(k_adj, (B, T, T, 12), dtype=jnp.float32)
    # padding judge: 1.0 = padded; last two tokens of each sequence padded
    x_padding_judge = jnp.concatenate(
        [jnp.zeros((B, T - 2), jnp.float32), jnp.ones((B, 2), jnp.float32)], axis=1
    )

    params = prepare_params(init_params(k_p, n_layer, C, H), H)

    fwd = jax.jit(functools.partial(transformer_formula_encoder, n_head=H))
    out = jax.block_until_ready(fwd(x, x_padding_judge, adj, graph, params))

    assert out.shape == (B, T, C), out.shape
    assert bool(jnp.all(jnp.isfinite(out)))
    print("KERNEL_OK")
</pallas_src>

<mosaic_0001>
module attributes {stable_mosaic.version = 11 : i64} {
  func.func @_ln_mlp_res_kernel(%arg0: i32, %arg1: i32, %arg2: memref<1x8x32xf32, #tpu.memory_space<vmem>>, %arg3: memref<1x32xf32, #tpu.memory_space<vmem>>, %arg4: memref<1x32xf32, #tpu.memory_space<vmem>>, %arg5: memref<32x128xbf16, #tpu.memory_space<vmem>>, %arg6: memref<1x128xf32, #tpu.memory_space<vmem>>, %arg7: memref<128x32xbf16, #tpu.memory_space<vmem>>, %arg8: memref<1x32xf32, #tpu.memory_space<vmem>>, %arg9: memref<1x8x32xf32, #tpu.memory_space<vmem>>) attributes {dimension_semantics = [#tpu.dimension_semantics<parallel>, #tpu.dimension_semantics<parallel>], iteration_bounds = array<i64: 2, 1>, scalar_prefetch = 0 : i64, scratch_operands = 0 : i64, tpu.core_type = #tpu.core_type<tc>, window_params = [{transform_indices = @transform_0, window_bounds = array<i64: 1, 8, 32>}, {pipeline_mode = #tpu.pipeline_mode<synchronous>, transform_indices = @transform_1, window_bounds = array<i64: 1, 32>}, {pipeline_mode = #tpu.pipeline_mode<synchronous>, transform_indices = @transform_2, window_bounds = array<i64: 1, 32>}, {pipeline_mode = #tpu.pipeline_mode<synchronous>, transform_indices = @transform_3, window_bounds = array<i64: 32, 128>}, {pipeline_mode = #tpu.pipeline_mode<synchronous>, transform_indices = @transform_4, window_bounds = array<i64: 1, 128>}, {pipeline_mode = #tpu.pipeline_mode<synchronous>, transform_indices = @transform_5, window_bounds = array<i64: 128, 32>}, {pipeline_mode = #tpu.pipeline_mode<synchronous>, transform_indices = @transform_6, window_bounds = array<i64: 1, 32>}, {transform_indices = @transform_7, window_bounds = array<i64: 1, 8, 32>}]} {
    %c0 = arith.constant 0 : index
    %c0_0 = arith.constant 0 : index
    %c0_1 = arith.constant 0 : index
    %0 = vector.load %arg2[%c0, %c0_0, %c0_1] : memref<1x8x32xf32, #tpu.memory_space<vmem>>, vector<1x8x32xf32>
    %1 = vector.shape_cast %0 : vector<1x8x32xf32> to vector<8x32xf32>
    %c0_2 = arith.constant 0 : index
    %c0_3 = arith.constant 0 : index
    %2 = vector.load %arg3[%c0_2, %c0_3] : memref<1x32xf32, #tpu.memory_space<vmem>>, vector<1x32xf32>
    %c0_4 = arith.constant 0 : index
    %c0_5 = arith.constant 0 : index
    %3 = vector.load %arg4[%c0_4, %c0_5] : memref<1x32xf32, #tpu.memory_space<vmem>>, vector<1x32xf32>
    %cst = arith.constant dense<0.000000e+00> : vector<8xf32>
    %4 = vector.multi_reduction <add>, %1, %cst [1] : vector<8x32xf32> to vector<8xf32>
    %5 = vector.shape_cast %4 : vector<8xf32> to vector<8x1xf32>
    %cst_6 = arith.constant 3.200000e+01 : f32
    %6 = vector.broadcast %cst_6 : f32 to vector<8x1xf32>
    %7 = arith.divf %5, %6 : vector<8x1xf32>
    %8 = vector.broadcast %7 : vector<8x1xf32> to vector<8x32xf32>
    %9 = arith.subf %1, %8 : vector<8x32xf32>
    %10 = arith.mulf %9, %9 : vector<8x32xf32>
    %cst_7 = arith.constant dense<0.000000e+00> : vector<8xf32>
    %11 = vector.multi_reduction <add>, %10, %cst_7 [1] : vector<8x32xf32> to vector<8xf32>
    %12 = vector.shape_cast %11 : vector<8xf32> to vector<8x1xf32>
    %cst_8 = arith.constant 3.200000e+01 : f32
    %13 = vector.broadcast %cst_8 : f32 to vector<8x1xf32>
    %14 = arith.divf %12, %13 : vector<8x1xf32>
    %cst_9 = arith.constant 9.99999974E-6 : f32
    %15 = vector.broadcast %cst_9 : f32 to vector<8x1xf32>
    %16 = arith.addf %14, %15 : vector<8x1xf32>
    %17 = math.rsqrt %16 : vector<8x1xf32>
    %18 = vector.broadcast %17 : vector<8x1xf32> to vector<8x32xf32>
    %19 = arith.mulf %9, %18 : vector<8x32xf32>
    %20 = vector.broadcast %2 : vector<1x32xf32> to vector<8x32xf32>
    %21 = arith.mulf %19, %20 : vector<8x32xf32>
    %22 = vector.broadcast %3 : vector<1x32xf32> to vector<8x32xf32>
    %23 = arith.addf %21, %22 : vector<8x32xf32>
    %24 = arith.truncf %23 : vector<8x32xf32> to vector<8x32xbf16>
    %c0_10 = arith.constant 0 : index
    %c0_11 = arith.constant 0 : index
    %25 = vector.load %arg5[%c0_10, %c0_11] : memref<32x128xbf16, #tpu.memory_space<vmem>>, vector<32x128xbf16>
    %cst_12 = arith.constant dense<0.000000e+00> : vector<8x128xf32>
    %26 = tpu.matmul %24, %25, %cst_12 {dimension_numbers = #tpu.dot_dimension_numbers<[1], [0], [0], [1], [0, 0, 1, 1], [], []>} : vector<8x32xbf16>, vector<32x128xbf16>, vector<8x128xf32> -> vector<8x128xf32>
    %c0_13 = arith.constant 0 : index
    %c0_14 = arith.constant 0 : index
    %27 = vector.load %arg6[%c0_13, %c0_14] : memref<1x128xf32, #tpu.memory_space<vmem>>, vector<1x128xf32>
    %28 = vector.broadcast %27 : vector<1x128xf32> to vector<8x128xf32>
    %29 = arith.addf %26, %28 : vector<8x128xf32>
    %cst_15 = arith.constant 5.000000e-01 : f32
    %30 = vector.broadcast %cst_15 : f32 to vector<8x128xf32>
    %31 = arith.mulf %30, %29 : vector<8x128xf32>
    %cst_16 = arith.constant 0.707106769 : f32
    %32 = vector.broadcast %cst_16 : f32 to vector<8x128xf32>
    %33 = arith.mulf %29, %32 : vector<8x128xf32>
    %cst_17 = arith.constant 0.000000e+00 : f32
    %34 = vector.broadcast %cst_17 : f32 to vector<8x128xf32>
    %35 = arith.cmpf oge, %33, %34 : vector<8x128xf32>
    %cst_18 = arith.constant 1.000000e+00 : f32
    %cst_19 = arith.constant -1.000000e+00 : f32
    %36 = vector.broadcast %cst_18 : f32 to vector<8x128xf32>
    %37 = vector.broadcast %cst_19 : f32 to vector<8x128xf32>
    %38 = arith.select %35, %36, %37 : vector<8x128xi1>, vector<8x128xf32>
    %39 = math.absf %33 : vector<8x128xf32>
    %cst_20 = arith.constant 0.327591091 : f32
    %40 = vector.broadcast %cst_20 : f32 to vector<8x128xf32>
    %41 = arith.mulf %40, %39 : vector<8x128xf32>
    %cst_21 = arith.constant 1.000000e+00 : f32
    %42 = vector.broadcast %cst_21 : f32 to vector<8x128xf32>
    %43 = arith.addf %42, %41 : vector<8x128xf32>
    %cst_22 = arith.constant 1.000000e+00 : f32
    %44 = vector.broadcast %cst_22 : f32 to vector<8x128xf32>
    %45 = arith.divf %44, %43 : vector<8x128xf32>
    %cst_23 = arith.constant 1.06140542 : f32
    %46 = vector.broadcast %cst_23 : f32 to vector<8x128xf32>
    %47 = arith.mulf %46, %45 : vector<8x128xf32>
    %cst_24 = arith.constant -1.45315206 : f32
    %48 = vector.broadcast %cst_24 : f32 to vector<8x128xf32>
    %49 = arith.addf %47, %48 : vector<8x128xf32>
    %50 = arith.mulf %49, %45 : vector<8x128xf32>
    %cst_25 = arith.constant 1.42141378 : f32
    %51 = vector.broadcast %cst_25 : f32 to vector<8x128xf32>
    %52 = arith.addf %50, %51 : vector<8x128xf32>
    %53 = arith.mulf %52, %45 : vector<8x128xf32>
    %cst_26 = arith.constant -0.284496725 : f32
    %54 = vector.broadcast %cst_26 : f32 to vector<8x128xf32>
    %55 = arith.addf %53, %54 : vector<8x128xf32>
    %56 = arith.mulf %55, %45 : vector<8x128xf32>
    %cst_27 = arith.constant 0.254829586 : f32
    %57 = vector.broadcast %cst_27 : f32 to vector<8x128xf32>
    %58 = arith.addf %56, %57 : vector<8x128xf32>
    %59 = arith.mulf %58, %45 : vector<8x128xf32>
    %cst_28 = arith.constant 0.000000e+00 : f32
    %60 = vector.broadcast %cst_28 : f32 to vector<8x128xf32>
    %61 = arith.subf %60, %39 : vector<8x128xf32>
    %62 = arith.mulf %61, %39 : vector<8x128xf32>
    %63 = math.exp %62 : vector<8x128xf32>
    %64 = arith.mulf %59, %63 : vector<8x128xf32>
    %cst_29 = arith.constant 1.000000e+00 : f32
    %65 = vector.broadcast %cst_29 : f32 to vector<8x128xf32>
    %66 = arith.subf %65, %64 : vector<8x128xf32>
    %67 = arith.mulf %38, %66 : vector<8x128xf32>
    %cst_30 = arith.constant 1.000000e+00 : f32
    %68 = vector.broadcast %cst_30 : f32 to vector<8x128xf32>
    %69 = arith.addf %68, %67 : vector<8x128xf32>
    %70 = arith.mulf %31, %69 : vector<8x128xf32>
    %71 = arith.truncf %70 : vector<8x128xf32> to vector<8x128xbf16>
    %c0_31 = arith.constant 0 : index
    %c0_32 = arith.constant 0 : index
    %72 = vector.load %arg7[%c0_31, %c0_32] : memref<128x32xbf16, #tpu.memory_space<vmem>>, vector<128x32xbf16>
    %cst_33 = arith.constant dense<0.000000e+00> : vector<8x32xf32>
    %73 = tpu.matmul %71, %72, %cst_33 {dimension_numbers = #tpu.dot_dimension_numbers<[1], [0], [0], [1], [0, 0, 1, 1], [], []>} : vector<8x128xbf16>, vector<128x32xbf16>, vector<8x32xf32> -> vector<8x32xf32>
    %c0_34 = arith.constant 0 : index
    %c0_35 = arith.constant 0 : index
    %74 = vector.load %arg8[%c0_34, %c0_35] : memref<1x32xf32, #tpu.memory_space<vmem>>, vector<1x32xf32>
    %75 = vector.broadcast %74 : vector<1x32xf32> to vector<8x32xf32>
    %76 = arith.addf %73, %75 : vector<8x32xf32>
    %77 = arith.addf %1, %76 : vector<8x32xf32>
    %c0_36 = arith.constant 0 : index
    %c0_37 = arith.constant 0 : index
    %c0_38 = arith.constant 0 : index
    %78 = vector.load %arg9[%c0_36, %c0_37, %c0_38] : memref<1x8x32xf32, #tpu.memory_space<vmem>>, vector<1x8x32xf32>
    %79 = vector.shape_cast %78 : vector<1x8x32xf32> to vector<8x32xf32>
    %80 = vector.shape_cast %77 : vector<8x32xf32> to vector<1x8x32xf32>
    tpu.vector_store %arg9[%c0_36, %c0_37, %c0_38], %80 {strides = array<i32>} : memref<1x8x32xf32, #tpu.memory_space<vmem>>, vector<1x8x32xf32>,
    return
  }
  func.func @transform_0(%arg0: i32, %arg1: i32) -> (i32, i32, i32) {
    %c0_i32 = arith.constant 0 : i32
    %c0_i32_0 = arith.constant 0 : i32
    return %arg0, %arg1, %c0_i32 : i32, i32, i32
  }
  func.func @transform_1(%arg0: i32, %arg1: i32) -> (i32, i32) {
    %c0_i32 = arith.constant 0 : i32
    %c0_i32_0 = arith.constant 0 : i32
    %c0_i32_1 = arith.constant 0 : i32
    return %c0_i32, %c0_i32_0 : i32, i32
  }
  func.func @transform_2(%arg0: i32, %arg1: i32) -> (i32, i32) {
    %c0_i32 = arith.constant 0 : i32
    %c0_i32_0 = arith.constant 0 : i32
    %c0_i32_1 = arith.constant 0 : i32
    return %c0_i32, %c0_i32_0 : i32, i32
  }
  func.func @transform_3(%arg0: i32, %arg1: i32) -> (i32, i32) {
    %c0_i32 = arith.constant 0 : i32
    %c0_i32_0 = arith.constant 0 : i32
    %c0_i32_1 = arith.constant 0 : i32
    return %c0_i32, %c0_i32_0 : i32, i32
  }
  func.func @transform_4(%arg0: i32, %arg1: i32) -> (i32, i32) {
    %c0_i32 = arith.constant 0 : i32
    %c0_i32_0 = arith.constant 0 : i32
    %c0_i32_1 = arith.constant 0 : i32
    return %c0_i32, %c0_i32_0 : i32, i32
  }
  func.func @transform_5(%arg0: i32, %arg1: i32) -> (i32, i32) {
    %c0_i32 = arith.constant 0 : i32
    %c0_i32_0 = arith.constant 0 : i32
    %c0_i32_1 = arith.constant 0 : i32
    return %c0_i32, %c0_i32_0 : i32, i32
  }
  func.func @transform_6(%arg0: i32, %arg1: i32) -> (i32, i32) {
    %c0_i32 = arith.constant 0 : i32
    %c0_i32_0 = arith.constant 0 : i32
    %c0_i32_1 = arith.constant 0 : i32
    return %c0_i32, %c0_i32_0 : i32, i32
  }
  func.func @transform_7(%arg0: i32, %arg1: i32) -> (i32, i32, i32) {
    %c0_i32 = arith.constant 0 : i32
    %c0_i32_0 = arith.constant 0 : i32
    return %arg0, %arg1, %c0_i32 : i32, i32, i32
  }
}

module attributes {stable_mosaic.version = 11 : i64} {
  func.func @_fused_self_attn_kernel(%arg0: i32, %arg1: memref<1x8x32xf32, #tpu.memory_space<vmem>>, %arg2: memref<1x8x8xf32, #tpu.memory_space<vmem>>, %arg3: memref<1x12x64xbf16, #tpu.memory_space<vmem>>, %arg4: memref<1x32xf32, #tpu.memory_space<vmem>>, %arg5: memref<1x32xf32, #tpu.memory_space<vmem>>, %arg6: memref<3x4x32x8xbf16, #tpu.memory_space<vmem>>, %arg7: memref<3x4x1x8xf32, #tpu.memory_space<vmem>>, %arg8: memref<8x12xbf16, #tpu.memory_space<vmem>>, %arg9: memref<4x8xbf16, #tpu.memory_space<vmem>>, %arg10: memref<4x8x32xbf16, #tpu.memory_space<vmem>>, %arg11: memref<1x32xf32, #tpu.memory_space<vmem>>, %arg12: memref<1x1xf32, #tpu.memory_space<smem>>, %arg13: memref<1x8x32xf32, #tpu.memory_space<vmem>>) attributes {dimension_semantics = [#tpu.dimension_semantics<parallel>], iteration_bounds = array<i64: 2>, scalar_prefetch = 0 : i64, scratch_operands = 0 : i64, tpu.core_type = #tpu.core_type<tc>, window_params = [{transform_indices = @transform_0, window_bounds = array<i64: 1, 8, 32>}, {transform_indices = @transform_1, window_bounds = array<i64: 1, 8, 8>}, {transform_indices = @transform_2, window_bounds = array<i64: 1, 12, 64>}, {pipeline_mode = #tpu.pipeline_mode<synchronous>, transform_indices = @transform_3, window_bounds = array<i64: 1, 32>}, {pipeline_mode = #tpu.pipeline_mode<synchronous>, transform_indices = @transform_4, window_bounds = array<i64: 1, 32>}, {pipeline_mode = #tpu.pipeline_mode<synchronous>, transform_indices = @transform_5, window_bounds = array<i64: 3, 4, 32, 8>}, {pipeline_mode = #tpu.pipeline_mode<synchronous>, transform_indices = @transform_6, window_bounds = array<i64: 3, 4, 1, 8>}, {pipeline_mode = #tpu.pipeline_mode<synchronous>, transform_indices = @transform_7, window_bounds = array<i64: 8, 12>}, {pipeline_mode = #tpu.pipeline_mode<synchronous>, transform_indices = @transform_8, window_bounds = array<i64: 4, 8>}, {pipeline_mode = #tpu.pipeline_mode<synchronous>, transform_indices = @transform_9, window_bounds = array<i64: 4, 8, 32>}, {pipeline_mode = #tpu.pipeline_mode<synchronous>, transform_indices = @transform_10, window_bounds = array<i64: 1, 32>}, {transform_indices = @transform_11, window_bounds = array<i64: 1, 1>}, {transform_indices = @transform_12, window_bounds = array<i64: 1, 8, 32>}]} {
    %c0 = arith.constant 0 : index
    %c0_0 = arith.constant 0 : index
    %c0_1 = arith.constant 0 : index
    %0 = vector.load %arg1[%c0, %c0_0, %c0_1] : memref<1x8x32xf32, #tpu.memory_space<vmem>>, vector<1x8x32xf32>
    %1 = vector.shape_cast %0 : vector<1x8x32xf32> to vector<8x32xf32>
    %c0_2 = arith.constant 0 : index
    %c0_3 = arith.constant 0 : index
    %c0_4 = arith.constant 0 : index
    %2 = vector.load %arg2[%c0_2, %c0_3, %c0_4] : memref<1x8x8xf32, #tpu.memory_space<vmem>>, vector<1x8x8xf32>
    %3 = vector.shape_cast %2 : vector<1x8x8xf32> to vector<8x8xf32>
    %c0_5 = arith.constant 0 : index
    %c0_6 = arith.constant 0 : index
    %4 = vector.load %arg4[%c0_5, %c0_6] : memref<1x32xf32, #tpu.memory_space<vmem>>, vector<1x32xf32>
    %c0_7 = arith.constant 0 : index
    %c0_8 = arith.constant 0 : index
    %5 = vector.load %arg5[%c0_7, %c0_8] : memref<1x32xf32, #tpu.memory_space<vmem>>, vector<1x32xf32>
    %cst = arith.constant dense<0.000000e+00> : vector<8xf32>
    %6 = vector.multi_reduction <add>, %1, %cst [1] : vector<8x32xf32> to vector<8xf32>
    %7 = vector.shape_cast %6 : vector<8xf32> to vector<8x1xf32>
    %cst_9 = arith.constant 3.200000e+01 : f32
    %8 = vector.broadcast %cst_9 : f32 to vector<8x1xf32>
    %9 = arith.divf %7, %8 : vector<8x1xf32>
    %10 = vector.broadcast %9 : vector<8x1xf32> to vector<8x32xf32>
    %11 = arith.subf %1, %10 : vector<8x32xf32>
    %12 = arith.mulf %11, %11 : vector<8x32xf32>
    %cst_10 = arith.constant dense<0.000000e+00> : vector<8xf32>
    %13 = vector.multi_reduction <add>, %12, %cst_10 [1] : vector<8x32xf32> to vector<8xf32>
    %14 = vector.shape_cast %13 : vector<8xf32> to vector<8x1xf32>
    %cst_11 = arith.constant 3.200000e+01 : f32
    %15 = vector.broadcast %cst_11 : f32 to vector<8x1xf32>
    %16 = arith.divf %14, %15 : vector<8x1xf32>
    %cst_12 = arith.constant 9.99999974E-6 : f32
    %17 = vector.broadcast %cst_12 : f32 to vector<8x1xf32>
    %18 = arith.addf %16, %17 : vector<8x1xf32>
    %19 = math.rsqrt %18 : vector<8x1xf32>
    %20 = vector.broadcast %19 : vector<8x1xf32> to vector<8x32xf32>
    %21 = arith.mulf %11, %20 : vector<8x32xf32>
    %22 = vector.broadcast %4 : vector<1x32xf32> to vector<8x32xf32>
    %23 = arith.mulf %21, %22 : vector<8x32xf32>
    %24 = vector.broadcast %5 : vector<1x32xf32> to vector<8x32xf32>
    %25 = arith.addf %23, %24 : vector<8x32xf32>
    %26 = arith.truncf %25 : vector<8x32xf32> to vector<8x32xbf16>
    %c0_13 = arith.constant 0 : index
    %c0_14 = arith.constant 0 : index
    %27 = vector.load %arg8[%c0_13, %c0_14] : memref<8x12xbf16, #tpu.memory_space<vmem>>, vector<8x12xbf16>
    %c0_15 = arith.constant 0 : index
    %c0_16 = arith.constant 0 : index
    %c0_17 = arith.constant 0 : index
    %28 = vector.load %arg3[%c0_15, %c0_16, %c0_17] : memref<1x12x64xbf16, #tpu.memory_space<vmem>>, vector<1x12x64xbf16>
    %29 = vector.shape_cast %28 : vector<1x12x64xbf16> to vector<12x64xbf16>
    %cst_18 = arith.constant dense<0.000000e+00> : vector<8x64xf32>
    %30 = tpu.matmul %27, %29, %cst_18 {dimension_numbers = #tpu.dot_dimension_numbers<[1], [0], [0], [1], [0, 0, 1, 1], [], []>} : vector<8x12xbf16>, vector<12x64xbf16>, vector<8x64xf32> -> vector<8x64xf32>
    %cst_19 = arith.constant 5.000000e-01 : f32
    %31 = vector.broadcast %cst_19 : f32 to vector<8x64xf32>
    %32 = arith.mulf %31, %30 : vector<8x64xf32>
    %cst_20 = arith.constant 0.707106769 : f32
    %33 = vector.broadcast %cst_20 : f32 to vector<8x64xf32>
    %34 = arith.mulf %30, %33 : vector<8x64xf32>
    %cst_21 = arith.constant 0.000000e+00 : f32
    %35 = vector.broadcast %cst_21 : f32 to vector<8x64xf32>
    %36 = arith.cmpf oge, %34, %35 : vector<8x64xf32>
    %cst_22 = arith.constant 1.000000e+00 : f32
    %cst_23 = arith.constant -1.000000e+00 : f32
    %37 = vector.broadcast %cst_22 : f32 to vector<8x64xf32>
    %38 = vector.broadcast %cst_23 : f32 to vector<8x64xf32>
    %39 = arith.select %36, %37, %38 : vector<8x64xi1>, vector<8x64xf32>
    %40 = math.absf %34 : vector<8x64xf32>
    %cst_24 = arith.constant 0.327591091 : f32
    %41 = vector.broadcast %cst_24 : f32 to vector<8x64xf32>
    %42 = arith.mulf %41, %40 : vector<8x64xf32>
    %cst_25 = arith.constant 1.000000e+00 : f32
    %43 = vector.broadcast %cst_25 : f32 to vector<8x64xf32>
    %44 = arith.addf %43, %42 : vector<8x64xf32>
    %cst_26 = arith.constant 1.000000e+00 : f32
    %45 = vector.broadcast %cst_26 : f32 to vector<8x64xf32>
    %46 = arith.divf %45, %44 : vector<8x64xf32>
    %cst_27 = arith.constant 1.06140542 : f32
    %47 = vector.broadcast %cst_27 : f32 to vector<8x64xf32>
    %48 = arith.mulf %47, %46 : vector<8x64xf32>
    %cst_28 = arith.constant -1.45315206 : f32
    %49 = vector.broadcast %cst_28 : f32 to vector<8x64xf32>
    %50 = arith.addf %48, %49 : vector<8x64xf32>
    %51 = arith.mulf %50, %46 : vector<8x64xf32>
    %cst_29 = arith.constant 1.42141378 : f32
    %52 = vector.broadcast %cst_29 : f32 to vector<8x64xf32>
    %53 = arith.addf %51, %52 : vector<8x64xf32>
    %54 = arith.mulf %53, %46 : vector<8x64xf32>
    %cst_30 = arith.constant -0.284496725 : f32
    %55 = vector.broadcast %cst_30 : f32 to vector<8x64xf32>
    %56 = arith.addf %54, %55 : vector<8x64xf32>
    %57 = arith.mulf %56, %46 : vector<8x64xf32>
    %cst_31 = arith.constant 0.254829586 : f32
    %58 = vector.broadcast %cst_31 : f32 to vector<8x64xf32>
    %59 = arith.addf %57, %58 : vector<8x64xf32>
    %60 = arith.mulf %59, %46 : vector<8x64xf32>
    %cst_32 = arith.constant 0.000000e+00 : f32
    %61 = vector.broadcast %cst_32 : f32 to vector<8x64xf32>
    %62 = arith.subf %61, %40 : vector<8x64xf32>
    %63 = arith.mulf %62, %40 : vector<8x64xf32>
    %64 = math.exp %63 : vector<8x64xf32>
    %65 = arith.mulf %60, %64 : vector<8x64xf32>
    %cst_33 = arith.constant 1.000000e+00 : f32
    %66 = vector.broadcast %cst_33 : f32 to vector<8x64xf32>
    %67 = arith.subf %66, %65 : vector<8x64xf32>
    %68 = arith.mulf %39, %67 : vector<8x64xf32>
    %cst_34 = arith.constant 1.000000e+00 : f32
    %69 = vector.broadcast %cst_34 : f32 to vector<8x64xf32>
    %70 = arith.addf %69, %68 : vector<8x64xf32>
    %71 = arith.mulf %32, %70 : vector<8x64xf32>
    %72 = arith.truncf %71 : vector<8x64xf32> to vector<8x64xbf16>
    %c0_35 = arith.constant 0 : index
    %c0_36 = arith.constant 0 : index
    %73 = vector.load %arg9[%c0_35, %c0_36] : memref<4x8xbf16, #tpu.memory_space<vmem>>, vector<4x8xbf16>
    %cst_37 = arith.constant dense<0.000000e+00> : vector<4x64xf32>
    %74 = tpu.matmul %73, %72, %cst_37 {dimension_numbers = #tpu.dot_dimension_numbers<[1], [0], [0], [1], [0, 0, 1, 1], [], []>} : vector<4x8xbf16>, vector<8x64xbf16>, vector<4x64xf32> -> vector<4x64xf32>
    %c0_38 = arith.constant 0 : index
    %c0_39 = arith.constant 0 : index
    %75 = memref.load %arg12[%c0_38, %c0_39] : memref<1x1xf32, #tpu.memory_space<smem>>
    %76 = vector.broadcast %75 : f32 to vector<4x64xf32>
    %77 = arith.mulf %74, %76 : vector<4x64xf32>
    %78 = vector.shape_cast %77 : vector<4x64xf32> to vector<4x8x8xf32>
    %cst_40 = arith.constant 0.000000e+00 : f32
    %79 = vector.broadcast %cst_40 : f32 to vector<8x32xf32>
    %c0_41 = arith.constant 0 : index
    %c0_42 = arith.constant 0 : index
    %c0_43 = arith.constant 0 : index
    %c0_44 = arith.constant 0 : index
    %80 = vector.load %arg6[%c0_41, %c0_42, %c0_43, %c0_44] : memref<3x4x32x8xbf16, #tpu.memory_space<vmem>>, vector<1x1x32x8xbf16>
    %81 = vector.shape_cast %80 : vector<1x1x32x8xbf16> to vector<32x8xbf16>
    %cst_45 = arith.constant dense<0.000000e+00> : vector<8x8xf32>
    %82 = tpu.matmul %26, %81, %cst_45 {dimension_numbers = #tpu.dot_dimension_numbers<[1], [0], [0], [1], [0, 0, 1, 1], [], []>} : vector<8x32xbf16>, vector<32x8xbf16>, vector<8x8xf32> -> vector<8x8xf32>
    %c0_46 = arith.constant 0 : index
    %c0_47 = arith.constant 0 : index
    %c0_48 = arith.constant 0 : index
    %c0_49 = arith.constant 0 : index
    %83 = vector.load %arg7[%c0_46, %c0_47, %c0_48, %c0_49] : memref<3x4x1x8xf32, #tpu.memory_space<vmem>>, vector<1x1x1x8xf32>
    %84 = vector.shape_cast %83 : vector<1x1x1x8xf32> to vector<1x8xf32>
    %85 = vector.broadcast %84 : vector<1x8xf32> to vector<8x8xf32>
    %86 = arith.addf %82, %85 : vector<8x8xf32>
    %c1 = arith.constant 1 : index
    %c0_50 = arith.constant 0 : index
    %c0_51 = arith.constant 0 : index
    %c0_52 = arith.constant 0 : index
    %87 = vector.load %arg6[%c1, %c0_50, %c0_51, %c0_52] : memref<3x4x32x8xbf16, #tpu.memory_space<vmem>>, vector<1x1x32x8xbf16>
    %88 = vector.shape_cast %87 : vector<1x1x32x8xbf16> to vector<32x8xbf16>
    %cst_53 = arith.constant dense<0.000000e+00> : vector<8x8xf32>
    %89 = tpu.matmul %26, %88, %cst_53 {dimension_numbers = #tpu.dot_dimension_numbers<[1], [0], [0], [1], [0, 0, 1, 1], [], []>} : vector<8x32xbf16>, vector<32x8xbf16>, vector<8x8xf32> -> vector<8x8xf32>
    %c1_54 = arith.constant 1 : index
    %c0_55 = arith.constant 0 : index
    %c0_56 = arith.constant 0 : index
    %c0_57 = arith.constant 0 : index
    %90 = vector.load %arg7[%c1_54, %c0_55, %c0_56, %c0_57] : memref<3x4x1x8xf32, #tpu.memory_space<vmem>>, vector<1x1x1x8xf32>
    %91 = vector.shape_cast %90 : vector<1x1x1x8xf32> to vector<1x8xf32>
    %92 = vector.broadcast %91 : vector<1x8xf32> to vector<8x8xf32>
    %93 = arith.addf %89, %92 : vector<8x8xf32>
    %c2 = arith.constant 2 : index
    %c0_58 = arith.constant 0 : index
    %c0_59 = arith.constant 0 : index
    %c0_60 = arith.constant 0 : index
    %94 = vector.load %arg6[%c2, %c0_58, %c0_59, %c0_60] : memref<3x4x32x8xbf16, #tpu.memory_space<vmem>>, vector<1x1x32x8xbf16>
    %95 = vector.shape_cast %94 : vector<1x1x32x8xbf16> to vector<32x8xbf16>
    %cst_61 = arith.constant dense<0.000000e+00> : vector<8x8xf32>
    %96 = tpu.matmul %26, %95, %cst_61 {dimension_numbers = #tpu.dot_dimension_numbers<[1], [0], [0], [1], [0, 0, 1, 1], [], []>} : vector<8x32xbf16>, vector<32x8xbf16>, vector<8x8xf32> -> vector<8x8xf32>
    %c2_62 = arith.constant 2 : index
    %c0_63 = arith.constant 0 : index
    %c0_64 = arith.constant 0 : index
    %c0_65 = arith.constant 0 : index
    %97 = vector.load %arg7[%c2_62, %c0_63, %c0_64, %c0_65] : memref<3x4x1x8xf32, #tpu.memory_space<vmem>>, vector<1x1x1x8xf32>
    %98 = vector.shape_cast %97 : vector<1x1x1x8xf32> to vector<1x8xf32>
    %99 = vector.broadcast %98 : vector<1x8xf32> to vector<8x8xf32>
    %100 = arith.addf %96, %99 : vector<8x8xf32>
    %101 = arith.truncf %86 : vector<8x8xf32> to vector<8x8xbf16>
    %102 = arith.truncf %93 : vector<8x8xf32> to vector<8x8xbf16>
    %cst_66 = arith.constant dense<0.000000e+00> : vector<8x8xf32>
    %103 = tpu.matmul %101, %102, %cst_66 {dimension_numbers = #tpu.dot_dimension_numbers<[1], [1], [0], [0], [0, 0, 1, 0], [], []>} : vector<8x8xbf16>, vector<8x8xbf16>, vector<8x8xf32> -> vector<8x8xf32>
    %cst_67 = arith.constant 0.353553385 : f32
    %104 = vector.broadcast %cst_67 : f32 to vector<8x8xf32>
    %105 = arith.mulf %103, %104 : vector<8x8xf32>
    %cst_68 = arith.constant 0.000000e+00 : f32
    %106 = vector.broadcast %cst_68 : f32 to vector<8x8xf32>
    %107 = arith.cmpf oeq, %3, %106 : vector<8x8xf32>
    %cst_69 = arith.constant -1.000000e+09 : f32
    %108 = vector.broadcast %cst_69 : f32 to vector<8x8xf32>
    %109 = arith.select %107, %108, %105 : vector<8x8xi1>, vector<8x8xf32>
    %cst_70 = arith.constant dense<0xFF800000> : vector<8xf32>
    %110 = vector.multi_reduction <maximumf>, %109, %cst_70 [1] : vector<8x8xf32> to vector<8xf32>
    %111 = vector.shape_cast %110 : vector<8xf32> to vector<8x1xf32>
    %112 = vector.broadcast %111 : vector<8x1xf32> to vector<8x8xf32>
    %113 = arith.subf %109, %112 : vector<8x8xf32>
    %114 = math.exp %113 : vector<8x8xf32>
    %cst_71 = arith.constant dense<0.000000e+00> : vector<8xf32>
    %115 = vector.multi_reduction <add>, %114, %cst_71 [1] : vector<8x8xf32> to vector<8xf32>
    %116 = vector.shape_cast %115 : vector<8xf32> to vector<8x1xf32>
    %117 = vector.broadcast %116 : vector<8x1xf32> to vector<8x8xf32>
    %118 = arith.divf %114, %117 : vector<8x8xf32>
    %119 = vector.extract_strided_slice %78 {offsets = [0, 0, 0], sizes = [1, 8, 8], strides = [1, 1, 1]} : vector<4x8x8xf32> to vector<1x8x8xf32>
    %120 = vector.shape_cast %119 : vector<1x8x8xf32> to vector<8x8xf32>
    %121 = arith.addf %118, %120 : vector<8x8xf32>
    %122 = arith.truncf %121 : vector<8x8xf32> to vector<8x8xbf16>
    %123 = arith.truncf %100 : vector<8x8xf32> to vector<8x8xbf16>
    %cst_72 = arith.constant dense<0.000000e+00> : vector<8x8xf32>
    %124 = tpu.matmul %122, %123, %cst_72 {dimension_numbers = #tpu.dot_dimension_numbers<[1], [0], [0], [1], [0, 0, 1, 1], [], []>} : vector<8x8xbf16>, vector<8x8xbf16>, vector<8x8xf32> -> vector<8x8xf32>
    %125 = arith.truncf %124 : vector<8x8xf32> to vector<8x8xbf16>
    %c0_73 = arith.constant 0 : index
    %c0_74 = arith.constant 0 : index
    %c0_75 = arith.constant 0 : index
    %126 = vector.load %arg10[%c0_73, %c0_74, %c0_75] : memref<4x8x32xbf16, #tpu.memory_space<vmem>>, vector<1x8x32xbf16>
    %127 = vector.shape_cast %126 : vector<1x8x32xbf16> to vector<8x32xbf16>
    %cst_76 = arith.constant dense<0.000000e+00> : vector<8x32xf32>
    %128 = tpu.matmul %125, %127, %cst_76 {dimension_numbers = #tpu.dot_dimension_numbers<[1], [0], [0], [1], [0, 0, 1, 1], [], []>} : vector<8x8xbf16>, vector<8x32xbf16>, vector<8x32xf32> -> vector<8x32xf32>
    %129 = arith.addf %79, %128 : vector<8x32xf32>
    %c0_77 = arith.constant 0 : index
    %c1_78 = arith.constant 1 : index
    %c0_79 = arith.constant 0 : index
    %c0_80 = arith.constant 0 : index
    %130 = vector.load %arg6[%c0_77, %c1_78, %c0_79, %c0_80] : memref<3x4x32x8xbf16, #tpu.memory_space<vmem>>, vector<1x1x32x8xbf16>
    %131 = vector.shape_cast %130 : vector<1x1x32x8xbf16> to vector<32x8xbf16>
    %cst_81 = arith.constant dense<0.000000e+00> : vector<8x8xf32>
    %132 = tpu.matmul %26, %131, %cst_81 {dimension_numbers = #tpu.dot_dimension_numbers<[1], [0], [0], [1], [0, 0, 1, 1], [], []>} : vector<8x32xbf16>, vector<32x8xbf16>, vector<8x8xf32> -> vector<8x8xf32>
    %c0_82 = arith.constant 0 : index
    %c1_83 = arith.constant 1 : index
    %c0_84 = arith.constant 0 : index
    %c0_85 = arith.constant 0 : index
    %133 = vector.load %arg7[%c0_82, %c1_83, %c0_84, %c0_85] : memref<3x4x1x8xf32, #tpu.memory_space<vmem>>, vector<1x1x1x8xf32>
    %134 = vector.shape_cast %133 : vector<1x1x1x8xf32> to vector<1x8xf32>
    %135 = vector.broadcast %134 : vector<1x8xf32> to vector<8x8xf32>
    %136 = arith.addf %132, %135 : vector<8x8xf32>
    %c1_86 = arith.constant 1 : index
    %c1_87 = arith.constant 1 : index
    %c0_88 = arith.constant 0 : index
    %c0_89 = arith.constant 0 : index
    %137 = vector.load %arg6[%c1_86, %c1_87, %c0_88, %c0_89] : memref<3x4x32x8xbf16, #tpu.memory_space<vmem>>, vector<1x1x32x8xbf16>
    %138 = vector.shape_cast %137 : vector<1x1x32x8xbf16> to vector<32x8xbf16>
    %cst_90 = arith.constant dense<0.000000e+00> : vector<8x8xf32>
    %139 = tpu.matmul %26, %138, %cst_90 {dimension_numbers = #tpu.dot_dimension_numbers<[1], [0], [0], [1], [0, 0, 1, 1], [], []>} : vector<8x32xbf16>, vector<32x8xbf16>, vector<8x8xf32> -> vector<8x8xf32>
    %c1_91 = arith.constant 1 : index
    %c1_92 = arith.constant 1 : index
    %c0_93 = arith.constant 0 : index
    %c0_94 = arith.constant 0 : index
    %140 = vector.load %arg7[%c1_91, %c1_92, %c0_93, %c0_94] : memref<3x4x1x8xf32, #tpu.memory_space<vmem>>, vector<1x1x1x8xf32>
    %141 = vector.shape_cast %140 : vector<1x1x1x8xf32> to vector<1x8xf32>
    %142 = vector.broadcast %141 : vector<1x8xf32> to vector<8x8xf32>
    %143 = arith.addf %139, %142 : vector<8x8xf32>
    %c2_95 = arith.constant 2 : index
    %c1_96 = arith.constant 1 : index
    %c0_97 = arith.constant 0 : index
    %c0_98 = arith.constant 0 : index
    %144 = vector.load %arg6[%c2_95, %c1_96, %c0_97, %c0_98] : memref<3x4x32x8xbf16, #tpu.memory_space<vmem>>, vector<1x1x32x8xbf16>
    %145 = vector.shape_cast %144 : vector<1x1x32x8xbf16> to vector<32x8xbf16>
    %cst_99 = arith.constant dense<0.000000e+00> : vector<8x8xf32>
    %146 = tpu.matmul %26, %145, %cst_99 {dimension_numbers = #tpu.dot_dimension_numbers<[1], [0], [0], [1], [0, 0, 1, 1], [], []>} : vector<8x32xbf16>, vector<32x8xbf16>, vector<8x8xf32> -> vector<8x8xf32>
    %c2_100 = arith.constant 2 : index
    %c1_101 = arith.constant 1 : index
    %c0_102 = arith.constant 0 : index
    %c0_103 = arith.constant 0 : index
    %147 = vector.load %arg7[%c2_100, %c1_101, %c0_102, %c0_103] : memref<3x4x1x8xf32, #tpu.memory_space<vmem>>, vector<1x1x1x8xf32>
    %148 = vector.shape_cast %147 : vector<1x1x1x8xf32> to vector<1x8xf32>
    %149 = vector.broadcast %148 : vector<1x8xf32> to vector<8x8xf32>
    %150 = arith.addf %146, %149 : vector<8x8xf32>
    %151 = arith.truncf %136 : vector<8x8xf32> to vector<8x8xbf16>
    %152 = arith.truncf %143 : vector<8x8xf32> to vector<8x8xbf16>
    %cst_104 = arith.constant dense<0.000000e+00> : vector<8x8xf32>
    %153 = tpu.matmul %151, %152, %cst_104 {dimension_numbers = #tpu.dot_dimension_numbers<[1], [1], [0], [0], [0, 0, 1, 0], [], []>} : vector<8x8xbf16>, vector<8x8xbf16>, vector<8x8xf32> -> vector<8x8xf32>
    %cst_105 = arith.constant 0.353553385 : f32
    %154 = vector.broadcast %cst_105 : f32 to vector<8x8xf32>
    %155 = arith.mulf %153, %154 : vector<8x8xf32>
    %cst_106 = arith.constant 0.000000e+00 : f32
    %156 = vector.broadcast %cst_106 : f32 to vector<8x8xf32>
    %157 = arith.cmpf oeq, %3, %156 : vector<8x8xf32>
    %cst_107 = arith.constant -1.000000e+09 : f32
    %158 = vector.broadcast %cst_107 : f32 to vector<8x8xf32>
    %159 = arith.select %157, %158, %155 : vector<8x8xi1>, vector<8x8xf32>
    %cst_108 = arith.constant dense<0xFF800000> : vector<8xf32>
    %160 = vector.multi_reduction <maximumf>, %159, %cst_108 [1] : vector<8x8xf32> to vector<8xf32>
    %161 = vector.shape_cast %160 : vector<8xf32> to vector<8x1xf32>
    %162 = vector.broadcast %161 : vector<8x1xf32> to vector<8x8xf32>
    %163 = arith.subf %159, %162 : vector<8x8xf32>
    %164 = math.exp %163 : vector<8x8xf32>
    %cst_109 = arith.constant dense<0.000000e+00> : vector<8xf32>
    %165 = vector.multi_reduction <add>, %164, %cst_109 [1] : vector<8x8xf32> to vector<8xf32>
    %166 = vector.shape_cast %165 : vector<8xf32> to vector<8x1xf32>
    %167 = vector.broadcast %166 : vector<8x1xf32> to vector<8x8xf32>
    %168 = arith.divf %164, %167 : vector<8x8xf32>
    %169 = vector.extract_strided_slice %78 {offsets = [1, 0, 0], sizes = [1, 8, 8], strides = [1, 1, 1]} : vector<4x8x8xf32> to vector<1x8x8xf32>
    %170 = vector.shape_cast %169 : vector<1x8x8xf32> to vector<8x8xf32>
    %171 = arith.addf %168, %170 : vector<8x8xf32>
    %172 = arith.truncf %171 : vector<8x8xf32> to vector<8x8xbf16>
    %173 = arith.truncf %150 : vector<8x8xf32> to vector<8x8xbf16>
    %cst_110 = arith.constant dense<0.000000e+00> : vector<8x8xf32>
    %174 = tpu.matmul %172, %173, %cst_110 {dimension_numbers = #tpu.dot_dimension_numbers<[1], [0], [0], [1], [0, 0, 1, 1], [], []>} : vector<8x8xbf16>, vector<8x8xbf16>, vector<8x8xf32> -> vector<8x8xf32>
    %175 = arith.truncf %174 : vector<8x8xf32> to vector<8x8xbf16>
    %c1_111 = arith.constant 1 : index
    %c0_112 = arith.constant 0 : index
    %c0_113 = arith.constant 0 : index
    %176 = vector.load %arg10[%c1_111, %c0_112, %c0_113] : memref<4x8x32xbf16, #tpu.memory_space<vmem>>, vector<1x8x32xbf16>
    %177 = vector.shape_cast %176 : vector<1x8x32xbf16> to vector<8x32xbf16>
    %cst_114 = arith.constant dense<0.000000e+00> : vector<8x32xf32>
    %178 = tpu.matmul %175, %177, %cst_114 {dimension_numbers = #tpu.dot_dimension_numbers<[1], [0], [0], [1], [0, 0, 1, 1], [], []>} : vector<8x8xbf16>, vector<8x32xbf16>, vector<8x32xf32> -> vector<8x32xf32>
    %179 = arith.addf %129, %178 : vector<8x32xf32>
    %c0_115 = arith.constant 0 : index
    %c2_116 = arith.constant 2 : index
    %c0_117 = arith.constant 0 : index
    %c0_118 = arith.constant 0 : index
    %180 = vector.load %arg6[%c0_115, %c2_116, %c0_117, %c0_118] : memref<3x4x32x8xbf16, #tpu.memory_space<vmem>>, vector<1x1x32x8xbf16>
    %181 = vector.shape_cast %180 : vector<1x1x32x8xbf16> to vector<32x8xbf16>
    %cst_119 = arith.constant dense<0.000000e+00> : vector<8x8xf32>
    %182 = tpu.matmul %26, %181, %cst_119 {dimension_numbers = #tpu.dot_dimension_numbers<[1], [0], [0], [1], [0, 0, 1, 1], [], []>} : vector<8x32xbf16>, vector<32x8xbf16>, vector<8x8xf32> -> vector<8x8xf32>
    %c0_120 = arith.constant 0 : index
    %c2_121 = arith.constant 2 : index
    %c0_122 = arith.constant 0 : index
    %c0_123 = arith.constant 0 : index
    %183 = vector.load %arg7[%c0_120, %c2_121, %c0_122, %c0_123] : memref<3x4x1x8xf32, #tpu.memory_space<vmem>>, vector<1x1x1x8xf32>
    %184 = vector.shape_cast %183 : vector<1x1x1x8xf32> to vector<1x8xf32>
    %185 = vector.broadcast %184 : vector<1x8xf32> to vector<8x8xf32>
    %186 = arith.addf %182, %185 : vector<8x8xf32>
    %c1_124 = arith.constant 1 : index
    %c2_125 = arith.constant 2 : index
    %c0_126 = arith.constant 0 : index
    %c0_127 = arith.constant 0 : index
    %187 = vector.load %arg6[%c1_124, %c2_125, %c0_126, %c0_127] : memref<3x4x32x8xbf16, #tpu.memory_space<vmem>>, vector<1x1x32x8xbf16>
    %188 = vector.shape_cast %187 : vector<1x1x32x8xbf16> to vector<32x8xbf16>
    %cst_128 = arith.constant dense<0.000000e+00> : vector<8x8xf32>
    %189 = tpu.matmul %26, %188, %cst_128 {dimension_numbers = #tpu.dot_dimension_numbers<[1], [0], [0], [1], [0, 0, 1, 1], [], []>} : vector<8x32xbf16>, vector<32x8xbf16>, vector<8x8xf32> -> vector<8x8xf32>
    %c1_129 = arith.constant 1 : index
    %c2_130 = arith.constant 2 : index
    %c0_131 = arith.constant 0 : index
    %c0_132 = arith.constant 0 : index
    %190 = vector.load %arg7[%c1_129, %c2_130, %c0_131, %c0_132] : memref<3x4x1x8xf32, #tpu.memory_space<vmem>>, vector<1x1x1x8xf32>
    %191 = vector.shape_cast %190 : vector<1x1x1x8xf32> to vector<1x8xf32>
    %192 = vector.broadcast %191 : vector<1x8xf32> to vector<8x8xf32>
    %193 = arith.addf %189, %192 : vector<8x8xf32>
    %c2_133 = arith.constant 2 : index
    %c2_134 = arith.constant 2 : index
    %c0_135 = arith.constant 0 : index
    %c0_136 = arith.constant 0 : index
    %194 = vector.load %arg6[%c2_133, %c2_134, %c0_135, %c0_136] : memref<3x4x32x8xbf16, #tpu.memory_space<vmem>>, vector<1x1x32x8xbf16>
    %195 = vector.shape_cast %194 : vector<1x1x32x8xbf16> to vector<32x8xbf16>
    %cst_137 = arith.constant dense<0.000000e+00> : vector<8x8xf32>
    %196 = tpu.matmul %26, %195, %cst_137 {dimension_numbers = #tpu.dot_dimension_numbers<[1], [0], [0], [1], [0, 0, 1, 1], [], []>} : vector<8x32xbf16>, vector<32x8xbf16>, vector<8x8xf32> -> vector<8x8xf32>
    %c2_138 = arith.constant 2 : index
    %c2_139 = arith.constant 2 : index
    %c0_140 = arith.constant 0 : index
    %c0_141 = arith.constant 0 : index
    %197 = vector.load %arg7[%c2_138, %c2_139, %c0_140, %c0_141] : memref<3x4x1x8xf32, #tpu.memory_space<vmem>>, vector<1x1x1x8xf32>
    %198 = vector.shape_cast %197 : vector<1x1x1x8xf32> to vector<1x8xf32>
    %199 = vector.broadcast %198 : vector<1x8xf32> to vector<8x8xf32>
    %200 = arith.addf %196, %199 : vector<8x8xf32>
    %201 = arith.truncf %186 : vector<8x8xf32> to vector<8x8xbf16>
    %202 = arith.truncf %193 : vector<8x8xf32> to vector<8x8xbf16>
    %cst_142 = arith.constant dense<0.000000e+00> : vector<8x8xf32>
    %203 = tpu.matmul %201, %202, %cst_142 {dimension_numbers = #tpu.dot_dimension_numbers<[1], [1], [0], [0], [0, 0, 1, 0], [], []>} : vector<8x8xbf16>, vector<8x8xbf16>, vector<8x8xf32> -> vector<8x8xf32>
    %cst_143 = arith.constant 0.353553385 : f32
    %204 = vector.broadcast %cst_143 : f32 to vector<8x8xf32>
    %205 = arith.mulf %203, %204 : vector<8x8xf32>
    %cst_144 = arith.constant 0.000000e+00 : f32
    %206 = vector.broadcast %cst_144 : f32 to vector<8x8xf32>
    %207 = arith.cmpf oeq, %3, %206 : vector<8x8xf32>
    %cst_145 = arith.constant -1.000000e+09 : f32
    %208 = vector.broadcast %cst_145 : f32 to vector<8x8xf32>
    %209 = arith.select %207, %208, %205 : vector<8x8xi1>, vector<8x8xf32>
    %cst_146 = arith.constant dense<0xFF800000> : vector<8xf32>
    %210 = vector.multi_reduction <maximumf>, %209, %cst_146 [1] : vector<8x8xf32> to vector<8xf32>
    %211 = vector.shape_cast %210 : vector<8xf32> to vector<8x1xf32>
    %212 = vector.broadcast %211 : vector<8x1xf32> to vector<8x8xf32>
    %213 = arith.subf %209, %212 : vector<8x8xf32>
    %214 = math.exp %213 : vector<8x8xf32>
    %cst_147 = arith.constant dense<0.000000e+00> : vector<8xf32>
    %215 = vector.multi_reduction <add>, %214, %cst_147 [1] : vector<8x8xf32> to vector<8xf32>
    %216 = vector.shape_cast %215 : vector<8xf32> to vector<8x1xf32>
    %217 = vector.broadcast %216 : vector<8x1xf32> to vector<8x8xf32>
    %218 = arith.divf %214, %217 : vector<8x8xf32>
    %219 = vector.extract_strided_slice %78 {offsets = [2, 0, 0], sizes = [1, 8, 8], strides = [1, 1, 1]} : vector<4x8x8xf32> to vector<1x8x8xf32>
    %220 = vector.shape_cast %219 : vector<1x8x8xf32> to vector<8x8xf32>
    %221 = arith.addf %218, %220 : vector<8x8xf32>
    %222 = arith.truncf %221 : vector<8x8xf32> to vector<8x8xbf16>
    %223 = arith.truncf %200 : vector<8x8xf32> to vector<8x8xbf16>
    %cst_148 = arith.constant dense<0.000000e+00> : vector<8x8xf32>
    %224 = tpu.matmul %222, %223, %cst_148 {dimension_numbers = #tpu.dot_dimension_numbers<[1], [0], [0], [1], [0, 0, 1, 1], [], []>} : vector<8x8xbf16>, vector<8x8xbf16>, vector<8x8xf32> -> vector<8x8xf32>
    %225 = arith.truncf %224 : vector<8x8xf32> to vector<8x8xbf16>
    %c2_149 = arith.constant 2 : index
    %c0_150 = arith.constant 0 : index
    %c0_151 = arith.constant 0 : index
    %226 = vector.load %arg10[%c2_149, %c0_150, %c0_151] : memref<4x8x32xbf16, #tpu.memory_space<vmem>>, vector<1x8x32xbf16>
    %227 = vector.shape_cast %226 : vector<1x8x32xbf16> to vector<8x32xbf16>
    %cst_152 = arith.constant dense<0.000000e+00> : vector<8x32xf32>
    %228 = tpu.matmul %225, %227, %cst_152 {dimension_numbers = #tpu.dot_dimension_numbers<[1], [0], [0], [1], [0, 0, 1, 1], [], []>} : vector<8x8xbf16>, vector<8x32xbf16>, vector<8x32xf32> -> vector<8x32xf32>
    %229 = arith.addf %179, %228 : vector<8x32xf32>
    %c0_153 = arith.constant 0 : index
    %c3 = arith.constant 3 : index
    %c0_154 = arith.constant 0 : index
    %c0_155 = arith.constant 0 : index
    %230 = vector.load %arg6[%c0_153, %c3, %c0_154, %c0_155] : memref<3x4x32x8xbf16, #tpu.memory_space<vmem>>, vector<1x1x32x8xbf16>
    %231 = vector.shape_cast %230 : vector<1x1x32x8xbf16> to vector<32x8xbf16>
    %cst_156 = arith.constant dense<0.000000e+00> : vector<8x8xf32>
    %232 = tpu.matmul %26, %231, %cst_156 {dimension_numbers = #tpu.dot_dimension_numbers<[1], [0], [0], [1], [0, 0, 1, 1], [], []>} : vector<8x32xbf16>, vector<32x8xbf16>, vector<8x8xf32> -> vector<8x8xf32>
    %c0_157 = arith.constant 0 : index
    %c3_158 = arith.constant 3 : index
    %c0_159 = arith.constant 0 : index
    %c0_160 = arith.constant 0 : index
    %233 = vector.load %arg7[%c0_157, %c3_158, %c0_159, %c0_160] : memref<3x4x1x8xf32, #tpu.memory_space<vmem>>, vector<1x1x1x8xf32>
    %234 = vector.shape_cast %233 : vector<1x1x1x8xf32> to vector<1x8xf32>
    %235 = vector.broadcast %234 : vector<1x8xf32> to vector<8x8xf32>
    %236 = arith.addf %232, %235 : vector<8x8xf32>
    %c1_161 = arith.constant 1 : index
    %c3_162 = arith.constant 3 : index
    %c0_163 = arith.constant 0 : index
    %c0_164 = arith.constant 0 : index
    %237 = vector.load %arg6[%c1_161, %c3_162, %c0_163, %c0_164] : memref<3x4x32x8xbf16, #tpu.memory_space<vmem>>, vector<1x1x32x8xbf16>
    %238 = vector.shape_cast %237 : vector<1x1x32x8xbf16> to vector<32x8xbf16>
    %cst_165 = arith.constant dense<0.000000e+00> : vector<8x8xf32>
    %239 = tpu.matmul %26, %238, %cst_165 {dimension_numbers = #tpu.dot_dimension_numbers<[1], [0], [0], [1], [0, 0, 1, 1], [], []>} : vector<8x32xbf16>, vector<32x8xbf16>, vector<8x8xf32> -> vector<8x8xf32>
    %c1_166 = arith.constant 1 : index
    %c3_167 = arith.constant 3 : index
    %c0_168 = arith.constant 0 : index
    %c0_169 = arith.constant 0 : index
    %240 = vector.load %arg7[%c1_166, %c3_167, %c0_168, %c0_169] : memref<3x4x1x8xf32, #tpu.memory_space<vmem>>, vector<1x1x1x8xf32>
    %241 = vector.shape_cast %240 : vector<1x1x1x8xf32> to vector<1x8xf32>
    %242 = vector.broadcast %241 : vector<1x8xf32> to vector<8x8xf32>
    %243 = arith.addf %239, %242 : vector<8x8xf32>
    %c2_170 = arith.constant 2 : index
    %c3_171 = arith.constant 3 : index
    %c0_172 = arith.constant 0 : index
    %c0_173 = arith.constant 0 : index
    %244 = vector.load %arg6[%c2_170, %c3_171, %c0_172, %c0_173] : memref<3x4x32x8xbf16, #tpu.memory_space<vmem>>, vector<1x1x32x8xbf16>
    %245 = vector.shape_cast %244 : vector<1x1x32x8xbf16> to vector<32x8xbf16>
    %cst_174 = arith.constant dense<0.000000e+00> : vector<8x8xf32>
    %246 = tpu.matmul %26, %245, %cst_174 {dimension_numbers = #tpu.dot_dimension_numbers<[1], [0], [0], [1], [0, 0, 1, 1], [], []>} : vector<8x32xbf16>, vector<32x8xbf16>, vector<8x8xf32> -> vector<8x8xf32>
    %c2_175 = arith.constant 2 : index
    %c3_176 = arith.constant 3 : index
    %c0_177 = arith.constant 0 : index
    %c0_178 = arith.constant 0 : index
    %247 = vector.load %arg7[%c2_175, %c3_176, %c0_177, %c0_178] : memref<3x4x1x8xf32, #tpu.memory_space<vmem>>, vector<1x1x1x8xf32>
    %248 = vector.shape_cast %247 : vector<1x1x1x8xf32> to vector<1x8xf32>
    %249 = vector.broadcast %248 : vector<1x8xf32> to vector<8x8xf32>
    %250 = arith.addf %246, %249 : vector<8x8xf32>
    %251 = arith.truncf %236 : vector<8x8xf32> to vector<8x8xbf16>
    %252 = arith.truncf %243 : vector<8x8xf32> to vector<8x8xbf16>
    %cst_179 = arith.constant dense<0.000000e+00> : vector<8x8xf32>
    %253 = tpu.matmul %251, %252, %cst_179 {dimension_numbers = #tpu.dot_dimension_numbers<[1], [1], [0], [0], [0, 0, 1, 0], [], []>} : vector<8x8xbf16>, vector<8x8xbf16>, vector<8x8xf32> -> vector<8x8xf32>
    %cst_180 = arith.constant 0.353553385 : f32
    %254 = vector.broadcast %cst_180 : f32 to vector<8x8xf32>
    %255 = arith.mulf %253, %254 : vector<8x8xf32>
    %cst_181 = arith.constant 0.000000e+00 : f32
    %256 = vector.broadcast %cst_181 : f32 to vector<8x8xf32>
    %257 = arith.cmpf oeq, %3, %256 : vector<8x8xf32>
    %cst_182 = arith.constant -1.000000e+09 : f32
    %258 = vector.broadcast %cst_182 : f32 to vector<8x8xf32>
    %259 = arith.select %257, %258, %255 : vector<8x8xi1>, vector<8x8xf32>
    %cst_183 = arith.constant dense<0xFF800000> : vector<8xf32>
    %260 = vector.multi_reduction <maximumf>, %259, %cst_183 [1] : vector<8x8xf32> to vector<8xf32>
    %261 = vector.shape_cast %260 : vector<8xf32> to vector<8x1xf32>
    %262 = vector.broadcast %261 : vector<8x1xf32> to vector<8x8xf32>
    %263 = arith.subf %259, %262 : vector<8x8xf32>
    %264 = math.exp %263 : vector<8x8xf32>
    %cst_184 = arith.constant dense<0.000000e+00> : vector<8xf32>
    %265 = vector.multi_reduction <add>, %264, %cst_184 [1] : vector<8x8xf32> to vector<8xf32>
    %266 = vector.shape_cast %265 : vector<8xf32> to vector<8x1xf32>
    %267 = vector.broadcast %266 : vector<8x1xf32> to vector<8x8xf32>
    %268 = arith.divf %264, %267 : vector<8x8xf32>
    %269 = vector.extract_strided_slice %78 {offsets = [3, 0, 0], sizes = [1, 8, 8], strides = [1, 1, 1]} : vector<4x8x8xf32> to vector<1x8x8xf32>
    %270 = vector.shape_cast %269 : vector<1x8x8xf32> to vector<8x8xf32>
    %271 = arith.addf %268, %270 : vector<8x8xf32>
    %272 = arith.truncf %271 : vector<8x8xf32> to vector<8x8xbf16>
    %273 = arith.truncf %250 : vector<8x8xf32> to vector<8x8xbf16>
    %cst_185 = arith.constant dense<0.000000e+00> : vector<8x8xf32>
    %274 = tpu.matmul %272, %273, %cst_185 {dimension_numbers = #tpu.dot_dimension_numbers<[1], [0], [0], [1], [0, 0, 1, 1], [], []>} : vector<8x8xbf16>, vector<8x8xbf16>, vector<8x8xf32> -> vector<8x8xf32>
    %275 = arith.truncf %274 : vector<8x8xf32> to vector<8x8xbf16>
    %c3_186 = arith.constant 3 : index
    %c0_187 = arith.constant 0 : index
    %c0_188 = arith.constant 0 : index
    %276 = vector.load %arg10[%c3_186, %c0_187, %c0_188] : memref<4x8x32xbf16, #tpu.memory_space<vmem>>, vector<1x8x32xbf16>
    %277 = vector.shape_cast %276 : vector<1x8x32xbf16> to vector<8x32xbf16>
    %cst_189 = arith.constant dense<0.000000e+00> : vector<8x32xf32>
    %278 = tpu.matmul %275, %277, %cst_189 {dimension_numbers = #tpu.dot_dimension_numbers<[1], [0], [0], [1], [0, 0, 1, 1], [], []>} : vector<8x8xbf16>, vector<8x32xbf16>, vector<8x32xf32> -> vector<8x32xf32>
    %279 = arith.addf %229, %278 : vector<8x32xf32>
    %280 = arith.addf %1, %279 : vector<8x32xf32>
    %c0_190 = arith.constant 0 : index
    %c0_191 = arith.constant 0 : index
    %281 = vector.load %arg11[%c0_190, %c0_191] : memref<1x32xf32, #tpu.memory_space<vmem>>, vector<1x32xf32>
    %282 = vector.broadcast %281 : vector<1x32xf32> to vector<8x32xf32>
    %283 = arith.addf %280, %282 : vector<8x32xf32>
    %c0_192 = arith.constant 0 : index
    %c0_193 = arith.constant 0 : index
    %c0_194 = arith.constant 0 : index
    %284 = vector.load %arg13[%c0_192, %c0_193, %c0_194] : memref<1x8x32xf32, #tpu.memory_space<vmem>>, vector<1x8x32xf32>
    %285 = vector.shape_cast %284 : vector<1x8x32xf32> to vector<8x32xf32>
    %286 = vector.shape_cast %283 : vector<8x32xf32> to vector<1x8x32xf32>
    tpu.vector_store %arg13[%c0_192, %c0_193, %c0_194], %286 {strides = array<i32>} : memref<1x8x32xf32, #tpu.memory_space<vmem>>, vector<1x8x32xf32>,
    return
  }
  func.func @transform_0(%arg0: i32) -> (i32, i32, i32) {
    %c0_i32 = arith.constant 0 : i32
    %c0_i32_0 = arith.constant 0 : i32
    %c0_i32_1 = arith.constant 0 : i32
    return %arg0, %c0_i32, %c0_i32_0 : i32, i32, i32
  }
  func.func @transform_1(%arg0: i32) -> (i32, i32, i32) {
    %c0_i32 = arith.constant 0 : i32
    %c0_i32_0 = arith.constant 0 : i32
    %c0_i32_1 = arith.constant 0 : i32
    return %arg0, %c0_i32, %c0_i32_0 : i32, i32, i32
  }
  func.func @transform_2(%arg0: i32) -> (i32, i32, i32) {
    %c0_i32 = arith.constant 0 : i32
    %c0_i32_0 = arith.constant 0 : i32
    %c0_i32_1 = arith.constant 0 : i32
    return %arg0, %c0_i32, %c0_i32_0 : i32, i32, i32
  }
  func.func @transform_3(%arg0: i32) -> (i32, i32) {
    %c0_i32 = arith.constant 0 : i32
    %c0_i32_0 = arith.constant 0 : i32
    %c0_i32_1 = arith.constant 0 : i32
    return %c0_i32, %c0_i32_0 : i32, i32
  }
  func.func @transform_4(%arg0: i32) -> (i32, i32) {
    %c0_i32 = arith.constant 0 : i32
    %c0_i32_0 = arith.constant 0 : i32
    %c0_i32_1 = arith.constant 0 : i32
    return %c0_i32, %c0_i32_0 : i32, i32
  }
  func.func @transform_5(%arg0: i32) -> (i32, i32, i32, i32) {
    %c0_i32 = arith.constant 0 : i32
    %c0_i32_0 = arith.constant 0 : i32
    %c0_i32_1 = arith.constant 0 : i32
    %c0_i32_2 = arith.constant 0 : i32
    %c0_i32_3 = arith.constant 0 : i32
    return %c0_i32, %c0_i32_0, %c0_i32_1, %c0_i32_2 : i32, i32, i32, i32
  }
  func.func @transform_6(%arg0: i32) -> (i32, i32, i32, i32) {
    %c0_i32 = arith.constant 0 : i32
    %c0_i32_0 = arith.constant 0 : i32
    %c0_i32_1 = arith.constant 0 : i32
    %c0_i32_2 = arith.constant 0 : i32
    %c0_i32_3 = arith.constant 0 : i32
    return %c0_i32, %c0_i32_0, %c0_i32_1, %c0_i32_2 : i32, i32, i32, i32
  }
  func.func @transform_7(%arg0: i32) -> (i32, i32) {
    %c0_i32 = arith.constant 0 : i32
    %c0_i32_0 = arith.constant 0 : i32
    %c0_i32_1 = arith.constant 0 : i32
    return %c0_i32, %c0_i32_0 : i32, i32
  }
  func.func @transform_8(%arg0: i32) -> (i32, i32) {
    %c0_i32 = arith.constant 0 : i32
    %c0_i32_0 = arith.constant 0 : i32
    %c0_i32_1 = arith.constant 0 : i32
    return %c0_i32, %c0_i32_0 : i32, i32
  }
  func.func @transform_9(%arg0: i32) -> (i32, i32, i32) {
    %c0_i32 = arith.constant 0 : i32
    %c0_i32_0 = arith.constant 0 : i32
    %c0_i32_1 = arith.constant 0 : i32
    %c0_i32_2 = arith.constant 0 : i32
    return %c0_i32, %c0_i32_0, %c0_i32_1 : i32, i32, i32
  }
  func.func @transform_10(%arg0: i32) -> (i32, i32) {
    %c0_i32 = arith.constant 0 : i32
    %c0_i32_0 = arith.constant 0 : i32
    %c0_i32_1 = arith.constant 0 : i32
    return %c0_i32, %c0_i32_0 : i32, i32
  }
  func.func @transform_11(%arg0: i32) -> (i32, i32) {
    %c0_i32 = arith.constant 0 : i32
    %c0_i32_0 = arith.constant 0 : i32
    %c0_i32_1 = arith.constant 0 : i32
    return %c0_i32, %c0_i32_0 : i32, i32
  }
  func.func @transform_12(%arg0: i32) -> (i32, i32, i32) {
    %c0_i32 = arith.constant 0 : i32
    %c0_i32_0 = arith.constant 0 : i32
    %c0_i32_1 = arith.constant 0 : i32
    return %arg0, %c0_i32, %c0_i32_0 : i32, i32, i32
  }
}

module attributes {stable_mosaic.version = 11 : i64} {
  func.func @_cross_ln_mlp_res_kernel(%arg0: i32, %arg1: i32, %arg2: memref<1x8x32xf32, #tpu.memory_space<vmem>>, %arg3: memref<1x1x32xf32, #tpu.memory_space<vmem>>, %arg4: memref<32x32xbf16, #tpu.memory_space<vmem>>, %arg5: memref<1x32xf32, #tpu.memory_space<vmem>>, %arg6: memref<32x32xbf16, #tpu.memory_space<vmem>>, %arg7: memref<1x32xf32, #tpu.memory_space<vmem>>, %arg8: memref<1x32xf32, #tpu.memory_space<vmem>>, %arg9: memref<1x32xf32, #tpu.memory_space<vmem>>, %arg10: memref<32x128xbf16, #tpu.memory_space<vmem>>, %arg11: memref<1x128xf32, #tpu.memory_space<vmem>>, %arg12: memref<128x32xbf16, #tpu.memory_space<vmem>>, %arg13: memref<1x32xf32, #tpu.memory_space<vmem>>, %arg14: memref<1x8x32xf32, #tpu.memory_space<vmem>>) attributes {dimension_semantics = [#tpu.dimension_semantics<parallel>, #tpu.dimension_semantics<parallel>], iteration_bounds = array<i64: 2, 1>, scalar_prefetch = 0 : i64, scratch_operands = 0 : i64, tpu.core_type = #tpu.core_type<tc>, window_params = [{transform_indices = @transform_0, window_bounds = array<i64: 1, 8, 32>}, {transform_indices = @transform_1, window_bounds = array<i64: 1, 1, 32>}, {pipeline_mode = #tpu.pipeline_mode<synchronous>, transform_indices = @transform_2, window_bounds = array<i64: 32, 32>}, {pipeline_mode = #tpu.pipeline_mode<synchronous>, transform_indices = @transform_3, window_bounds = array<i64: 1, 32>}, {pipeline_mode = #tpu.pipeline_mode<synchronous>, transform_indices = @transform_4, window_bounds = array<i64: 32, 32>}, {pipeline_mode = #tpu.pipeline_mode<synchronous>, transform_indices = @transform_5, window_bounds = array<i64: 1, 32>}, {pipeline_mode = #tpu.pipeline_mode<synchronous>, transform_indices = @transform_6, window_bounds = array<i64: 1, 32>}, {pipeline_mode = #tpu.pipeline_mode<synchronous>, transform_indices = @transform_7, window_bounds = array<i64: 1, 32>}, {pipeline_mode = #tpu.pipeline_mode<synchronous>, transform_indices = @transform_8, window_bounds = array<i64: 32, 128>}, {pipeline_mode = #tpu.pipeline_mode<synchronous>, transform_indices = @transform_9, window_bounds = array<i64: 1, 128>}, {pipeline_mode = #tpu.pipeline_mode<synchronous>, transform_indices = @transform_10, window_bounds = array<i64: 128, 32>}, {pipeline_mode = #tpu.pipeline_mode<synchronous>, transform_indices = @transform_11, window_bounds = array<i64: 1, 32>}, {transform_indices = @transform_12, window_bounds = array<i64: 1, 8, 32>}]} {
    %c0 = arith.constant 0 : index
    %c0_0 = arith.constant 0 : index
    %c0_1 = arith.constant 0 : index
    %0 = vector.load %arg3[%c0, %c0_0, %c0_1] : memref<1x1x32xf32, #tpu.memory_space<vmem>>, vector<1x1x32xf32>
    %1 = vector.shape_cast %0 : vector<1x1x32xf32> to vector<1x32xf32>
    %2 = arith.truncf %1 : vector<1x32xf32> to vector<1x32xbf16>
    %c0_2 = arith.constant 0 : index
    %c0_3 = arith.constant 0 : index
    %3 = vector.load %arg4[%c0_2, %c0_3] : memref<32x32xbf16, #tpu.memory_space<vmem>>, vector<32x32xbf16>
    %cst = arith.constant dense<0.000000e+00> : vector<1x32xf32>
    %4 = tpu.matmul %2, %3, %cst {dimension_numbers = #tpu.dot_dimension_numbers<[1], [0], [0], [1], [0, 0, 1, 1], [], []>} : vector<1x32xbf16>, vector<32x32xbf16>, vector<1x32xf32> -> vector<1x32xf32>
    %c0_4 = arith.constant 0 : index
    %c0_5 = arith.constant 0 : index
    %5 = vector.load %arg5[%c0_4, %c0_5] : memref<1x32xf32, #tpu.memory_space<vmem>>, vector<1x32xf32>
    %6 = arith.addf %4, %5 : vector<1x32xf32>
    %7 = arith.truncf %6 : vector<1x32xf32> to vector<1x32xbf16>
    %c0_6 = arith.constant 0 : index
    %c0_7 = arith.constant 0 : index
    %8 = vector.load %arg6[%c0_6, %c0_7] : memref<32x32xbf16, #tpu.memory_space<vmem>>, vector<32x32xbf16>
    %cst_8 = arith.constant dense<0.000000e+00> : vector<1x32xf32>
    %9 = tpu.matmul %7, %8, %cst_8 {dimension_numbers = #tpu.dot_dimension_numbers<[1], [0], [0], [1], [0, 0, 1, 1], [], []>} : vector<1x32xbf16>, vector<32x32xbf16>, vector<1x32xf32> -> vector<1x32xf32>
    %c0_9 = arith.constant 0 : index
    %c0_10 = arith.constant 0 : index
    %10 = vector.load %arg7[%c0_9, %c0_10] : memref<1x32xf32, #tpu.memory_space<vmem>>, vector<1x32xf32>
    %11 = arith.addf %9, %10 : vector<1x32xf32>
    %c0_11 = arith.constant 0 : index
    %c0_12 = arith.constant 0 : index
    %c0_13 = arith.constant 0 : index
    %12 = vector.load %arg2[%c0_11, %c0_12, %c0_13] : memref<1x8x32xf32, #tpu.memory_space<vmem>>, vector<1x8x32xf32>
    %13 = vector.shape_cast %12 : vector<1x8x32xf32> to vector<8x32xf32>
    %14 = vector.broadcast %11 : vector<1x32xf32> to vector<8x32xf32>
    %15 = arith.addf %13, %14 : vector<8x32xf32>
    %c0_14 = arith.constant 0 : index
    %c0_15 = arith.constant 0 : index
    %16 = vector.load %arg8[%c0_14, %c0_15] : memref<1x32xf32, #tpu.memory_space<vmem>>, vector<1x32xf32>
    %c0_16 = arith.constant 0 : index
    %c0_17 = arith.constant 0 : index
    %17 = vector.load %arg9[%c0_16, %c0_17] : memref<1x32xf32, #tpu.memory_space<vmem>>, vector<1x32xf32>
    %cst_18 = arith.constant dense<0.000000e+00> : vector<8xf32>
    %18 = vector.multi_reduction <add>, %15, %cst_18 [1] : vector<8x32xf32> to vector<8xf32>
    %19 = vector.shape_cast %18 : vector<8xf32> to vector<8x1xf32>
    %cst_19 = arith.constant 3.200000e+01 : f32
    %20 = vector.broadcast %cst_19 : f32 to vector<8x1xf32>
    %21 = arith.divf %19, %20 : vector<8x1xf32>
    %22 = vector.broadcast %21 : vector<8x1xf32> to vector<8x32xf32>
    %23 = arith.subf %15, %22 : vector<8x32xf32>
    %24 = arith.mulf %23, %23 : vector<8x32xf32>
    %cst_20 = arith.constant dense<0.000000e+00> : vector<8xf32>
    %25 = vector.multi_reduction <add>, %24, %cst_20 [1] : vector<8x32xf32> to vector<8xf32>
    %26 = vector.shape_cast %25 : vector<8xf32> to vector<8x1xf32>
    %cst_21 = arith.constant 3.200000e+01 : f32
    %27 = vector.broadcast %cst_21 : f32 to vector<8x1xf32>
    %28 = arith.divf %26, %27 : vector<8x1xf32>
    %cst_22 = arith.constant 9.99999974E-6 : f32
    %29 = vector.broadcast %cst_22 : f32 to vector<8x1xf32>
    %30 = arith.addf %28, %29 : vector<8x1xf32>
    %31 = math.rsqrt %30 : vector<8x1xf32>
    %32 = vector.broadcast %31 : vector<8x1xf32> to vector<8x32xf32>
    %33 = arith.mulf %23, %32 : vector<8x32xf32>
    %34 = vector.broadcast %16 : vector<1x32xf32> to vector<8x32xf32>
    %35 = arith.mulf %33, %34 : vector<8x32xf32>
    %36 = vector.broadcast %17 : vector<1x32xf32> to vector<8x32xf32>
    %37 = arith.addf %35, %36 : vector<8x32xf32>
    %38 = arith.truncf %37 : vector<8x32xf32> to vector<8x32xbf16>
    %c0_23 = arith.constant 0 : index
    %c0_24 = arith.constant 0 : index
    %39 = vector.load %arg10[%c0_23, %c0_24] : memref<32x128xbf16, #tpu.memory_space<vmem>>, vector<32x128xbf16>
    %cst_25 = arith.constant dense<0.000000e+00> : vector<8x128xf32>
    %40 = tpu.matmul %38, %39, %cst_25 {dimension_numbers = #tpu.dot_dimension_numbers<[1], [0], [0], [1], [0, 0, 1, 1], [], []>} : vector<8x32xbf16>, vector<32x128xbf16>, vector<8x128xf32> -> vector<8x128xf32>
    %c0_26 = arith.constant 0 : index
    %c0_27 = arith.constant 0 : index
    %41 = vector.load %arg11[%c0_26, %c0_27] : memref<1x128xf32, #tpu.memory_space<vmem>>, vector<1x128xf32>
    %42 = vector.broadcast %41 : vector<1x128xf32> to vector<8x128xf32>
    %43 = arith.addf %40, %42 : vector<8x128xf32>
    %cst_28 = arith.constant 5.000000e-01 : f32
    %44 = vector.broadcast %cst_28 : f32 to vector<8x128xf32>
    %45 = arith.mulf %44, %43 : vector<8x128xf32>
    %cst_29 = arith.constant 0.707106769 : f32
    %46 = vector.broadcast %cst_29 : f32 to vector<8x128xf32>
    %47 = arith.mulf %43, %46 : vector<8x128xf32>
    %cst_30 = arith.constant 0.000000e+00 : f32
    %48 = vector.broadcast %cst_30 : f32 to vector<8x128xf32>
    %49 = arith.cmpf oge, %47, %48 : vector<8x128xf32>
    %cst_31 = arith.constant 1.000000e+00 : f32
    %cst_32 = arith.constant -1.000000e+00 : f32
    %50 = vector.broadcast %cst_31 : f32 to vector<8x128xf32>
    %51 = vector.broadcast %cst_32 : f32 to vector<8x128xf32>
    %52 = arith.select %49, %50, %51 : vector<8x128xi1>, vector<8x128xf32>
    %53 = math.absf %47 : vector<8x128xf32>
    %cst_33 = arith.constant 0.327591091 : f32
    %54 = vector.broadcast %cst_33 : f32 to vector<8x128xf32>
    %55 = arith.mulf %54, %53 : vector<8x128xf32>
    %cst_34 = arith.constant 1.000000e+00 : f32
    %56 = vector.broadcast %cst_34 : f32 to vector<8x128xf32>
    %57 = arith.addf %56, %55 : vector<8x128xf32>
    %cst_35 = arith.constant 1.000000e+00 : f32
    %58 = vector.broadcast %cst_35 : f32 to vector<8x128xf32>
    %59 = arith.divf %58, %57 : vector<8x128xf32>
    %cst_36 = arith.constant 1.06140542 : f32
    %60 = vector.broadcast %cst_36 : f32 to vector<8x128xf32>
    %61 = arith.mulf %60, %59 : vector<8x128xf32>
    %cst_37 = arith.constant -1.45315206 : f32
    %62 = vector.broadcast %cst_37 : f32 to vector<8x128xf32>
    %63 = arith.addf %61, %62 : vector<8x128xf32>
    %64 = arith.mulf %63, %59 : vector<8x128xf32>
    %cst_38 = arith.constant 1.42141378 : f32
    %65 = vector.broadcast %cst_38 : f32 to vector<8x128xf32>
    %66 = arith.addf %64, %65 : vector<8x128xf32>
    %67 = arith.mulf %66, %59 : vector<8x128xf32>
    %cst_39 = arith.constant -0.284496725 : f32
    %68 = vector.broadcast %cst_39 : f32 to vector<8x128xf32>
    %69 = arith.addf %67, %68 : vector<8x128xf32>
    %70 = arith.mulf %69, %59 : vector<8x128xf32>
    %cst_40 = arith.constant 0.254829586 : f32
    %71 = vector.broadcast %cst_40 : f32 to vector<8x128xf32>
    %72 = arith.addf %70, %71 : vector<8x128xf32>
    %73 = arith.mulf %72, %59 : vector<8x128xf32>
    %cst_41 = arith.constant 0.000000e+00 : f32
    %74 = vector.broadcast %cst_41 : f32 to vector<8x128xf32>
    %75 = arith.subf %74, %53 : vector<8x128xf32>
    %76 = arith.mulf %75, %53 : vector<8x128xf32>
    %77 = math.exp %76 : vector<8x128xf32>
    %78 = arith.mulf %73, %77 : vector<8x128xf32>
    %cst_42 = arith.constant 1.000000e+00 : f32
    %79 = vector.broadcast %cst_42 : f32 to vector<8x128xf32>
    %80 = arith.subf %79, %78 : vector<8x128xf32>
    %81 = arith.mulf %52, %80 : vector<8x128xf32>
    %cst_43 = arith.constant 1.000000e+00 : f32
    %82 = vector.broadcast %cst_43 : f32 to vector<8x128xf32>
    %83 = arith.addf %82, %81 : vector<8x128xf32>
    %84 = arith.mulf %45, %83 : vector<8x128xf32>
    %85 = arith.truncf %84 : vector<8x128xf32> to vector<8x128xbf16>
    %c0_44 = arith.constant 0 : index
    %c0_45 = arith.constant 0 : index
    %86 = vector.load %arg12[%c0_44, %c0_45] : memref<128x32xbf16, #tpu.memory_space<vmem>>, vector<128x32xbf16>
    %cst_46 = arith.constant dense<0.000000e+00> : vector<8x32xf32>
    %87 = tpu.matmul %85, %86, %cst_46 {dimension_numbers = #tpu.dot_dimension_numbers<[1], [0], [0], [1], [0, 0, 1, 1], [], []>} : vector<8x128xbf16>, vector<128x32xbf16>, vector<8x32xf32> -> vector<8x32xf32>
    %c0_47 = arith.constant 0 : index
    %c0_48 = arith.constant 0 : index
    %88 = vector.load %arg13[%c0_47, %c0_48] : memref<1x32xf32, #tpu.memory_space<vmem>>, vector<1x32xf32>
    %89 = vector.broadcast %88 : vector<1x32xf32> to vector<8x32xf32>
    %90 = arith.addf %87, %89 : vector<8x32xf32>
    %91 = arith.addf %15, %90 : vector<8x32xf32>
    %c0_49 = arith.constant 0 : index
    %c0_50 = arith.constant 0 : index
    %c0_51 = arith.constant 0 : index
    %92 = vector.load %arg14[%c0_49, %c0_50, %c0_51] : memref<1x8x32xf32, #tpu.memory_space<vmem>>, vector<1x8x32xf32>
    %93 = vector.shape_cast %92 : vector<1x8x32xf32> to vector<8x32xf32>
    %94 = vector.shape_cast %91 : vector<8x32xf32> to vector<1x8x32xf32>
    tpu.vector_store %arg14[%c0_49, %c0_50, %c0_51], %94 {strides = array<i32>} : memref<1x8x32xf32, #tpu.memory_space<vmem>>, vector<1x8x32xf32>,
    return
  }
  func.func @transform_0(%arg0: i32, %arg1: i32) -> (i32, i32, i32) {
    %c0_i32 = arith.constant 0 : i32
    %c0_i32_0 = arith.constant 0 : i32
    return %arg0, %arg1, %c0_i32 : i32, i32, i32
  }
  func.func @transform_1(%arg0: i32, %arg1: i32) -> (i32, i32, i32) {
    %c0_i32 = arith.constant 0 : i32
    %c0_i32_0 = arith.constant 0 : i32
    %c0_i32_1 = arith.constant 0 : i32
    return %arg0, %c0_i32, %c0_i32_0 : i32, i32, i32
  }
  func.func @transform_2(%arg0: i32, %arg1: i32) -> (i32, i32) {
    %c0_i32 = arith.constant 0 : i32
    %c0_i32_0 = arith.constant 0 : i32
    %c0_i32_1 = arith.constant 0 : i32
    return %c0_i32, %c0_i32_0 : i32, i32
  }
  func.func @transform_3(%arg0: i32, %arg1: i32) -> (i32, i32) {
    %c0_i32 = arith.constant 0 : i32
    %c0_i32_0 = arith.constant 0 : i32
    %c0_i32_1 = arith.constant 0 : i32
    return %c0_i32, %c0_i32_0 : i32, i32
  }
  func.func @transform_4(%arg0: i32, %arg1: i32) -> (i32, i32) {
    %c0_i32 = arith.constant 0 : i32
    %c0_i32_0 = arith.constant 0 : i32
    %c0_i32_1 = arith.constant 0 : i32
    return %c0_i32, %c0_i32_0 : i32, i32
  }
  func.func @transform_5(%arg0: i32, %arg1: i32) -> (i32, i32) {
    %c0_i32 = arith.constant 0 : i32
    %c0_i32_0 = arith.constant 0 : i32
    %c0_i32_1 = arith.constant 0 : i32
    return %c0_i32, %c0_i32_0 : i32, i32
  }
  func.func @transform_6(%arg0: i32, %arg1: i32) -> (i32, i32) {
    %c0_i32 = arith.constant 0 : i32
    %c0_i32_0 = arith.constant 0 : i32
    %c0_i32_1 = arith.constant 0 : i32
    return %c0_i32, %c0_i32_0 : i32, i32
  }
  func.func @transform_7(%arg0: i32, %arg1: i32) -> (i32, i32) {
    %c0_i32 = arith.constant 0 : i32
    %c0_i32_0 = arith.constant 0 : i32
    %c0_i32_1 = arith.constant 0 : i32
    return %c0_i32, %c0_i32_0 : i32, i32
  }
  func.func @transform_8(%arg0: i32, %arg1: i32) -> (i32, i32) {
    %c0_i32 = arith.constant 0 : i32
    %c0_i32_0 = arith.constant 0 : i32
    %c0_i32_1 = arith.constant 0 : i32
    return %c0_i32, %c0_i32_0 : i32, i32
  }
  func.func @transform_9(%arg0: i32, %arg1: i32) -> (i32, i32) {
    %c0_i32 = arith.constant 0 : i32
    %c0_i32_0 = arith.constant 0 : i32
    %c0_i32_1 = arith.constant 0 : i32
    return %c0_i32, %c0_i32_0 : i32, i32
  }
  func.func @transform_10(%arg0: i32, %arg1: i32) -> (i32, i32) {
    %c0_i32 = arith.constant 0 : i32
    %c0_i32_0 = arith.constant 0 : i32
    %c0_i32_1 = arith.constant 0 : i32
    return %c0_i32, %c0_i32_0 : i32, i32
  }
  func.func @transform_11(%arg0: i32, %arg1: i32) -> (i32, i32) {
    %c0_i32 = arith.constant 0 : i32
    %c0_i32_0 = arith.constant 0 : i32
    %c0_i32_1 = arith.constant 0 : i32
    return %c0_i32, %c0_i32_0 : i32, i32
  }
  func.func @transform_12(%arg0: i32, %arg1: i32) -> (i32, i32, i32) {
    %c0_i32 = arith.constant 0 : i32
    %c0_i32_0 = arith.constant 0 : i32
    return %arg0, %arg1, %c0_i32 : i32, i32, i32
  }
}

module attributes {stable_mosaic.version = 11 : i64} {
  func.func @_cross_ln_mlp_res_kernel(%arg0: i32, %arg1: i32, %arg2: memref<1x8x32xf32, #tpu.memory_space<vmem>>, %arg3: memref<1x1x32xf32, #tpu.memory_space<vmem>>, %arg4: memref<32x32xbf16, #tpu.memory_space<vmem>>, %arg5: memref<1x32xf32, #tpu.memory_space<vmem>>, %arg6: memref<32x32xbf16, #tpu.memory_space<vmem>>, %arg7: memref<1x32xf32, #tpu.memory_space<vmem>>, %arg8: memref<1x32xf32, #tpu.memory_space<vmem>>, %arg9: memref<1x32xf32, #tpu.memory_space<vmem>>, %arg10: memref<32x128xbf16, #tpu.memory_space<vmem>>, %arg11: memref<1x128xf32, #tpu.memory_space<vmem>>, %arg12: memref<128x32xbf16, #tpu.memory_space<vmem>>, %arg13: memref<1x32xf32, #tpu.memory_space<vmem>>, %arg14: memref<1x8x32xf32, #tpu.memory_space<vmem>>) attributes {dimension_semantics = [#tpu.dimension_semantics<parallel>, #tpu.dimension_semantics<parallel>], iteration_bounds = array<i64: 2, 1>, scalar_prefetch = 0 : i64, scratch_operands = 0 : i64, tpu.core_type = #tpu.core_type<tc>, window_params = [{transform_indices = @transform_0, window_bounds = array<i64: 1, 8, 32>}, {transform_indices = @transform_1, window_bounds = array<i64: 1, 1, 32>}, {pipeline_mode = #tpu.pipeline_mode<synchronous>, transform_indices = @transform_2, window_bounds = array<i64: 32, 32>}, {pipeline_mode = #tpu.pipeline_mode<synchronous>, transform_indices = @transform_3, window_bounds = array<i64: 1, 32>}, {pipeline_mode = #tpu.pipeline_mode<synchronous>, transform_indices = @transform_4, window_bounds = array<i64: 32, 32>}, {pipeline_mode = #tpu.pipeline_mode<synchronous>, transform_indices = @transform_5, window_bounds = array<i64: 1, 32>}, {pipeline_mode = #tpu.pipeline_mode<synchronous>, transform_indices = @transform_6, window_bounds = array<i64: 1, 32>}, {pipeline_mode = #tpu.pipeline_mode<synchronous>, transform_indices = @transform_7, window_bounds = array<i64: 1, 32>}, {pipeline_mode = #tpu.pipeline_mode<synchronous>, transform_indices = @transform_8, window_bounds = array<i64: 32, 128>}, {pipeline_mode = #tpu.pipeline_mode<synchronous>, transform_indices = @transform_9, window_bounds = array<i64: 1, 128>}, {pipeline_mode = #tpu.pipeline_mode<synchronous>, transform_indices = @transform_10, window_bounds = array<i64: 128, 32>}, {pipeline_mode = #tpu.pipeline_mode<synchronous>, transform_indices = @transform_11, window_bounds = array<i64: 1, 32>}, {transform_indices = @transform_12, window_bounds = array<i64: 1, 8, 32>}]} {
    %c0 = arith.constant 0 : index
    %c0_0 = arith.constant 0 : index
    %c0_1 = arith.constant 0 : index
    %0 = vector.load %arg3[%c0, %c0_0, %c0_1] : memref<1x1x32xf32, #tpu.memory_space<vmem>>, vector<1x1x32xf32>
    %1 = vector.shape_cast %0 : vector<1x1x32xf32> to vector<1x32xf32>
    %2 = arith.truncf %1 : vector<1x32xf32> to vector<1x32xbf16>
    %c0_2 = arith.constant 0 : index
    %c0_3 = arith.constant 0 : index
    %3 = vector.load %arg4[%c0_2, %c0_3] : memref<32x32xbf16, #tpu.memory_space<vmem>>, vector<32x32xbf16>
    %cst = arith.constant dense<0.000000e+00> : vector<1x32xf32>
    %4 = tpu.matmul %2, %3, %cst {dimension_numbers = #tpu.dot_dimension_numbers<[1], [0], [0], [1], [0, 0, 1, 1], [], []>} : vector<1x32xbf16>, vector<32x32xbf16>, vector<1x32xf32> -> vector<1x32xf32>
    %c0_4 = arith.constant 0 : index
    %c0_5 = arith.constant 0 : index
    %5 = vector.load %arg5[%c0_4, %c0_5] : memref<1x32xf32, #tpu.memory_space<vmem>>, vector<1x32xf32>
    %6 = arith.addf %4, %5 : vector<1x32xf32>
    %7 = arith.truncf %6 : vector<1x32xf32> to vector<1x32xbf16>
    %c0_6 = arith.constant 0 : index
    %c0_7 = arith.constant 0 : index
    %8 = vector.load %arg6[%c0_6, %c0_7] : memref<32x32xbf16, #tpu.memory_space<vmem>>, vector<32x32xbf16>
    %cst_8 = arith.constant dense<0.000000e+00> : vector<1x32xf32>
    %9 = tpu.matmul %7, %8, %cst_8 {dimension_numbers = #tpu.dot_dimension_numbers<[1], [0], [0], [1], [0, 0, 1, 1], [], []>} : vector<1x32xbf16>, vector<32x32xbf16>, vector<1x32xf32> -> vector<1x32xf32>
    %c0_9 = arith.constant 0 : index
    %c0_10 = arith.constant 0 : index
    %10 = vector.load %arg7[%c0_9, %c0_10] : memref<1x32xf32, #tpu.memory_space<vmem>>, vector<1x32xf32>
    %11 = arith.addf %9, %10 : vector<1x32xf32>
    %c0_11 = arith.constant 0 : index
    %c0_12 = arith.constant 0 : index
    %c0_13 = arith.constant 0 : index
    %12 = vector.load %arg2[%c0_11, %c0_12, %c0_13] : memref<1x8x32xf32, #tpu.memory_space<vmem>>, vector<1x8x32xf32>
    %13 = vector.shape_cast %12 : vector<1x8x32xf32> to vector<8x32xf32>
    %14 = vector.broadcast %11 : vector<1x32xf32> to vector<8x32xf32>
    %15 = arith.addf %13, %14 : vector<8x32xf32>
    %c0_14 = arith.constant 0 : index
    %c0_15 = arith.constant 0 : index
    %16 = vector.load %arg8[%c0_14, %c0_15] : memref<1x32xf32, #tpu.memory_space<vmem>>, vector<1x32xf32>
    %c0_16 = arith.constant 0 : index
    %c0_17 = arith.constant 0 : index
    %17 = vector.load %arg9[%c0_16, %c0_17] : memref<1x32xf32, #tpu.memory_space<vmem>>, vector<1x32xf32>
    %cst_18 = arith.constant dense<0.000000e+00> : vector<8xf32>
    %18 = vector.multi_reduction <add>, %15, %cst_18 [1] : vector<8x32xf32> to vector<8xf32>
    %19 = vector.shape_cast %18 : vector<8xf32> to vector<8x1xf32>
    %cst_19 = arith.constant 3.200000e+01 : f32
    %20 = vector.broadcast %cst_19 : f32 to vector<8x1xf32>
    %21 = arith.divf %19, %20 : vector<8x1xf32>
    %22 = vector.broadcast %21 : vector<8x1xf32> to vector<8x32xf32>
    %23 = arith.subf %15, %22 : vector<8x32xf32>
    %24 = arith.mulf %23, %23 : vector<8x32xf32>
    %cst_20 = arith.constant dense<0.000000e+00> : vector<8xf32>
    %25 = vector.multi_reduction <add>, %24, %cst_20 [1] : vector<8x32xf32> to vector<8xf32>
    %26 = vector.shape_cast %25 : vector<8xf32> to vector<8x1xf32>
    %cst_21 = arith.constant 3.200000e+01 : f32
    %27 = vector.broadcast %cst_21 : f32 to vector<8x1xf32>
    %28 = arith.divf %26, %27 : vector<8x1xf32>
    %cst_22 = arith.constant 9.99999974E-6 : f32
    %29 = vector.broadcast %cst_22 : f32 to vector<8x1xf32>
    %30 = arith.addf %28, %29 : vector<8x1xf32>
    %31 = math.rsqrt %30 : vector<8x1xf32>
    %32 = vector.broadcast %31 : vector<8x1xf32> to vector<8x32xf32>
    %33 = arith.mulf %23, %32 : vector<8x32xf32>
    %34 = vector.broadcast %16 : vector<1x32xf32> to vector<8x32xf32>
    %35 = arith.mulf %33, %34 : vector<8x32xf32>
    %36 = vector.broadcast %17 : vector<1x32xf32> to vector<8x32xf32>
    %37 = arith.addf %35, %36 : vector<8x32xf32>
    %38 = arith.truncf %37 : vector<8x32xf32> to vector<8x32xbf16>
    %c0_23 = arith.constant 0 : index
    %c0_24 = arith.constant 0 : index
    %39 = vector.load %arg10[%c0_23, %c0_24] : memref<32x128xbf16, #tpu.memory_space<vmem>>, vector<32x128xbf16>
    %cst_25 = arith.constant dense<0.000000e+00> : vector<8x128xf32>
    %40 = tpu.matmul %38, %39, %cst_25 {dimension_numbers = #tpu.dot_dimension_numbers<[1], [0], [0], [1], [0, 0, 1, 1], [], []>} : vector<8x32xbf16>, vector<32x128xbf16>, vector<8x128xf32> -> vector<8x128xf32>
    %c0_26 = arith.constant 0 : index
    %c0_27 = arith.constant 0 : index
    %41 = vector.load %arg11[%c0_26, %c0_27] : memref<1x128xf32, #tpu.memory_space<vmem>>, vector<1x128xf32>
    %42 = vector.broadcast %41 : vector<1x128xf32> to vector<8x128xf32>
    %43 = arith.addf %40, %42 : vector<8x128xf32>
    %cst_28 = arith.constant 5.000000e-01 : f32
    %44 = vector.broadcast %cst_28 : f32 to vector<8x128xf32>
    %45 = arith.mulf %44, %43 : vector<8x128xf32>
    %cst_29 = arith.constant 0.707106769 : f32
    %46 = vector.broadcast %cst_29 : f32 to vector<8x128xf32>
    %47 = arith.mulf %43, %46 : vector<8x128xf32>
    %cst_30 = arith.constant 0.000000e+00 : f32
    %48 = vector.broadcast %cst_30 : f32 to vector<8x128xf32>
    %49 = arith.cmpf oge, %47, %48 : vector<8x128xf32>
    %cst_31 = arith.constant 1.000000e+00 : f32
    %cst_32 = arith.constant -1.000000e+00 : f32
    %50 = vector.broadcast %cst_31 : f32 to vector<8x128xf32>
    %51 = vector.broadcast %cst_32 : f32 to vector<8x128xf32>
    %52 = arith.select %49, %50, %51 : vector<8x128xi1>, vector<8x128xf32>
    %53 = math.absf %47 : vector<8x128xf32>
    %cst_33 = arith.constant 0.327591091 : f32
    %54 = vector.broadcast %cst_33 : f32 to vector<8x128xf32>
    %55 = arith.mulf %54, %53 : vector<8x128xf32>
    %cst_34 = arith.constant 1.000000e+00 : f32
    %56 = vector.broadcast %cst_34 : f32 to vector<8x128xf32>
    %57 = arith.addf %56, %55 : vector<8x128xf32>
    %cst_35 = arith.constant 1.000000e+00 : f32
    %58 = vector.broadcast %cst_35 : f32 to vector<8x128xf32>
    %59 = arith.divf %58, %57 : vector<8x128xf32>
    %cst_36 = arith.constant 1.06140542 : f32
    %60 = vector.broadcast %cst_36 : f32 to vector<8x128xf32>
    %61 = arith.mulf %60, %59 : vector<8x128xf32>
    %cst_37 = arith.constant -1.45315206 : f32
    %62 = vector.broadcast %cst_37 : f32 to vector<8x128xf32>
    %63 = arith.addf %61, %62 : vector<8x128xf32>
    %64 = arith.mulf %63, %59 : vector<8x128xf32>
    %cst_38 = arith.constant 1.42141378 : f32
    %65 = vector.broadcast %cst_38 : f32 to vector<8x128xf32>
    %66 = arith.addf %64, %65 : vector<8x128xf32>
    %67 = arith.mulf %66, %59 : vector<8x128xf32>
    %cst_39 = arith.constant -0.284496725 : f32
    %68 = vector.broadcast %cst_39 : f32 to vector<8x128xf32>
    %69 = arith.addf %67, %68 : vector<8x128xf32>
    %70 = arith.mulf %69, %59 : vector<8x128xf32>
    %cst_40 = arith.constant 0.254829586 : f32
    %71 = vector.broadcast %cst_40 : f32 to vector<8x128xf32>
    %72 = arith.addf %70, %71 : vector<8x128xf32>
    %73 = arith.mulf %72, %59 : vector<8x128xf32>
    %cst_41 = arith.constant 0.000000e+00 : f32
    %74 = vector.broadcast %cst_41 : f32 to vector<8x128xf32>
    %75 = arith.subf %74, %53 : vector<8x128xf32>
    %76 = arith.mulf %75, %53 : vector<8x128xf32>
    %77 = math.exp %76 : vector<8x128xf32>
    %78 = arith.mulf %73, %77 : vector<8x128xf32>
    %cst_42 = arith.constant 1.000000e+00 : f32
    %79 = vector.broadcast %cst_42 : f32 to vector<8x128xf32>
    %80 = arith.subf %79, %78 : vector<8x128xf32>
    %81 = arith.mulf %52, %80 : vector<8x128xf32>
    %cst_43 = arith.constant 1.000000e+00 : f32
    %82 = vector.broadcast %cst_43 : f32 to vector<8x128xf32>
    %83 = arith.addf %82, %81 : vector<8x128xf32>
    %84 = arith.mulf %45, %83 : vector<8x128xf32>
    %85 = arith.truncf %84 : vector<8x128xf32> to vector<8x128xbf16>
    %c0_44 = arith.constant 0 : index
    %c0_45 = arith.constant 0 : index
    %86 = vector.load %arg12[%c0_44, %c0_45] : memref<128x32xbf16, #tpu.memory_space<vmem>>, vector<128x32xbf16>
    %cst_46 = arith.constant dense<0.000000e+00> : vector<8x32xf32>
    %87 = tpu.matmul %85, %86, %cst_46 {dimension_numbers = #tpu.dot_dimension_numbers<[1], [0], [0], [1], [0, 0, 1, 1], [], []>} : vector<8x128xbf16>, vector<128x32xbf16>, vector<8x32xf32> -> vector<8x32xf32>
    %c0_47 = arith.constant 0 : index
    %c0_48 = arith.constant 0 : index
    %88 = vector.load %arg13[%c0_47, %c0_48] : memref<1x32xf32, #tpu.memory_space<vmem>>, vector<1x32xf32>
    %89 = vector.broadcast %88 : vector<1x32xf32> to vector<8x32xf32>
    %90 = arith.addf %87, %89 : vector<8x32xf32>
    %91 = arith.addf %15, %90 : vector<8x32xf32>
    %c0_49 = arith.constant 0 : index
    %c0_50 = arith.constant 0 : index
    %c0_51 = arith.constant 0 : index
    %92 = vector.load %arg14[%c0_49, %c0_50, %c0_51] : memref<1x8x32xf32, #tpu.memory_space<vmem>>, vector<1x8x32xf32>
    %93 = vector.shape_cast %92 : vector<1x8x32xf32> to vector<8x32xf32>
    %94 = vector.shape_cast %91 : vector<8x32xf32> to vector<1x8x32xf32>
    tpu.vector_store %arg14[%c0_49, %c0_50, %c0_51], %94 {strides = array<i32>} : memref<1x8x32xf32, #tpu.memory_space<vmem>>, vector<1x8x32xf32>,
    return
  }
  func.func @transform_0(%arg0: i32, %arg1: i32) -> (i32, i32, i32) {
    %c0_i32 = arith.constant 0 : i32
    %c0_i32_0 = arith.constant 0 : i32
    return %arg0, %arg1, %c0_i32 : i32, i32, i32
  }
  func.func @transform_1(%arg0: i32, %arg1: i32) -> (i32, i32, i32) {
    %c0_i32 = arith.constant 0 : i32
    %c0_i32_0 = arith.constant 0 : i32
    %c0_i32_1 = arith.constant 0 : i32
    return %arg0, %c0_i32, %c0_i32_0 : i32, i32, i32
  }
  func.func @transform_2(%arg0: i32, %arg1: i32) -> (i32, i32) {
    %c0_i32 = arith.constant 0 : i32
    %c0_i32_0 = arith.constant 0 : i32
    %c0_i32_1 = arith.constant 0 : i32
    return %c0_i32, %c0_i32_0 : i32, i32
  }
  func.func @transform_3(%arg0: i32, %arg1: i32) -> (i32, i32) {
    %c0_i32 = arith.constant 0 : i32
    %c0_i32_0 = arith.constant 0 : i32
    %c0_i32_1 = arith.constant 0 : i32
    return %c0_i32, %c0_i32_0 : i32, i32
  }
  func.func @transform_4(%arg0: i32, %arg1: i32) -> (i32, i32) {
    %c0_i32 = arith.constant 0 : i32
    %c0_i32_0 = arith.constant 0 : i32
    %c0_i32_1 = arith.constant 0 : i32
    return %c0_i32, %c0_i32_0 : i32, i32
  }
  func.func @transform_5(%arg0: i32, %arg1: i32) -> (i32, i32) {
    %c0_i32 = arith.constant 0 : i32
    %c0_i32_0 = arith.constant 0 : i32
    %c0_i32_1 = arith.constant 0 : i32
    return %c0_i32, %c0_i32_0 : i32, i32
  }
  func.func @transform_6(%arg0: i32, %arg1: i32) -> (i32, i32) {
    %c0_i32 = arith.constant 0 : i32
    %c0_i32_0 = arith.constant 0 : i32
    %c0_i32_1 = arith.constant 0 : i32
    return %c0_i32, %c0_i32_0 : i32, i32
  }
  func.func @transform_7(%arg0: i32, %arg1: i32) -> (i32, i32) {
    %c0_i32 = arith.constant 0 : i32
    %c0_i32_0 = arith.constant 0 : i32
    %c0_i32_1 = arith.constant 0 : i32
    return %c0_i32, %c0_i32_0 : i32, i32
  }
  func.func @transform_8(%arg0: i32, %arg1: i32) -> (i32, i32) {
    %c0_i32 = arith.constant 0 : i32
    %c0_i32_0 = arith.constant 0 : i32
    %c0_i32_1 = arith.constant 0 : i32
    return %c0_i32, %c0_i32_0 : i32, i32
  }
  func.func @transform_9(%arg0: i32, %arg1: i32) -> (i32, i32) {
    %c0_i32 = arith.constant 0 : i32
    %c0_i32_0 = arith.constant 0 : i32
    %c0_i32_1 = arith.constant 0 : i32
    return %c0_i32, %c0_i32_0 : i32, i32
  }
  func.func @transform_10(%arg0: i32, %arg1: i32) -> (i32, i32) {
    %c0_i32 = arith.constant 0 : i32
    %c0_i32_0 = arith.constant 0 : i32
    %c0_i32_1 = arith.constant 0 : i32
    return %c0_i32, %c0_i32_0 : i32, i32
  }
  func.func @transform_11(%arg0: i32, %arg1: i32) -> (i32, i32) {
    %c0_i32 = arith.constant 0 : i32
    %c0_i32_0 = arith.constant 0 : i32
    %c0_i32_1 = arith.constant 0 : i32
    return %c0_i32, %c0_i32_0 : i32, i32
  }
  func.func @transform_12(%arg0: i32, %arg1: i32) -> (i32, i32, i32) {
    %c0_i32 = arith.constant 0 : i32
    %c0_i32_0 = arith.constant 0 : i32
    return %arg0, %arg1, %c0_i32 : i32, i32, i32
  }
}

</mosaic_0001>

<llo_original>
// kernel: transformer_formula_encoder.7
$region0: #{transformer_formula_encoder.7}
  #allocation0 [shape = 'u32[]', space=smem, size = 0x4, offset = 0x4, fixed_abs, tag = 'smem constant byte address 0x4 - core index']
  #allocation1 [shape = 'u32[144,128]{1,0:T(1,128)}', space=vmem, size = 0x12000, scoped, tag = 'internal scratch']
  %s0 = inlined_call_operand.vmem [shape: f32[2,8,32], index: 0, kind: input, shape index: {}]
  %s1 = inlined_call_operand.vmem [shape: f32[1,32], index: 1, kind: input, shape index: {}]
  %s2 = inlined_call_operand.vmem [shape: f32[1,32], index: 2, kind: input, shape index: {}]
  %s3 = inlined_call_operand.vmem [shape: bf16[32,128], index: 3, kind: input, shape index: {}]
  %s4 = inlined_call_operand.vmem [shape: f32[1,128], index: 4, kind: input, shape index: {}]
  %s5 = inlined_call_operand.vmem [shape: bf16[128,32], index: 5, kind: input, shape index: {}]
  %s6 = inlined_call_operand.vmem [shape: f32[1,32], index: 6, kind: input, shape index: {}]
  %s7 = inlined_call_operand.vmem [shape: f32[2,8,32], index: 7, kind: output, shape index: {}]
  %s8 = sld [smem:[#allocation0]]
  $region61: #{transformer_formula_encoder.7} parent=0
    _
  %s10 = ssub.s32 1, %s8
  %s11 = scalar_select 0, %s10, %s8
  loop: start=0, step=1, limit=4
  $region2: #{transformer_formula_encoder.7} parent=0 // loop_pre_header
    _
  $region3: #{transformer_formula_encoder.7} parent=0 // loop_header
    %s13 = sphi 0, %s17
    %p14 = scmp.ge.s32.totalorder %s13, 4
    %s20 = sphi 0, %s32
    %s21 = sphi 0, %s28
    %s22 = sphi 0, %s20
    %s23 = sphi 0, %s21
    %s24 = sphi 0, %s22
    %s25 = sphi 0, %s23
    %s37 = sphi 0, %s39
    %s40 = sphi 0, %s37
    %s41 = sphi 0, %s40
    %s57 = sphi 0, %s41
    %s61 = sphi 0, %s61
    %s63 = sphi 0, %s61
    %s64 = sphi 0, %s63
    %s78 = sphi 0, %s64
    %s82 = sphi 0, %s82
    %s84 = sphi 0, %s82
    %s85 = sphi 0, %s84
    %s99 = sphi 0, %s85
    %s103 = sphi 0, %s103
    %s105 = sphi 0, %s103
    %s106 = sphi 0, %s105
    %s120 = sphi 0, %s106
    %s124 = sphi 0, %s124
    %s126 = sphi 0, %s124
    %s127 = sphi 0, %s126
    %s141 = sphi 0, %s127
    %s145 = sphi 0, %s145
    %s147 = sphi 0, %s145
    %s148 = sphi 0, %s147
    %s162 = sphi 0, %s148
    %s166 = sphi 0, %s166
    %s168 = sphi 0, %s166
    %s169 = sphi 0, %s168
    %s183 = sphi 0, %s169
    %s191 = sphi 0, %s193
    %s194 = sphi 0, %s191
    %s195 = sphi 0, %s194
    %s211 = sphi 0, %s195
  $region4: #{transformer_formula_encoder.7} parent=0 // loop_header_branch
    %16 = sbr.rel (%p14) target = $region8
  $region5: #{transformer_formula_encoder.7} parent=0 // loop_body
    %s18 = ssub.s32 %s13, 1
    %s19 = ssub.s32 %s13, 2
    %s26 = sadd.s32 1, %s21
    %p27 = scmp.ge.s32.totalorder %s26, 1
    %s28 = scalar_select %p27, 0, %s26
    %s29 = sadd.s32 1, %s20
    %s30 = scalar_select %p27, %s29, %s20
    %p31 = scmp.ge.s32.totalorder %s30, 2
    %s32 = scalar_select %p31, 0, %s30
    %s33 = ssub.s32 %s20, %s32
    %s34 = ssub.s32 %s21, %s28
    %s35 = sor.u32 %s33, %s34
    %p36 = scmp.eq.s32.totalorder %s35, 0
    %s38 = sadd.s32 %s37, 1
    %s39 = scalar_select %p36, %s37, %s38
    %p42 = pneg %p36
    %p43 = scmp.eq.s32.totalorder %s13, 1
    %p44 = por %p42, %p43
    %p45 = scmp.ne.s32.totalorder %s37, %s40
    %p46 = scmp.eq.s32.totalorder %s13, 0
    %p47 = por %p45, %p46
    %p48 = scmp.ne.s32.totalorder %s37, %s40
    %p49 = scmp.eq.s32.totalorder %s18, 1
    %p50 = por %p48, %p49
    %p51 = scmp.ne.s32.totalorder %s40, %s41
    %p52 = scmp.eq.s32.totalorder %s18, 0
    %p53 = por %p51, %p52
    %p54 = scmp.ne.s32.totalorder %s40, %s41
    %p55 = scmp.eq.s32.totalorder %s19, 1
    %p56 = por %p54, %p55
    %p58 = scmp.ne.s32.totalorder %s41, %s57
    %p59 = scmp.eq.s32.totalorder %s19, 0
    %p60 = por %p58, %p59
    %s62 = sadd.s32 %s61, 1
    %p65 = scmp.eq.s32.totalorder %s13, 1
    %p66 = scmp.ne.s32.totalorder %s61, %s63
    %p67 = scmp.eq.s32.totalorder %s13, 0
    %p68 = por %p66, %p67
    %p69 = scmp.ne.s32.totalorder %s61, %s63
    %p70 = scmp.eq.s32.totalorder %s18, 1
    %p71 = por %p69, %p70
    %p72 = scmp.ne.s32.totalorder %s63, %s64
    %p73 = scmp.eq.s32.totalorder %s18, 0
    %p74 = por %p72, %p73
    %p75 = scmp.ne.s32.totalorder %s63, %s64
    %p76 = scmp.eq.s32.totalorder %s19, 1
    %p77 = por %p75, %p76
    %p79 = scmp.ne.s32.totalorder %s64, %s78
    %p80 = scmp.eq.s32.totalorder %s19, 0
    %p81 = por %p79, %p80
    %s83 = sadd.s32 %s82, 1
    %p86 = scmp.eq.s32.totalorder %s13, 1
    %p87 = scmp.ne.s32.totalorder %s82, %s84
    %p88 = scmp.eq.s32.totalorder %s13, 0
    %p89 = por %p87, %p88
    %p90 = scmp.ne.s32.totalorder %s82, %s84
    %p91 = scmp.eq.s32.totalorder %s18, 1
    %p92 = por %p90, %p91
    %p93 = scmp.ne.s32.totalorder %s84, %s85
    %p94 = scmp.eq.s32.totalorder %s18, 0
    %p95 = por %p93, %p94
    %p96 = scmp.ne.s32.totalorder %s84, %s85
    %p97 = scmp.eq.s32.totalorder %s19, 1
    %p98 = por %p96, %p97
    %p100 = scmp.ne.s32.totalorder %s85, %s99
    %p101 = scmp.eq.s32.totalorder %s19, 0
    %p102 = por %p100, %p101
    %s104 = sadd.s32 %s103, 1
    %p107 = scmp.eq.s32.totalorder %s13, 1
    %p108 = scmp.ne.s32.totalorder %s103, %s105
    %p109 = scmp.eq.s32.totalorder %s13, 0
    %p110 = por %p108, %p109
    %p111 = scmp.ne.s32.totalorder %s103, %s105
    %p112 = scmp.eq.s32.totalorder %s18, 1
    %p113 = por %p111, %p112
    %p114 = scmp.ne.s32.totalorder %s105, %s106
    %p115 = scmp.eq.s32.totalorder %s18, 0
    %p116 = por %p114, %p115
    %p117 = scmp.ne.s32.totalorder %s105, %s106
    %p118 = scmp.eq.s32.totalorder %s19, 1
    %p119 = por %p117, %p118
    %p121 = scmp.ne.s32.totalorder %s106, %s120
    %p122 = scmp.eq.s32.totalorder %s19, 0
    %p123 = por %p121, %p122
    %s125 = sadd.s32 %s124, 1
    %p128 = scmp.eq.s32.totalorder %s13, 1
    %p129 = scmp.ne.s32.totalorder %s124, %s126
    %p130 = scmp.eq.s32.totalorder %s13, 0
    %p131 = por %p129, %p130
    %p132 = scmp.ne.s32.totalorder %s124, %s126
    %p133 = scmp.eq.s32.totalorder %s18, 1
    %p134 = por %p132, %p133
    %p135 = scmp.ne.s32.totalorder %s126, %s127
    %p136 = scmp.eq.s32.totalorder %s18, 0
    %p137 = por %p135, %p136
    %p138 = scmp.ne.s32.totalorder %s126, %s127
    %p139 = scmp.eq.s32.totalorder %s19, 1
    %p140 = por %p138, %p139
    %p142 = scmp.ne.s32.totalorder %s127, %s141
    %p143 = scmp.eq.s32.totalorder %s19, 0
    %p144 = por %p142, %p143
    %s146 = sadd.s32 %s145, 1
    %p149 = scmp.eq.s32.totalorder %s13, 1
    %p150 = scmp.ne.s32.totalorder %s145, %s147
    %p151 = scmp.eq.s32.totalorder %s13, 0
    %p152 = por %p150, %p151
    %p153 = scmp.ne.s32.totalorder %s145, %s147
    %p154 = scmp.eq.s32.totalorder %s18, 1
    %p155 = por %p153, %p154
    %p156 = scmp.ne.s32.totalorder %s147, %s148
    %p157 = scmp.eq.s32.totalorder %s18, 0
    %p158 = por %p156, %p157
    %p159 = scmp.ne.s32.totalorder %s147, %s148
    %p160 = scmp.eq.s32.totalorder %s19, 1
    %p161 = por %p159, %p160
    %p163 = scmp.ne.s32.totalorder %s148, %s162
    %p164 = scmp.eq.s32.totalorder %s19, 0
    %p165 = por %p163, %p164
    %s167 = sadd.s32 %s166, 1
    %p170 = scmp.eq.s32.totalorder %s13, 1
    %p171 = scmp.ne.s32.totalorder %s166, %s168
    %p172 = scmp.eq.s32.totalorder %s13, 0
    %p173 = por %p171, %p172
    %p174 = scmp.ne.s32.totalorder %s166, %s168
    %p175 = scmp.eq.s32.totalorder %s18, 1
    %p176 = por %p174, %p175
    %p177 = scmp.ne.s32.totalorder %s168, %s169
    %p178 = scmp.eq.s32.totalorder %s18, 0
    %p179 = por %p177, %p178
    %p180 = scmp.ne.s32.totalorder %s168, %s169
    %p181 = scmp.eq.s32.totalorder %s19, 1
    %p182 = por %p180, %p181
    %p184 = scmp.ne.s32.totalorder %s169, %s183
    %p185 = scmp.eq.s32.totalorder %s19, 0
    %p186 = por %p184, %p185
    %s187 = ssub.s32 %s20, %s32
    %s188 = ssub.s32 %s21, %s28
    %s189 = sor.u32 %s187, %s188
    %p190 = scmp.eq.s32.totalorder %s189, 0
    %s192 = sadd.s32 %s191, 1
    %s193 = scalar_select %p190, %s191, %s192
    %p196 = pneg %p190
    %p197 = scmp.eq.s32.totalorder %s13, 1
    %p198 = por %p196, %p197
    %p199 = scmp.ne.s32.totalorder %s191, %s194
    %p200 = scmp.eq.s32.totalorder %s13, 0
    %p201 = por %p199, %p200
    %p202 = scmp.ne.s32.totalorder %s191, %s194
    %p203 = scmp.eq.s32.totalorder %s18, 1
    %p204 = por %p202, %p203
    %p205 = scmp.ne.s32.totalorder %s194, %s195
    %p206 = scmp.eq.s32.totalorder %s18, 0
    %p207 = por %p205, %p206
    %p208 = scmp.ne.s32.totalorder %s194, %s195
    %p209 = scmp.eq.s32.totalorder %s19, 1
    %p210 = por %p208, %p209
    %p212 = scmp.ne.s32.totalorder %s195, %s211
    %p213 = scmp.eq.s32.totalorder %s19, 0
    %p214 = por %p212, %p213
    %p215 = scmp.le.s32.totalorder 1, %s13
    %p216 = scmp.lt.s32.totalorder %s13, 3
    %p217 = pnand %p215, %p216
    %p218 = pneg %p217
    // Predicated region
    $region9: #{transformer_formula_encoder.7} parent=5 // pred_check
      _
    $region10: #{transformer_formula_encoder.7} parent=5 // pred_check_branch
      %220 = sbr.rel (%p217) target = $region12
    $region11: #{transformer_formula_encoder.7} parent=5 // pred_region
      %s221 = ssub.s32 %s13, 1
      // Predicated region
      $region13: #{transformer_formula_encoder.7} parent=11 // pred_check
        %p222 = pneg %p74
      $region14: #{transformer_formula_encoder.7} parent=11 // pred_check_branch
        %224 = sbr.rel (%p222) target = $region16
      $region15: #{transformer_formula_encoder.7} parent=11 // pred_region
        _
      $region16: #{transformer_formula_encoder.7} parent=11 // pred_fallthru
        _
      // Predicated region
      $region17: #{transformer_formula_encoder.7} parent=11 // pred_check
        %p225 = pneg %p95
      $region18: #{transformer_formula_encoder.7} parent=11 // pred_check_branch
        %227 = sbr.rel (%p225) target = $region20
      $region19: #{transformer_formula_encoder.7} parent=11 // pred_region
        _
      $region20: #{transformer_formula_encoder.7} parent=11 // pred_fallthru
        _
      // Predicated region
      $region21: #{transformer_formula_encoder.7} parent=11 // pred_check
        %p228 = pneg %p116
      $region22: #{transformer_formula_encoder.7} parent=11 // pred_check_branch
        %230 = sbr.rel (%p228) target = $region24
      $region23: #{transformer_formula_encoder.7} parent=11 // pred_region
        _
      $region24: #{transformer_formula_encoder.7} parent=11 // pred_fallthru
        _
      // Predicated region
      $region25: #{transformer_formula_encoder.7} parent=11 // pred_check
        %p231 = pneg %p137
      $region26: #{transformer_formula_encoder.7} parent=11 // pred_check_branch
        %233 = sbr.rel (%p231) target = $region28
      $region27: #{transformer_formula_encoder.7} parent=11 // pred_region
        _
      $region28: #{transformer_formula_encoder.7} parent=11 // pred_fallthru
        _
      // Predicated region
      $region29: #{transformer_formula_encoder.7} parent=11 // pred_check
        %p234 = pneg %p158
      $region30: #{transformer_formula_encoder.7} parent=11 // pred_check_branch
        %236 = sbr.rel (%p234) target = $region32
      $region31: #{transformer_formula_encoder.7} parent=11 // pred_region
        _
      $region32: #{transformer_formula_encoder.7} parent=11 // pred_fallthru
        _
      // Predicated region
      $region33: #{transformer_formula_encoder.7} parent=11 // pred_check
        %p237 = pneg %p179
      $region34: #{transformer_formula_encoder.7} parent=11 // pred_check_branch
        %239 = sbr.rel (%p237) target = $region36
      $region35: #{transformer_formula_encoder.7} parent=11 // pred_region
        _
      $region36: #{transformer_formula_encoder.7} parent=11 // pred_fallthru
        _
    $region12: #{transformer_formula_encoder.7} parent=5 // pred_fallthru
      _
    %p240 = scmp.lt.s32.totalorder %s13, 2
    // Predicated region
    $region37: #{transformer_formula_encoder.7} parent=5 // pred_check
      %p241 = pneg %p240
    $region38: #{transformer_formula_encoder.7} parent=5 // pred_check_branch
      %243 = sbr.rel (%p241) target = $region40
    $region39: #{transformer_formula_encoder.7} parent=5 // pred_region
      // Predicated region
      $region41: #{transformer_formula_encoder.7} parent=39 // pred_check
        %p244 = pneg %p47
      $region42: #{transformer_formula_encoder.7} parent=39 // pred_check_branch
        %246 = sbr.rel (%p244) target = $region44
      $region43: #{transformer_formula_encoder.7} parent=39 // pred_region
        %p247 = scmp.lt.s32.totalorder %s20, 1
        %s248 = scalar_select %p247, %s20, 1
        %p249 = scmp.lt.s32.totalorder %s21, 0
        %s250 = scalar_select %p249, %s21, 0
        %s251 = sadd.s32 %s250, %s248
        %s252 = smul.addr %s251, 8
        %s253 = scalar_lea.vmem %s0, %s252
      $region44: #{transformer_formula_encoder.7} parent=39 // pred_fallthru
        _
    $region40: #{transformer_formula_encoder.7} parent=5 // pred_fallthru
      _
    %p254 = scmp.le.s32.totalorder 1, %s13
    %p255 = scmp.lt.s32.totalorder %s13, 3
    %p256 = pnand %p254, %p255
    %p257 = pneg %p256
    // Predicated region
    $region45: #{transformer_formula_encoder.7} parent=5 // pred_check
      _
    $region46: #{transformer_formula_encoder.7} parent=5 // pred_check_branch
      %259 = sbr.rel (%p256) target = $region48
    $region47: #{transformer_formula_encoder.7} parent=5 // pred_region
      %s260 = ssub.s32 %s13, 1
      %p261 = scmp.lt.s32.totalorder %s22, 1
      %s262 = scalar_select %p261, %s22, 1
      %p263 = scmp.lt.s32.totalorder %s23, 0
      %s264 = scalar_select %p263, %s23, 0
      %s265 = sadd.s32 %s264, %s262
      %s266 = smul.addr %s265, 8
      %s267 = scalar_lea.vmem %s0, %s266
      %p268 = pneg %p53
      %p269 = pneg %p50
      %p270 = pneg %p74
      %p271 = pneg %p71
      %p272 = pneg %p95
      %p273 = pneg %p92
      %p274 = pneg %p116
      %p275 = pneg %p113
      %p276 = pneg %p137
      %p277 = pneg %p134
      %p278 = pneg %p158
      %p279 = pneg %p155
      %p280 = pneg %p179
      %p281 = pneg %p176
      %p282 = pneg %p207
      %p283 = pneg %p204
      %p284 = scmp.lt.s32.totalorder %s22, 1
      %s285 = scalar_select %p284, %s22, 1
      %p286 = scmp.lt.s32.totalorder %s23, 0
      %s287 = scalar_select %p286, %s23, 0
      %s288 = sadd.s32 %s287, %s285
      %s289 = smul.addr %s288, 8
      %s290 = scalar_lea.vmem %s7, %s289
      %p291 = scmp.lt.s32.totalorder %s22, 1
      %s292 = scalar_select %p291, %s22, 1
      %p293 = scmp.lt.s32.totalorder %s23, 0
      %s294 = scalar_select %p293, %s23, 0
      %s295 = sadd.s32 %s294, %s292
      %s296 = smul.addr %s295, 8
      %s297 = scalar_lea.vmem %s0, %s296
      %p298 = scmp.lt.s32.totalorder %s22, 1
      %s299 = scalar_select %p298, %s22, 1
      %p300 = scmp.lt.s32.totalorder %s23, 0
      %s301 = scalar_select %p300, %s23, 0
      %s302 = sadd.s32 %s301, %s299
      %s303 = smul.addr %s302, 8
      %s304 = scalar_lea.vmem %s7, %s303
      %v306 = vld [vmem:[%s297] sm:$0xff]
      %v307 = vld [vmem:[%s1] sm:$0x1]
      %v308 = vld [vmem:[%s2] sm:$0x1]
      %vm309 = vcmask 261120
      %v310 = vsel %vm309, %v306, 0.0
      %311 = vadd.xlane.f32.xlu0 %v310
      %v312 = vpop.xlane.xlu0 %311
      %v313 = vrcp.pop 32.0
      %v314 = vmul.f32 %v312, %v313
      %v315 = vsub.f32 %v306, %v314
      %v316 = vmul.f32 %v315, %v315
      %v317 = vsel %vm309, %v316, 0.0
      %318 = vadd.xlane.f32.xlu0 %v317
      %v319 = vpop.xlane.xlu0 %318
      %v320 = vmul.f32 %v319, %v313
      %v321 = vadd.f32 %v320, 1e-05
      %v322 = vrsqrt.pop %v321
      %v323 = vmul.f32 %v315, %v322
      %v325 = vlaneseq
      %v326 = vshrl.u32 %v325, 7
      %v327 = vsub.s32 0, %v326
      %v328 = vrot.slane %v307, %v327
      %v330 = vmul.f32 %v323, %v328
      %v332 = vlaneseq
      %v333 = vshrl.u32 %v332, 7
      %v334 = vsub.s32 0, %v333
      %v335 = vrot.slane %v308, %v334
      %v337 = vadd.f32 %v330, %v335
      %v338 = vpack.c.bf16 %v337, %v337
      %v339 = vld [vmem:[%s3] sm:$0xf]
      %v340 = vld [vmem:[%s3 + $0x4] sm:$0xf]
      %v341 = vld [vmem:[%s3 + $0x8] sm:$0xf]
      %v342 = vld [vmem:[%s3 + $0xc] sm:$0xf]
      %v343 = vld [vmem:[%s4] sm:$0x1]
      %v345 = vlaneseq
      %v346 = vshrl.u32 %v345, 7
      %v347 = vsub.s32 0, %v346
      %v348 = vrot.slane %v343, %v347
      %v354 = vunpack.c.l.b16 %v339
      %v355 = vunpack.c.l.b16 %v340
      %v356 = vunpack.c.l.b16 %v341
      %v357 = vunpack.c.l.b16 %v342
      %v358 = vpack.c.b16 %v355, %v354
      %v359 = vpack.c.b16 %v357, %v356
      %v363 = vsel %vm309, %v338, 0
      %365 = vmatprep.subr.bf16.mxu0 0
      %366 = vmatpush1.bf16.msra.mxu0 %v358
      %367 = vmatprep.subr.bf16.mxu0 0
      %368 = vmatpush1.bf16.msra.mxu0 %v359
      %369 = vmatprep.subr.bf16.mxu0 0
      %370 = vmatpush1.bf16.msra.mxu0 0
      %371 = vmatprep.subr.bf16.mxu0 0
      %372 = vmatpush1.bf16.msra.mxu0 0
      %373 = vmatprep.subr.bf16.mxu0 0
      %374 = vmatpush1.bf16.msra.mxu0 0
      %375 = vmatprep.subr.bf16.mxu0 0
      %376 = vmatpush1.bf16.msra.mxu0 0
      %377 = vmatprep.subr.bf16.mxu0 0
      %378 = vmatpush1.bf16.msra.mxu0 0
      %379 = vmatprep.subr.bf16.mxu0 0
      %380 = vmatpush1.bf16.msra.mxu0 0
      %381 = vmatprep.subr.bf16.mxu0 0
      %382 = vmatpush1.bf16.msra.mxu0 0
      %383 = vmatprep.subr.bf16.mxu0 0
      %384 = vmatpush1.bf16.msra.mxu0 0
      %385 = vmatprep.subr.bf16.mxu0 0
      %386 = vmatpush1.bf16.msra.mxu0 0
      %387 = vmatprep.subr.bf16.mxu0 0
      %388 = vmatpush1.bf16.msra.mxu0 0
      %389 = vmatprep.subr.bf16.mxu0 0
      %390 = vmatpush1.bf16.msra.mxu0 0
      %391 = vmatprep.subr.bf16.mxu0 0
      %392 = vmatpush1.bf16.msra.mxu0 0
      %393 = vmatprep.subr.bf16.mxu0 0
      %394 = vmatpush1.bf16.msra.mxu0 0
      %395 = vmatprep.subr.bf16.mxu0 0
      %396 = vmatpush1.bf16.msra.mxu0 0
      %397 = vmatprep.mubr.bf16.mxu0 0
      %398 = vmatmul.mubr.bf16.gmra.mrb[0].mxu0 %v363
      %v399 = vpop.f32.mrb[0].mxu0
      %v400 = vadd.f32 %v348, %v399
      %v401 = vpop.f32.mrb[0].mxu0
      %v402 = vpop.f32.mrb[0].mxu0
      %v403 = vpop.f32.mrb[0].mxu0
      %404 = vdwg.mxu0
      %v405 = vmul.f32 %v400, 0.5
      %v406 = vmul.f32 %v400, 0.70710677
      %vm407 = vcmp.ge.f32.partialorder %v406, 0.0
      %v408 = vsel %vm407, 1.0, -1.0
      %v409 = vand.u32 2147483647, %v406
      %v410 = vmul.f32 %v409, 0.3275911
      %v411 = vadd.f32 %v410, 1.0
      %v412 = vrcp.pop %v411
      %v413 = vmul.f32 1.0, %v412
      %v414 = vmul.f32 %v413, 1.0614054
      %v415 = vadd.f32 %v414, -1.4531521
      %v416 = vmul.f32 %v415, %v413
      %v417 = vadd.f32 %v416, 1.4214138
      %v418 = vmul.f32 %v417, %v413
      %v419 = vadd.f32 %v418, -0.28449672
      %v420 = vmul.f32 %v419, %v413
      %v421 = vadd.f32 %v420, 0.2548296
      %v422 = vmul.f32 %v421, %v413
      %v423 = vsub.f32 0.0, %v409
      %v424 = vmul.f32 %v423, %v409
      %v425 = vmul.f32 %v424, 1.442695
      %v426 = vpow.pop %v425
      %v427 = vmul.f32 %v422, %v426
      %v428 = vsub.f32 1.0, %v427
      %v429 = vmul.f32 %v408, %v428
      %v430 = vadd.f32 %v429, 1.0
      %v431 = vmul.f32 %v405, %v430
      %v432 = vpack.c.bf16 %v431, %v431
      %v433 = vld [vmem:[%s5] sm:$0xf]
      %v434 = vld [vmem:[%s5 + $0x4] sm:$0xf]
      %v435 = vld [vmem:[%s5 + $0x8] sm:$0xf]
      %v436 = vld [vmem:[%s5 + $0xc] sm:$0xf]
      %v437 = vld [vmem:[%s5 + $0x10] sm:$0xf]
      %v438 = vld [vmem:[%s5 + $0x14] sm:$0xf]
      %v439 = vld [vmem:[%s5 + $0x18] sm:$0xf]
      %v440 = vld [vmem:[%s5 + $0x1c] sm:$0xf]
      %v441 = vld [vmem:[%s5 + $0x20] sm:$0xf]
      %v442 = vld [vmem:[%s5 + $0x24] sm:$0xf]
      %v443 = vld [vmem:[%s5 + $0x28] sm:$0xf]
      %v444 = vld [vmem:[%s5 + $0x2c] sm:$0xf]
      %v445 = vld [vmem:[%s5 + $0x30] sm:$0xf]
      %v446 = vld [vmem:[%s5 + $0x34] sm:$0xf]
      %v447 = vld [vmem:[%s5 + $0x38] sm:$0xf]
      %v448 = vld [vmem:[%s5 + $0x3c] sm:$0xf]
      %v449 = vld [vmem:[%s6] sm:$0x1]
      %v451 = vlaneseq
      %v452 = vshrl.u32 %v451, 7
      %v453 = vsub.s32 0, %v452
      %v454 = vrot.slane %v449, %v453
      %v472 = vunpack.c.l.b16 %v433
      %v473 = vunpack.c.l.b16 %v434
      %v474 = vunpack.c.l.b16 %v435
      %v475 = vunpack.c.l.b16 %v436
      %v476 = vunpack.c.l.b16 %v437
      %v477 = vunpack.c.l.b16 %v438
      %v478 = vunpack.c.l.b16 %v439
      %v479 = vunpack.c.l.b16 %v440
      %v480 = vunpack.c.l.b16 %v441
      %v481 = vunpack.c.l.b16 %v442
      %v482 = vunpack.c.l.b16 %v443
      %v483 = vunpack.c.l.b16 %v444
      %v484 = vunpack.c.l.b16 %v445
      %v485 = vunpack.c.l.b16 %v446
      %v486 = vunpack.c.l.b16 %v447
      %v487 = vunpack.c.l.b16 %v448
      %v488 = vpack.c.b16 %v473, %v472
      %v489 = vpack.c.b16 %v475, %v474
      %v490 = vpack.c.b16 %v477, %v476
      %v491 = vpack.c.b16 %v479, %v478
      %v492 = vpack.c.b16 %v481, %v480
      %v493 = vpack.c.b16 %v483, %v482
      %v494 = vpack.c.b16 %v485, %v484
      %v495 = vpack.c.b16 %v487, %v486
      %504 = vmatprep.subr.bf16.mxu0 0
      %505 = vmatpush1.bf16.msra.mxu0 %v488
      %506 = vmatprep.subr.bf16.mxu0 0
      %507 = vmatpush1.bf16.msra.mxu0 %v489
      %508 = vmatprep.subr.bf16.mxu0 0
      %509 = vmatpush1.bf16.msra.mxu0 %v490
      %510 = vmatprep.subr.bf16.mxu0 0
      %511 = vmatpush1.bf16.msra.mxu0 %v491
      %512 = vmatprep.subr.bf16.mxu0 0
      %513 = vmatpush1.bf16.msra.mxu0 %v492
      %514 = vmatprep.subr.bf16.mxu0 0
      %515 = vmatpush1.bf16.msra.mxu0 %v493
      %516 = vmatprep.subr.bf16.mxu0 0
      %517 = vmatpush1.bf16.msra.mxu0 %v494
      %518 = vmatprep.subr.bf16.mxu0 0
      %519 = vmatpush1.bf16.msra.mxu0 %v495
      %520 = vmatprep.subr.bf16.mxu0 0
      %521 = vmatpush1.bf16.msra.mxu0 0
      %522 = vmatprep.subr.bf16.mxu0 0
      %523 = vmatpush1.bf16.msra.mxu0 0
      %524 = vmatprep.subr.bf16.mxu0 0
      %525 = vmatpush1.bf16.msra.mxu0 0
      %526 = vmatprep.subr.bf16.mxu0 0
      %527 = vmatpush1.bf16.msra.mxu0 0
      %528 = vmatprep.subr.bf16.mxu0 0
      %529 = vmatpush1.bf16.msra.mxu0 0
      %530 = vmatprep.subr.bf16.mxu0 0
      %531 = vmatpush1.bf16.msra.mxu0 0
      %532 = vmatprep.subr.bf16.mxu0 0
      %533 = vmatpush1.bf16.msra.mxu0 0
      %534 = vmatprep.subr.bf16.mxu0 0
      %535 = vmatpush1.bf16.msra.mxu0 0
      %536 = vmatprep.mubr.bf16.mxu0 0
      %537 = vmatmul.mubr.bf16.gmra.mrb[0].mxu0 %v432
      %v538 = vpop.f32.mrb[0].mxu0
      %v539 = vadd.f32 %v454, %v538
      %v540 = vpop.f32.mrb[0].mxu0
      %v541 = vpop.f32.mrb[0].mxu0
      %v542 = vpop.f32.mrb[0].mxu0
      %543 = vdwg.mxu0
      %v544 = vadd.f32 %v306, %v539
      %545 = vst.msk [vmem:[%s304] sm:$0xff] %vm309, %v544
      %p546 = scmp.lt.s32.totalorder %s22, 1
      %s547 = scalar_select %p546, %s22, 1
      %p548 = scmp.lt.s32.totalorder %s23, 0
      %s549 = scalar_select %p548, %s23, 0
      %s550 = sadd.s32 %s549, %s547
      %s551 = smul.addr %s550, 8
      %s552 = scalar_lea.vmem %s7, %s551
      // Predicated region
      $region49: #{transformer_formula_encoder.7} parent=47 // pred_check
        %p553 = pneg %p204
      $region50: #{transformer_formula_encoder.7} parent=47 // pred_check_branch
        %555 = sbr.rel (%p553) target = $region52
      $region51: #{transformer_formula_encoder.7} parent=47 // pred_region
        _
      $region52: #{transformer_formula_encoder.7} parent=47 // pred_fallthru
        _
    $region48: #{transformer_formula_encoder.7} parent=5 // pred_fallthru
      _
    %p556 = scmp.le.s32.totalorder 2, %s13
    // Predicated region
    $region53: #{transformer_formula_encoder.7} parent=5 // pred_check
      %p557 = pneg %p556
    $region54: #{transformer_formula_encoder.7} parent=5 // pred_check_branch
      %559 = sbr.rel (%p557) target = $region56
    $region55: #{transformer_formula_encoder.7} parent=5 // pred_region
      %s560 = ssub.s32 %s13, 2
      // Predicated region
      $region57: #{transformer_formula_encoder.7} parent=55 // pred_check
        %p561 = pneg %p210
      $region58: #{transformer_formula_encoder.7} parent=55 // pred_check_branch
        %563 = sbr.rel (%p561) target = $region60
      $region59: #{transformer_formula_encoder.7} parent=55 // pred_region
        %p564 = scmp.lt.s32.totalorder %s24, 1
        %s565 = scalar_select %p564, %s24, 1
        %p566 = scmp.lt.s32.totalorder %s25, 0
        %s567 = scalar_select %p566, %s25, 0
        %s568 = sadd.s32 %s567, %s565
        %s569 = smul.addr %s568, 8
        %s570 = scalar_lea.vmem %s7, %s569
      $region60: #{transformer_formula_encoder.7} parent=55 // pred_fallthru
        _
    $region56: #{transformer_formula_encoder.7} parent=5 // pred_fallthru
      _
  $region6: #{transformer_formula_encoder.7} parent=0 // loop_footer
    %s17 = sadd.s32 1, %s13
  $region7: #{transformer_formula_encoder.7} parent=0 // loop_footer_branch
    %12 = sbr.rel target = $region3
  $region8: #{transformer_formula_encoder.7} parent=0 // loop_exit
    _

// kernel: transformer_formula_encoder.11
$region0: #{transformer_formula_encoder.11}
  #allocation0 [shape = 'u32[]', space=smem, size = 0x4, offset = 0x4, fixed_abs, tag = 'smem constant byte address 0x4 - core index']
  #allocation1 [shape = 'u32[144,128]{1,0:T(1,128)}', space=vmem, size = 0x12000, scoped, tag = 'internal scratch']
  %s0 = inlined_call_operand.vmem [shape: f32[2,8,32], index: 0, kind: input, shape index: {}]
  %s1 = inlined_call_operand.vmem [shape: f32[2,1,32], index: 1, kind: input, shape index: {}]
  %s2 = inlined_call_operand.vmem [shape: bf16[32,32], index: 2, kind: input, shape index: {}]
  %s3 = inlined_call_operand.vmem [shape: f32[1,32], index: 3, kind: input, shape index: {}]
  %s4 = inlined_call_operand.vmem [shape: bf16[32,32], index: 4, kind: input, shape index: {}]
  %s5 = inlined_call_operand.vmem [shape: f32[1,32], index: 5, kind: input, shape index: {}]
  %s6 = inlined_call_operand.vmem [shape: f32[1,32], index: 6, kind: input, shape index: {}]
  %s7 = inlined_call_operand.vmem [shape: f32[1,32], index: 7, kind: input, shape index: {}]
  %s8 = inlined_call_operand.vmem [shape: bf16[32,128], index: 8, kind: input, shape index: {}]
  %s9 = inlined_call_operand.vmem [shape: f32[1,128], index: 9, kind: input, shape index: {}]
  %s10 = inlined_call_operand.vmem [shape: bf16[128,32], index: 10, kind: input, shape index: {}]
  %s11 = inlined_call_operand.vmem [shape: f32[1,32], index: 11, kind: input, shape index: {}]
  %s12 = inlined_call_operand.hbm [shape: f32[2,8,32], index: 12, kind: output, shape index: {}]
  %s13 = sld [smem:[#allocation0]]
  $region81: #{transformer_formula_encoder.11} parent=0
    _
  %s15 = ssub.s32 1, %s13
  %s16 = scalar_select 0, %s15, %s13
  $region1: #{transformer_formula_encoder.11} parent=0
    #allocation2 [shape = 'u8[8192]{0}', space=vmem, size = 0x2000, scoped, tag = 'output window, operand 0']
    #allocation3 [shape = 's32[2]{0}', space=sflag, size = 0x8, scoped, tag = 'scoped memory for transformer_formula_encoder.11']
    %17 = vsyncpa [#allocation3], 0
    %s18 = scalar_lea.sflag [#allocation3], 1
    %19 = vsyncpa %s18, 0
    loop: start=0, step=1, limit=4
    $region2: #{transformer_formula_encoder.11} parent=1 // loop_pre_header
      _
    $region3: #{transformer_formula_encoder.11} parent=1 // loop_header
      %s21 = sphi 0, %s25
      %p22 = scmp.ge.s32.totalorder %s21, 4
      %s28 = sphi 0, %s40
      %s29 = sphi 0, %s36
      %s30 = sphi 0, %s28
      %s31 = sphi 0, %s29
      %s32 = sphi 0, %s30
      %s33 = sphi 0, %s31
      %s45 = sphi 0, %s47
      %s48 = sphi 0, %s45
      %s49 = sphi 0, %s48
      %s65 = sphi 0, %s49
      %s71 = sphi 0, %s73
      %s74 = sphi 0, %s71
      %s75 = sphi 0, %s74
      %s91 = sphi 0, %s75
      %s95 = sphi 0, %s95
      %s97 = sphi 0, %s95
      %s98 = sphi 0, %s97
      %s112 = sphi 0, %s98
      %s116 = sphi 0, %s116
      %s118 = sphi 0, %s116
      %s119 = sphi 0, %s118
      %s133 = sphi 0, %s119
      %s137 = sphi 0, %s137
      %s139 = sphi 0, %s137
      %s140 = sphi 0, %s139
      %s154 = sphi 0, %s140
      %s158 = sphi 0, %s158
      %s160 = sphi 0, %s158
      %s161 = sphi 0, %s160
      %s175 = sphi 0, %s161
      %s179 = sphi 0, %s179
      %s181 = sphi 0, %s179
      %s182 = sphi 0, %s181
      %s196 = sphi 0, %s182
      %s200 = sphi 0, %s200
      %s202 = sphi 0, %s200
      %s203 = sphi 0, %s202
      %s217 = sphi 0, %s203
      %s221 = sphi 0, %s221
      %s223 = sphi 0, %s221
      %s224 = sphi 0, %s223
      %s238 = sphi 0, %s224
      %s242 = sphi 0, %s242
      %s244 = sphi 0, %s242
      %s245 = sphi 0, %s244
      %s259 = sphi 0, %s245
      %s263 = sphi 0, %s263
      %s265 = sphi 0, %s263
      %s266 = sphi 0, %s265
      %s280 = sphi 0, %s266
      %s284 = sphi 0, %s284
      %s286 = sphi 0, %s284
      %s287 = sphi 0, %s286
      %s301 = sphi 0, %s287
      %s309 = sphi 0, %s311
      %s312 = sphi 0, %s309
      %s313 = sphi 0, %s312
      %s329 = sphi 0, %s313
    $region4: #{transformer_formula_encoder.11} parent=1 // loop_header_branch
      %24 = sbr.rel (%p22) target = $region8
    $region5: #{transformer_formula_encoder.11} parent=1 // loop_body
      %s26 = ssub.s32 %s21, 1
      %s27 = ssub.s32 %s21, 2
      %s34 = sadd.s32 1, %s29
      %p35 = scmp.ge.s32.totalorder %s34, 1
      %s36 = scalar_select %p35, 0, %s34
      %s37 = sadd.s32 1, %s28
      %s38 = scalar_select %p35, %s37, %s28
      %p39 = scmp.ge.s32.totalorder %s38, 2
      %s40 = scalar_select %p39, 0, %s38
      %s41 = ssub.s32 %s28, %s40
      %s42 = ssub.s32 %s29, %s36
      %s43 = sor.u32 %s41, %s42
      %p44 = scmp.eq.s32.totalorder %s43, 0
      %s46 = sadd.s32 %s45, 1
      %s47 = scalar_select %p44, %s45, %s46
      %p50 = pneg %p44
      %p51 = scmp.eq.s32.totalorder %s21, 1
      %p52 = por %p50, %p51
      %p53 = scmp.ne.s32.totalorder %s45, %s48
      %p54 = scmp.eq.s32.totalorder %s21, 0
      %p55 = por %p53, %p54
      %p56 = scmp.ne.s32.totalorder %s45, %s48
      %p57 = scmp.eq.s32.totalorder %s26, 1
      %p58 = por %p56, %p57
      %p59 = scmp.ne.s32.totalorder %s48, %s49
      %p60 = scmp.eq.s32.totalorder %s26, 0
      %p61 = por %p59, %p60
      %p62 = scmp.ne.s32.totalorder %s48, %s49
      %p63 = scmp.eq.s32.totalorder %s27, 1
      %p64 = por %p62, %p63
      %p66 = scmp.ne.s32.totalorder %s49, %s65
      %p67 = scmp.eq.s32.totalorder %s27, 0
      %p68 = por %p66, %p67
      %s69 = ssub.s32 %s28, %s40
      %p70 = scmp.eq.s32.totalorder %s69, 0
      %s72 = sadd.s32 %s71, 1
      %s73 = scalar_select %p70, %s71, %s72
      %p76 = pneg %p70
      %p77 = scmp.eq.s32.totalorder %s21, 1
      %p78 = por %p76, %p77
      %p79 = scmp.ne.s32.totalorder %s71, %s74
      %p80 = scmp.eq.s32.totalorder %s21, 0
      %p81 = por %p79, %p80
      %p82 = scmp.ne.s32.totalorder %s71, %s74
      %p83 = scmp.eq.s32.totalorder %s26, 1
      %p84 = por %p82, %p83
      %p85 = scmp.ne.s32.totalorder %s74, %s75
      %p86 = scmp.eq.s32.totalorder %s26, 0
      %p87 = por %p85, %p86
      %p88 = scmp.ne.s32.totalorder %s74, %s75
      %p89 = scmp.eq.s32.totalorder %s27, 1
      %p90 = por %p88, %p89
      %p92 = scmp.ne.s32.totalorder %s75, %s91
      %p93 = scmp.eq.s32.totalorder %s27, 0
      %p94 = por %p92, %p93
      %s96 = sadd.s32 %s95, 1
      %p99 = scmp.eq.s32.totalorder %s21, 1
      %p100 = scmp.ne.s32.totalorder %s95, %s97
      %p101 = scmp.eq.s32.totalorder %s21, 0
      %p102 = por %p100, %p101
      %p103 = scmp.ne.s32.totalorder %s95, %s97
      %p104 = scmp.eq.s32.totalorder %s26, 1
      %p105 = por %p103, %p104
      %p106 = scmp.ne.s32.totalorder %s97, %s98
      %p107 = scmp.eq.s32.totalorder %s26, 0
      %p108 = por %p106, %p107
      %p109 = scmp.ne.s32.totalorder %s97, %s98
      %p110 = scmp.eq.s32.totalorder %s27, 1
      %p111 = por %p109, %p110
      %p113 = scmp.ne.s32.totalorder %s98, %s112
      %p114 = scmp.eq.s32.totalorder %s27, 0
      %p115 = por %p113, %p114
      %s117 = sadd.s32 %s116, 1
      %p120 = scmp.eq.s32.totalorder %s21, 1
      %p121 = scmp.ne.s32.totalorder %s116, %s118
      %p122 = scmp.eq.s32.totalorder %s21, 0
      %p123 = por %p121, %p122
      %p124 = scmp.ne.s32.totalorder %s116, %s118
      %p125 = scmp.eq.s32.totalorder %s26, 1
      %p126 = por %p124, %p125
      %p127 = scmp.ne.s32.totalorder %s118, %s119
      %p128 = scmp.eq.s32.totalorder %s26, 0
      %p129 = por %p127, %p128
      %p130 = scmp.ne.s32.totalorder %s118, %s119
      %p131 = scmp.eq.s32.totalorder %s27, 1
      %p132 = por %p130, %p131
      %p134 = scmp.ne.s32.totalorder %s119, %s133
      %p135 = scmp.eq.s32.totalorder %s27, 0
      %p136 = por %p134, %p135
      %s138 = sadd.s32 %s137, 1
      %p141 = scmp.eq.s32.totalorder %s21, 1
      %p142 = scmp.ne.s32.totalorder %s137, %s139
      %p143 = scmp.eq.s32.totalorder %s21, 0
      %p144 = por %p142, %p143
      %p145 = scmp.ne.s32.totalorder %s137, %s139
      %p146 = scmp.eq.s32.totalorder %s26, 1
      %p147 = por %p145, %p146
      %p148 = scmp.ne.s32.totalorder %s139, %s140
      %p149 = scmp.eq.s32.totalorder %s26, 0
      %p150 = por %p148, %p149
      %p151 = scmp.ne.s32.totalorder %s139, %s140
      %p152 = scmp.eq.s32.totalorder %s27, 1
      %p153 = por %p151, %p152
      %p155 = scmp.ne.s32.totalorder %s140, %s154
      %p156 = scmp.eq.s32.totalorder %s27, 0
      %p157 = por %p155, %p156
      %s159 = sadd.s32 %s158, 1
      %p162 = scmp.eq.s32.totalorder %s21, 1
      %p163 = scmp.ne.s32.totalorder %s158, %s160
      %p164 = scmp.eq.s32.totalorder %s21, 0
      %p165 = por %p163, %p164
      %p166 = scmp.ne.s32.totalorder %s158, %s160
      %p167 = scmp.eq.s32.totalorder %s26, 1
      %p168 = por %p166, %p167
      %p169 = scmp.ne.s32.totalorder %s160, %s161
      %p170 = scmp.eq.s32.totalorder %s26, 0
      %p171 = por %p169, %p170
      %p172 = scmp.ne.s32.totalorder %s160, %s161
      %p173 = scmp.eq.s32.totalorder %s27, 1
      %p174 = por %p172, %p173
      %p176 = scmp.ne.s32.totalorder %s161, %s175
      %p177 = scmp.eq.s32.totalorder %s27, 0
      %p178 = por %p176, %p177
      %s180 = sadd.s32 %s179, 1
      %p183 = scmp.eq.s32.totalorder %s21, 1
      %p184 = scmp.ne.s32.totalorder %s179, %s181
      %p185 = scmp.eq.s32.totalorder %s21, 0
      %p186 = por %p184, %p185
      %p187 = scmp.ne.s32.totalorder %s179, %s181
      %p188 = scmp.eq.s32.totalorder %s26, 1
      %p189 = por %p187, %p188
      %p190 = scmp.ne.s32.totalorder %s181, %s182
      %p191 = scmp.eq.s32.totalorder %s26, 0
      %p192 = por %p190, %p191
      %p193 = scmp.ne.s32.totalorder %s181, %s182
      %p194 = scmp.eq.s32.totalorder %s27, 1
      %p195 = por %p193, %p194
      %p197 = scmp.ne.s32.totalorder %s182, %s196
      %p198 = scmp.eq.s32.totalorder %s27, 0
      %p199 = por %p197, %p198
      %s201 = sadd.s32 %s200, 1
      %p204 = scmp.eq.s32.totalorder %s21, 1
      %p205 = scmp.ne.s32.totalorder %s200, %s202
      %p206 = scmp.eq.s32.totalorder %s21, 0
      %p207 = por %p205, %p206
      %p208 = scmp.ne.s32.totalorder %s200, %s202
      %p209 = scmp.eq.s32.totalorder %s26, 1
      %p210 = por %p208, %p209
      %p211 = scmp.ne.s32.totalorder %s202, %s203
      %p212 = scmp.eq.s32.totalorder %s26, 0
      %p213 = por %p211, %p212
      %p214 = scmp.ne.s32.totalorder %s202, %s203
      %p215 = scmp.eq.s32.totalorder %s27, 1
      %p216 = por %p214, %p215
      %p218 = scmp.ne.s32.totalorder %s203, %s217
      %p219 = scmp.eq.s32.totalorder %s27, 0
      %p220 = por %p218, %p219
      %s222 = sadd.s32 %s221, 1
      %p225 = scmp.eq.s32.totalorder %s21, 1
      %p226 = scmp.ne.s32.totalorder %s221, %s223
      %p227 = scmp.eq.s32.totalorder %s21, 0
      %p228 = por %p226, %p227
      %p229 = scmp.ne.s32.totalorder %s221, %s223
      %p230 = scmp.eq.s32.totalorder %s26, 1
      %p231 = por %p229, %p230
      %p232 = scmp.ne.s32.totalorder %s223, %s224
      %p233 = scmp.eq.s32.totalorder %s26, 0
      %p234 = por %p232, %p233
      %p235 = scmp.ne.s32.totalorder %s223, %s224
      %p236 = scmp.eq.s32.totalorder %s27, 1
      %p237 = por %p235, %p236
      %p239 = scmp.ne.s32.totalorder %s224, %s238
      %p240 = scmp.eq.s32.totalorder %s27, 0
      %p241 = por %p239, %p240
      %s243 = sadd.s32 %s242, 1
      %p246 = scmp.eq.s32.totalorder %s21, 1
      %p247 = scmp.ne.s32.totalorder %s242, %s244
      %p248 = scmp.eq.s32.totalorder %s21, 0
      %p249 = por %p247, %p248
      %p250 = scmp.ne.s32.totalorder %s242, %s244
      %p251 = scmp.eq.s32.totalorder %s26, 1
      %p252 = por %p250, %p251
      %p253 = scmp.ne.s32.totalorder %s244, %s245
      %p254 = scmp.eq.s32.totalorder %s26, 0
      %p255 = por %p253, %p254
      %p256 = scmp.ne.s32.totalorder %s244, %s245
      %p257 = scmp.eq.s32.totalorder %s27, 1
      %p258 = por %p256, %p257
      %p260 = scmp.ne.s32.totalorder %s245, %s259
      %p261 = scmp.eq.s32.totalorder %s27, 0
      %p262 = por %p260, %p261
      %s264 = sadd.s32 %s263, 1
      %p267 = scmp.eq.s32.totalorder %s21, 1
      %p268 = scmp.ne.s32.totalorder %s263, %s265
      %p269 = scmp.eq.s32.totalorder %s21, 0
      %p270 = por %p268, %p269
      %p271 = scmp.ne.s32.totalorder %s263, %s265
      %p272 = scmp.eq.s32.totalorder %s26, 1
      %p273 = por %p271, %p272
      %p274 = scmp.ne.s32.totalorder %s265, %s266
      %p275 = scmp.eq.s32.totalorder %s26, 0
      %p276 = por %p274, %p275
      %p277 = scmp.ne.s32.totalorder %s265, %s266
      %p278 = scmp.eq.s32.totalorder %s27, 1
      %p279 = por %p277, %p278
      %p281 = scmp.ne.s32.totalorder %s266, %s280
      %p282 = scmp.eq.s32.totalorder %s27, 0
      %p283 = por %p281, %p282
      %s285 = sadd.s32 %s284, 1
      %p288 = scmp.eq.s32.totalorder %s21, 1
      %p289 = scmp.ne.s32.totalorder %s284, %s286
      %p290 = scmp.eq.s32.totalorder %s21, 0
      %p291 = por %p289, %p290
      %p292 = scmp.ne.s32.totalorder %s284, %s286
      %p293 = scmp.eq.s32.totalorder %s26, 1
      %p294 = por %p292, %p293
      %p295 = scmp.ne.s32.totalorder %s286, %s287
      %p296 = scmp.eq.s32.totalorder %s26, 0
      %p297 = por %p295, %p296
      %p298 = scmp.ne.s32.totalorder %s286, %s287
      %p299 = scmp.eq.s32.totalorder %s27, 1
      %p300 = por %p298, %p299
      %p302 = scmp.ne.s32.totalorder %s287, %s301
      %p303 = scmp.eq.s32.totalorder %s27, 0
      %p304 = por %p302, %p303
      %s305 = ssub.s32 %s28, %s40
      %s306 = ssub.s32 %s29, %s36
      %s307 = sor.u32 %s305, %s306
      %p308 = scmp.eq.s32.totalorder %s307, 0
      %s310 = sadd.s32 %s309, 1
      %s311 = scalar_select %p308, %s309, %s310
      %p314 = pneg %p308
      %p315 = scmp.eq.s32.totalorder %s21, 1
      %p316 = por %p314, %p315
      %p317 = scmp.ne.s32.totalorder %s309, %s312
      %p318 = scmp.eq.s32.totalorder %s21, 0
      %p319 = por %p317, %p318
      %p320 = scmp.ne.s32.totalorder %s309, %s312
      %p321 = scmp.eq.s32.totalorder %s26, 1
      %p322 = por %p320, %p321
      %p323 = scmp.ne.s32.totalorder %s312, %s313
      %p324 = scmp.eq.s32.totalorder %s26, 0
      %p325 = por %p323, %p324
      %p326 = scmp.ne.s32.totalorder %s312, %s313
      %p327 = scmp.eq.s32.totalorder %s27, 1
      %p328 = por %p326, %p327
      %p330 = scmp.ne.s32.totalorder %s313, %s329
      %p331 = scmp.eq.s32.totalorder %s27, 0
      %p332 = por %p330, %p331
      %p333 = scmp.le.s32.totalorder 1, %s21
      %p334 = scmp.lt.s32.totalorder %s21, 3
      %p335 = pnand %p333, %p334
      %p336 = pneg %p335
      // Predicated region
      $region9: #{transformer_formula_encoder.11} parent=5 // pred_check
        _
      $region10: #{transformer_formula_encoder.11} parent=5 // pred_check_branch
        %338 = sbr.rel (%p335) target = $region12
      $region11: #{transformer_formula_encoder.11} parent=5 // pred_region
        %s339 = ssub.s32 %s21, 1
        // Predicated region
        $region13: #{transformer_formula_encoder.11} parent=11 // pred_check
          %p340 = pneg %p108
        $region14: #{transformer_formula_encoder.11} parent=11 // pred_check_branch
          %342 = sbr.rel (%p340) target = $region16
        $region15: #{transformer_formula_encoder.11} parent=11 // pred_region
          _
        $region16: #{transformer_formula_encoder.11} parent=11 // pred_fallthru
          _
        // Predicated region
        $region17: #{transformer_formula_encoder.11} parent=11 // pred_check
          %p343 = pneg %p129
        $region18: #{transformer_formula_encoder.11} parent=11 // pred_check_branch
          %345 = sbr.rel (%p343) target = $region20
        $region19: #{transformer_formula_encoder.11} parent=11 // pred_region
          _
        $region20: #{transformer_formula_encoder.11} parent=11 // pred_fallthru
          _
        // Predicated region
        $region21: #{transformer_formula_encoder.11} parent=11 // pred_check
          %p346 = pneg %p150
        $region22: #{transformer_formula_encoder.11} parent=11 // pred_check_branch
          %348 = sbr.rel (%p346) target = $region24
        $region23: #{transformer_formula_encoder.11} parent=11 // pred_region
          _
        $region24: #{transformer_formula_encoder.11} parent=11 // pred_fallthru
          _
        // Predicated region
        $region25: #{transformer_formula_encoder.11} parent=11 // pred_check
          %p349 = pneg %p171
        $region26: #{transformer_formula_encoder.11} parent=11 // pred_check_branch
          %351 = sbr.rel (%p349) target = $region28
        $region27: #{transformer_formula_encoder.11} parent=11 // pred_region
          _
        $region28: #{transformer_formula_encoder.11} parent=11 // pred_fallthru
          _
        // Predicated region
        $region29: #{transformer_formula_encoder.11} parent=11 // pred_check
          %p352 = pneg %p192
        $region30: #{transformer_formula_encoder.11} parent=11 // pred_check_branch
          %354 = sbr.rel (%p352) target = $region32
        $region31: #{transformer_formula_encoder.11} parent=11 // pred_region
          _
        $region32: #{transformer_formula_encoder.11} parent=11 // pred_fallthru
          _
        // Predicated region
        $region33: #{transformer_formula_encoder.11} parent=11 // pred_check
          %p355 = pneg %p213
        $region34: #{transformer_formula_encoder.11} parent=11 // pred_check_branch
          %357 = sbr.rel (%p355) target = $region36
        $region35: #{transformer_formula_encoder.11} parent=11 // pred_region
          _
        $region36: #{transformer_formula_encoder.11} parent=11 // pred_fallthru
          _
        // Predicated region
        $region37: #{transformer_formula_encoder.11} parent=11 // pred_check
          %p358 = pneg %p234
        $region38: #{transformer_formula_encoder.11} parent=11 // pred_check_branch
          %360 = sbr.rel (%p358) target = $region40
        $region39: #{transformer_formula_encoder.11} parent=11 // pred_region
          _
        $region40: #{transformer_formula_encoder.11} parent=11 // pred_fallthru
          _
        // Predicated region
        $region41: #{transformer_formula_encoder.11} parent=11 // pred_check
          %p361 = pneg %p255
        $region42: #{transformer_formula_encoder.11} parent=11 // pred_check_branch
          %363 = sbr.rel (%p361) target = $region44
        $region43: #{transformer_formula_encoder.11} parent=11 // pred_region
          _
        $region44: #{transformer_formula_encoder.11} parent=11 // pred_fallthru
          _
        // Predicated region
        $region45: #{transformer_formula_encoder.11} parent=11 // pred_check
          %p364 = pneg %p276
        $region46: #{transformer_formula_encoder.11} parent=11 // pred_check_branch
          %366 = sbr.rel (%p364) target = $region48
        $region47: #{transformer_formula_encoder.11} parent=11 // pred_region
          _
        $region48: #{transformer_formula_encoder.11} parent=11 // pred_fallthru
          _
        // Predicated region
        $region49: #{transformer_formula_encoder.11} parent=11 // pred_check
          %p367 = pneg %p297
        $region50: #{transformer_formula_encoder.11} parent=11 // pred_check_branch
          %369 = sbr.rel (%p367) target = $region52
        $region51: #{transformer_formula_encoder.11} parent=11 // pred_region
          _
        $region52: #{transformer_formula_encoder.11} parent=11 // pred_fallthru
          _
      $region12: #{transformer_formula_encoder.11} parent=5 // pred_fallthru
        _
      %p370 = scmp.lt.s32.totalorder %s21, 2
      // Predicated region
      $region53: #{transformer_formula_encoder.11} parent=5 // pred_check
        %p371 = pneg %p370
      $region54: #{transformer_formula_encoder.11} parent=5 // pred_check_branch
        %373 = sbr.rel (%p371) target = $region56
      $region55: #{transformer_formula_encoder.11} parent=5 // pred_region
        // Predicated region
        $region57: #{transformer_formula_encoder.11} parent=55 // pred_check
          %p374 = pneg %p55
        $region58: #{transformer_formula_encoder.11} parent=55 // pred_check_branch
          %376 = sbr.rel (%p374) target = $region60
        $region59: #{transformer_formula_encoder.11} parent=55 // pred_region
          %p377 = scmp.lt.s32.totalorder %s28, 1
          %s378 = scalar_select %p377, %s28, 1
          %p379 = scmp.lt.s32.totalorder %s29, 0
          %s380 = scalar_select %p379, %s29, 0
          %s381 = sadd.s32 %s380, %s378
          %s382 = smul.addr %s381, 8
          %s383 = scalar_lea.vmem %s0, %s382
        $region60: #{transformer_formula_encoder.11} parent=55 // pred_fallthru
          _
        // Predicated region
        $region61: #{transformer_formula_encoder.11} parent=55 // pred_check
          %p384 = pneg %p81
        $region62: #{transformer_formula_encoder.11} parent=55 // pred_check_branch
          %386 = sbr.rel (%p384) target = $region64
        $region63: #{transformer_formula_encoder.11} parent=55 // pred_region
          %p387 = scmp.lt.s32.totalorder %s28, 1
          %s388 = scalar_select %p387, %s28, 1
          %s389 = scalar_lea.vmem %s1, %s388
        $region64: #{transformer_formula_encoder.11} parent=55 // pred_fallthru
          _
      $region56: #{transformer_formula_encoder.11} parent=5 // pred_fallthru
        _
      %p390 = scmp.le.s32.totalorder 1, %s21
      %p391 = scmp.lt.s32.totalorder %s21, 3
      %p392 = pnand %p390, %p391
      %p393 = pneg %p392
      // Predicated region
      $region65: #{transformer_formula_encoder.11} parent=5 // pred_check
        _
      $region66: #{transformer_formula_encoder.11} parent=5 // pred_check_branch
        %395 = sbr.rel (%p392) target = $region68
      $region67: #{transformer_formula_encoder.11} parent=5 // pred_region
        %s396 = ssub.s32 %s21, 1
        %p397 = scmp.lt.s32.totalorder %s30, 1
        %s398 = scalar_select %p397, %s30, 1
        %p399 = scmp.lt.s32.totalorder %s31, 0
        %s400 = scalar_select %p399, %s31, 0
        %s401 = sadd.s32 %s400, %s398
        %s402 = smul.addr %s401, 8
        %s403 = scalar_lea.vmem %s0, %s402
        %p404 = pneg %p61
        %p405 = pneg %p58
        %p406 = scmp.lt.s32.totalorder %s30, 1
        %s407 = scalar_select %p406, %s30, 1
        %s408 = scalar_lea.vmem %s1, %s407
        %p409 = pneg %p87
        %p410 = pneg %p84
        %p411 = pneg %p108
        %p412 = pneg %p105
        %p413 = pneg %p129
        %p414 = pneg %p126
        %p415 = pneg %p150
        %p416 = pneg %p147
        %p417 = pneg %p171
        %p418 = pneg %p168
        %p419 = pneg %p192
        %p420 = pneg %p189
        %p421 = pneg %p213
        %p422 = pneg %p210
        %p423 = pneg %p234
        %p424 = pneg %p231
        %p425 = pneg %p255
        %p426 = pneg %p252
        %p427 = pneg %p276
        %p428 = pneg %p273
        %p429 = pneg %p297
        %p430 = pneg %p294
        %p431 = pneg %p325
        %p432 = pneg %p322
        %s433 = sand.u32 %s312, 1
        %s434 = scalar_lea.sflag [#allocation3], %s433
        %s435 = sand.u32 %s312, 1
        %s436 = smul.addr %s435, 8
        %s437 = scalar_lea.vmem [#allocation2], %s436
        %p438 = scmp.lt.s32.totalorder %s30, 1
        %s439 = scalar_select %p438, %s30, 1
        %p440 = scmp.lt.s32.totalorder %s31, 0
        %s441 = scalar_select %p440, %s31, 0
        %s442 = sadd.s32 %s441, %s439
        %s443 = smul.addr %s442, 8
        %s444 = scalar_lea.vmem %s0, %s443
        %p445 = scmp.lt.s32.totalorder %s30, 1
        %s446 = scalar_select %p445, %s30, 1
        %s447 = scalar_lea.vmem %s1, %s446
        %v449 = vld [vmem:[%s447] sm:$0x1]
        %v450 = vpack.c.bf16 %v449, %v449
        %v451 = vld [vmem:[%s2] sm:$0xf]
        %v452 = vld [vmem:[%s2 + $0x4] sm:$0xf]
        %v453 = vld [vmem:[%s2 + $0x8] sm:$0xf]
        %v454 = vld [vmem:[%s2 + $0xc] sm:$0xf]
        %v455 = vld [vmem:[%s3] sm:$0x1]
        %v460 = vunpack.c.l.b16 %v451
        %v461 = vunpack.c.l.b16 %v452
        %v462 = vunpack.c.l.b16 %v453
        %v463 = vunpack.c.l.b16 %v454
        %v464 = vpack.c.b16 %v461, %v460
        %v465 = vpack.c.b16 %v463, %v462
        %vm468 = vcmask 261120
        %v470 = vsel %vm468, %v450, 0
        %472 = vmatprep.subr.bf16.mxu0 0
        %473 = vmatpush1.bf16.msra.mxu0 %v464
        %474 = vmatprep.subr.bf16.mxu0 0
        %475 = vmatpush1.bf16.msra.mxu0 %v465
        %476 = vmatprep.subr.bf16.mxu0 0
        %477 = vmatpush1.bf16.msra.mxu0 0
        %478 = vmatprep.subr.bf16.mxu0 0
        %479 = vmatpush1.bf16.msra.mxu0 0
        %480 = vmatprep.subr.bf16.mxu0 0
        %481 = vmatpush1.bf16.msra.mxu0 0
        %482 = vmatprep.subr.bf16.mxu0 0
        %483 = vmatpush1.bf16.msra.mxu0 0
        %484 = vmatprep.subr.bf16.mxu0 0
        %485 = vmatpush1.bf16.msra.mxu0 0
        %486 = vmatprep.subr.bf16.mxu0 0
        %487 = vmatpush1.bf16.msra.mxu0 0
        %488 = vmatprep.subr.bf16.mxu0 0
        %489 = vmatpush1.bf16.msra.mxu0 0
        %490 = vmatprep.subr.bf16.mxu0 0
        %491 = vmatpush1.bf16.msra.mxu0 0
        %492 = vmatprep.subr.bf16.mxu0 0
        %493 = vmatpush1.bf16.msra.mxu0 0
        %494 = vmatprep.subr.bf16.mxu0 0
        %495 = vmatpush1.bf16.msra.mxu0 0
        %496 = vmatprep.subr.bf16.mxu0 0
        %497 = vmatpush1.bf16.msra.mxu0 0
        %498 = vmatprep.subr.bf16.mxu0 0
        %499 = vmatpush1.bf16.msra.mxu0 0
        %500 = vmatprep.subr.bf16.mxu0 0
        %501 = vmatpush1.bf16.msra.mxu0 0
        %502 = vmatprep.subr.bf16.mxu0 0
        %503 = vmatpush1.bf16.msra.mxu0 0
        %504 = vmatprep.mubr.bf16.mxu0 0
        %505 = vmatmul.mubr.bf16.gmra.mrb[0].mxu0 %v470
        %v506 = vpop.f32.mrb[0].mxu0
        %v507 = vadd.f32 %v455, %v506
        %v508 = vpop.f32.mrb[0].mxu0
        %v509 = vpop.f32.mrb[0].mxu0
        %v510 = vpop.f32.mrb[0].mxu0
        %511 = vdwg.mxu0
        %v512 = vpack.c.bf16 %v507, %v507
        %v513 = vld [vmem:[%s4] sm:$0xf]
        %v514 = vld [vmem:[%s4 + $0x4] sm:$0xf]
        %v515 = vld [vmem:[%s4 + $0x8] sm:$0xf]
        %v516 = vld [vmem:[%s4 + $0xc] sm:$0xf]
        %v517 = vld [vmem:[%s5] sm:$0x1]
        %v522 = vunpack.c.l.b16 %v513
        %v523 = vunpack.c.l.b16 %v514
        %v524 = vunpack.c.l.b16 %v515
        %v525 = vunpack.c.l.b16 %v516
        %v526 = vpack.c.b16 %v523, %v522
        %v527 = vpack.c.b16 %v525, %v524
        %v531 = vsel %vm468, %v512, 0
        %533 = vmatprep.subr.bf16.mxu0 0
        %534 = vmatpush1.bf16.msra.mxu0 %v526
        %535 = vmatprep.subr.bf16.mxu0 0
        %536 = vmatpush1.bf16.msra.mxu0 %v527
        %537 = vmatprep.subr.bf16.mxu0 0
        %538 = vmatpush1.bf16.msra.mxu0 0
        %539 = vmatprep.subr.bf16.mxu0 0
        %540 = vmatpush1.bf16.msra.mxu0 0
        %541 = vmatprep.subr.bf16.mxu0 0
        %542 = vmatpush1.bf16.msra.mxu0 0
        %543 = vmatprep.subr.bf16.mxu0 0
        %544 = vmatpush1.bf16.msra.mxu0 0
        %545 = vmatprep.subr.bf16.mxu0 0
        %546 = vmatpush1.bf16.msra.mxu0 0
        %547 = vmatprep.subr.bf16.mxu0 0
        %548 = vmatpush1.bf16.msra.mxu0 0
        %549 = vmatprep.subr.bf16.mxu0 0
        %550 = vmatpush1.bf16.msra.mxu0 0
        %551 = vmatprep.subr.bf16.mxu0 0
        %552 = vmatpush1.bf16.msra.mxu0 0
        %553 = vmatprep.subr.bf16.mxu0 0
        %554 = vmatpush1.bf16.msra.mxu0 0
        %555 = vmatprep.subr.bf16.mxu0 0
        %556 = vmatpush1.bf16.msra.mxu0 0
        %557 = vmatprep.subr.bf16.mxu0 0
        %558 = vmatpush1.bf16.msra.mxu0 0
        %559 = vmatprep.subr.bf16.mxu0 0
        %560 = vmatpush1.bf16.msra.mxu0 0
        %561 = vmatprep.subr.bf16.mxu0 0
        %562 = vmatpush1.bf16.msra.mxu0 0
        %563 = vmatprep.subr.bf16.mxu0 0
        %564 = vmatpush1.bf16.msra.mxu0 0
        %565 = vmatprep.mubr.bf16.mxu0 0
        %566 = vmatmul.mubr.bf16.gmra.mrb[0].mxu0 %v531
        %v567 = vpop.f32.mrb[0].mxu0
        %v568 = vadd.f32 %v517, %v567
        %v569 = vpop.f32.mrb[0].mxu0
        %v570 = vpop.f32.mrb[0].mxu0
        %v571 = vpop.f32.mrb[0].mxu0
        %572 = vdwg.mxu0
        %v573 = vld [vmem:[%s444] sm:$0xff]
        %v574 = vlaneseq
        %v575 = vshrl.u32 %v574, 7
        %v576 = vsub.s32 0, %v575
        %v577 = vrot.slane %v568, %v576
        %v578 = vadd.f32 %v573, %v577
        %v579 = vld [vmem:[%s6] sm:$0x1]
        %v580 = vld [vmem:[%s7] sm:$0x1]
        %v581 = vsel %vm468, %v578, 0.0
        %582 = vadd.xlane.f32.xlu0 %v581
        %v583 = vpop.xlane.xlu0 %582
        %v584 = vrcp.pop 32.0
        %v585 = vmul.f32 %v583, %v584
        %v586 = vsub.f32 %v578, %v585
        %v587 = vmul.f32 %v586, %v586
        %v588 = vsel %vm468, %v587, 0.0
        %589 = vadd.xlane.f32.xlu0 %v588
        %v590 = vpop.xlane.xlu0 %589
        %v591 = vmul.f32 %v590, %v584
        %v592 = vadd.f32 %v591, 1e-05
        %v593 = vrsqrt.pop %v592
        %v594 = vmul.f32 %v586, %v593
        %v596 = vlaneseq
        %v597 = vshrl.u32 %v596, 7
        %v598 = vsub.s32 0, %v597
        %v599 = vrot.slane %v579, %v598
        %v601 = vmul.f32 %v594, %v599
        %v603 = vlaneseq
        %v604 = vshrl.u32 %v603, 7
        %v605 = vsub.s32 0, %v604
        %v606 = vrot.slane %v580, %v605
        %v608 = vadd.f32 %v601, %v606
        %v609 = vpack.c.bf16 %v608, %v608
        %v610 = vld [vmem:[%s8] sm:$0xf]
        %v611 = vld [vmem:[%s8 + $0x4] sm:$0xf]
        %v612 = vld [vmem:[%s8 + $0x8] sm:$0xf]
        %v613 = vld [vmem:[%s8 + $0xc] sm:$0xf]
        %v614 = vld [vmem:[%s9] sm:$0x1]
        %v616 = vlaneseq
        %v617 = vshrl.u32 %v616, 7
        %v618 = vsub.s32 0, %v617
        %v619 = vrot.slane %v614, %v618
        %v625 = vunpack.c.l.b16 %v610
        %v626 = vunpack.c.l.b16 %v611
        %v627 = vunpack.c.l.b16 %v612
        %v628 = vunpack.c.l.b16 %v613
        %v629 = vpack.c.b16 %v626, %v625
        %v630 = vpack.c.b16 %v628, %v627
        %v634 = vsel %vm468, %v609, 0
        %636 = vmatprep.subr.bf16.mxu0 0
        %637 = vmatpush1.bf16.msra.mxu0 %v629
        %638 = vmatprep.subr.bf16.mxu0 0
        %639 = vmatpush1.bf16.msra.mxu0 %v630
        %640 = vmatprep.subr.bf16.mxu0 0
        %641 = vmatpush1.bf16.msra.mxu0 0
        %642 = vmatprep.subr.bf16.mxu0 0
        %643 = vmatpush1.bf16.msra.mxu0 0
        %644 = vmatprep.subr.bf16.mxu0 0
        %645 = vmatpush1.bf16.msra.mxu0 0
        %646 = vmatprep.subr.bf16.mxu0 0
        %647 = vmatpush1.bf16.msra.mxu0 0
        %648 = vmatprep.subr.bf16.mxu0 0
        %649 = vmatpush1.bf16.msra.mxu0 0
        %650 = vmatprep.subr.bf16.mxu0 0
        %651 = vmatpush1.bf16.msra.mxu0 0
        %652 = vmatprep.subr.bf16.mxu0 0
        %653 = vmatpush1.bf16.msra.mxu0 0
        %654 = vmatprep.subr.bf16.mxu0 0
        %655 = vmatpush1.bf16.msra.mxu0 0
        %656 = vmatprep.subr.bf16.mxu0 0
        %657 = vmatpush1.bf16.msra.mxu0 0
        %658 = vmatprep.subr.bf16.mxu0 0
        %659 = vmatpush1.bf16.msra.mxu0 0
        %660 = vmatprep.subr.bf16.mxu0 0
        %661 = vmatpush1.bf16.msra.mxu0 0
        %662 = vmatprep.subr.bf16.mxu0 0
        %663 = vmatpush1.bf16.msra.mxu0 0
        %664 = vmatprep.subr.bf16.mxu0 0
        %665 = vmatpush1.bf16.msra.mxu0 0
        %666 = vmatprep.subr.bf16.mxu0 0
        %667 = vmatpush1.bf16.msra.mxu0 0
        %668 = vmatprep.mubr.bf16.mxu0 0
        %669 = vmatmul.mubr.bf16.gmra.mrb[0].mxu0 %v634
        %v670 = vpop.f32.mrb[0].mxu0
        %v671 = vadd.f32 %v619, %v670
        %v672 = vpop.f32.mrb[0].mxu0
        %v673 = vpop.f32.mrb[0].mxu0
        %v674 = vpop.f32.mrb[0].mxu0
        %675 = vdwg.mxu0
        %v676 = vmul.f32 %v671, 0.5
        %v677 = vmul.f32 %v671, 0.70710677
        %vm678 = vcmp.ge.f32.partialorder %v677, 0.0
        %v679 = vsel %vm678, 1.0, -1.0
        %v680 = vand.u32 2147483647, %v677
        %v681 = vmul.f32 %v680, 0.3275911
        %v682 = vadd.f32 %v681, 1.0
        %v683 = vrcp.pop %v682
        %v684 = vmul.f32 1.0, %v683
        %v685 = vmul.f32 %v684, 1.0614054
        %v686 = vadd.f32 %v685, -1.4531521
        %v687 = vmul.f32 %v686, %v684
        %v688 = vadd.f32 %v687, 1.4214138
        %v689 = vmul.f32 %v688, %v684
        %v690 = vadd.f32 %v689, -0.28449672
        %v691 = vmul.f32 %v690, %v684
        %v692 = vadd.f32 %v691, 0.2548296
        %v693 = vmul.f32 %v692, %v684
        %v694 = vsub.f32 0.0, %v680
        %v695 = vmul.f32 %v694, %v680
        %v696 = vmul.f32 %v695, 1.442695
        %v697 = vpow.pop %v696
        %v698 = vmul.f32 %v693, %v697
        %v699 = vsub.f32 1.0, %v698
        %v700 = vmul.f32 %v679, %v699
        %v701 = vadd.f32 %v700, 1.0
        %v702 = vmul.f32 %v676, %v701
        %v703 = vpack.c.bf16 %v702, %v702
        %v704 = vld [vmem:[%s10] sm:$0xf]
        %v705 = vld [vmem:[%s10 + $0x4] sm:$0xf]
        %v706 = vld [vmem:[%s10 + $0x8] sm:$0xf]
        %v707 = vld [vmem:[%s10 + $0xc] sm:$0xf]
        %v708 = vld [vmem:[%s10 + $0x10] sm:$0xf]
        %v709 = vld [vmem:[%s10 + $0x14] sm:$0xf]
        %v710 = vld [vmem:[%s10 + $0x18] sm:$0xf]
        %v711 = vld [vmem:[%s10 + $0x1c] sm:$0xf]
        %v712 = vld [vmem:[%s10 + $0x20] sm:$0xf]
        %v713 = vld [vmem:[%s10 + $0x24] sm:$0xf]
        %v714 = vld [vmem:[%s10 + $0x28] sm:$0xf]
        %v715 = vld [vmem:[%s10 + $0x2c] sm:$0xf]
        %v716 = vld [vmem:[%s10 + $0x30] sm:$0xf]
        %v717 = vld [vmem:[%s10 + $0x34] sm:$0xf]
        %v718 = vld [vmem:[%s10 + $0x38] sm:$0xf]
        %v719 = vld [vmem:[%s10 + $0x3c] sm:$0xf]
        %v720 = vld [vmem:[%s11] sm:$0x1]
        %v722 = vlaneseq
        %v723 = vshrl.u32 %v722, 7
        %v724 = vsub.s32 0, %v723
        %v725 = vrot.slane %v720, %v724
        %v743 = vunpack.c.l.b16 %v704
        %v744 = vunpack.c.l.b16 %v705
        %v745 = vunpack.c.l.b16 %v706
        %v746 = vunpack.c.l.b16 %v707
        %v747 = vunpack.c.l.b16 %v708
        %v748 = vunpack.c.l.b16 %v709
        %v749 = vunpack.c.l.b16 %v710
        %v750 = vunpack.c.l.b16 %v711
        %v751 = vunpack.c.l.b16 %v712
        %v752 = vunpack.c.l.b16 %v713
        %v753 = vunpack.c.l.b16 %v714
        %v754 = vunpack.c.l.b16 %v715
        %v755 = vunpack.c.l.b16 %v716
        %v756 = vunpack.c.l.b16 %v717
        %v757 = vunpack.c.l.b16 %v718
        %v758 = vunpack.c.l.b16 %v719
        %v759 = vpack.c.b16 %v744, %v743
        %v760 = vpack.c.b16 %v746, %v745
        %v761 = vpack.c.b16 %v748, %v747
        %v762 = vpack.c.b16 %v750, %v749
        %v763 = vpack.c.b16 %v752, %v751
        %v764 = vpack.c.b16 %v754, %v753
        %v765 = vpack.c.b16 %v756, %v755
        %v766 = vpack.c.b16 %v758, %v757
        %775 = vmatprep.subr.bf16.mxu0 0
        %776 = vmatpush1.bf16.msra.mxu0 %v759
        %777 = vmatprep.subr.bf16.mxu0 0
        %778 = vmatpush1.bf16.msra.mxu0 %v760
        %779 = vmatprep.subr.bf16.mxu0 0
        %780 = vmatpush1.bf16.msra.mxu0 %v761
        %781 = vmatprep.subr.bf16.mxu0 0
        %782 = vmatpush1.bf16.msra.mxu0 %v762
        %783 = vmatprep.subr.bf16.mxu0 0
        %784 = vmatpush1.bf16.msra.mxu0 %v763
        %785 = vmatprep.subr.bf16.mxu0 0
        %786 = vmatpush1.bf16.msra.mxu0 %v764
        %787 = vmatprep.subr.bf16.mxu0 0
        %788 = vmatpush1.bf16.msra.mxu0 %v765
        %789 = vmatprep.subr.bf16.mxu0 0
        %790 = vmatpush1.bf16.msra.mxu0 %v766
        %791 = vmatprep.subr.bf16.mxu0 0
        %792 = vmatpush1.bf16.msra.mxu0 0
        %793 = vmatprep.subr.bf16.mxu0 0
        %794 = vmatpush1.bf16.msra.mxu0 0
        %795 = vmatprep.subr.bf16.mxu0 0
        %796 = vmatpush1.bf16.msra.mxu0 0
        %797 = vmatprep.subr.bf16.mxu0 0
        %798 = vmatpush1.bf16.msra.mxu0 0
        %799 = vmatprep.subr.bf16.mxu0 0
        %800 = vmatpush1.bf16.msra.mxu0 0
        %801 = vmatprep.subr.bf16.mxu0 0
        %802 = vmatpush1.bf16.msra.mxu0 0
        %803 = vmatprep.subr.bf16.mxu0 0
        %804 = vmatpush1.bf16.msra.mxu0 0
        %805 = vmatprep.subr.bf16.mxu0 0
        %806 = vmatpush1.bf16.msra.mxu0 0
        %807 = vmatprep.mubr.bf16.mxu0 0
        %808 = vmatmul.mubr.bf16.gmra.mrb[0].mxu0 %v703
        %v809 = vpop.f32.mrb[0].mxu0
        %v810 = vadd.f32 %v725, %v809
        %v811 = vpop.f32.mrb[0].mxu0
        %v812 = vpop.f32.mrb[0].mxu0
        %v813 = vpop.f32.mrb[0].mxu0
        %814 = vdwg.mxu0
        %v815 = vadd.f32 %v578, %v810
        %816 = vst.msk [vmem:[%s437] sm:$0xff] %vm468, %v815
        %s817 = sand.u32 %s312, 1
        %s818 = scalar_lea.sflag [#allocation3], %s817
        %s819 = sand.u32 %s312, 1
        %s820 = smul.addr %s819, 8
        %s821 = scalar_lea.vmem [#allocation2], %s820
        // Predicated region
        $region69: #{transformer_formula_encoder.11} parent=67 // pred_check
          %p822 = pneg %p322
        $region70: #{transformer_formula_encoder.11} parent=67 // pred_check_branch
          %824 = sbr.rel (%p822) target = $region72
        $region71: #{transformer_formula_encoder.11} parent=67 // pred_region
          %s826 = ssub.s32 128, 128
          %827 = vsyncadd %s818, %s826
          %s828 = sadd.s32 %s31, %s30
          %s829 = smul.addr %s828, 128
          %s830 = scalar_lea.hbm %s12, %s829
          %s832 = sshll.u32 %s821, 4
          %s833 = int_to_ptr.vmem [resolvable:$true] %s832
          %835 = dma.vmem_to_hbm [thread:$0]  %s833, 128, %s830, %s818
        $region72: #{transformer_formula_encoder.11} parent=67 // pred_fallthru
          _
      $region68: #{transformer_formula_encoder.11} parent=5 // pred_fallthru
        _
      %p836 = scmp.le.s32.totalorder 2, %s21
      // Predicated region
      $region73: #{transformer_formula_encoder.11} parent=5 // pred_check
        %p837 = pneg %p836
      $region74: #{transformer_formula_encoder.11} parent=5 // pred_check_branch
        %839 = sbr.rel (%p837) target = $region76
      $region75: #{transformer_formula_encoder.11} parent=5 // pred_region
        %s840 = ssub.s32 %s21, 2
        // Predicated region
        $region77: #{transformer_formula_encoder.11} parent=75 // pred_check
          %p841 = pneg %p328
        $region78: #{transformer_formula_encoder.11} parent=75 // pred_check_branch
          %843 = sbr.rel (%p841) target = $region80
        $region79: #{transformer_formula_encoder.11} parent=75 // pred_region
          %s844 = sand.u32 %s313, 1
          %s845 = scalar_lea.sflag [#allocation3], %s844
          %s846 = sand.u32 %s313, 1
          %s847 = smul.addr %s846, 8
          %s848 = scalar_lea.vmem [#allocation2], %s847
          %849 = dma.done %s845, 128
        $region80: #{transformer_formula_encoder.11} parent=75 // pred_fallthru
          _
      $region76: #{transformer_formula_encoder.11} parent=5 // pred_fallthru
        _
    $region6: #{transformer_formula_encoder.11} parent=1 // loop_footer
      %s25 = sadd.s32 1, %s21
    $region7: #{transformer_formula_encoder.11} parent=1 // loop_footer_branch
      %20 = sbr.rel target = $region3
    $region8: #{transformer_formula_encoder.11} parent=1 // loop_exit
      _
    %850 = vsyncpa [#allocation3], 1
    %s851 = scalar_lea.sflag [#allocation3], 1
    %852 = vsyncpa %s851, 1

// kernel: transformer_formula_encoder.8
$region0: #{transformer_formula_encoder.8}
  #allocation0 [shape = 'u32[]', space=smem, size = 0x4, offset = 0x4, fixed_abs, tag = 'smem constant byte address 0x4 - core index']
  #allocation1 [shape = 'u32[144,128]{1,0:T(1,128)}', space=vmem, size = 0x12000, scoped, tag = 'internal scratch']
  %s0 = inlined_call_operand.vmem [shape: f32[2,8,32], index: 0, kind: input, shape index: {}]
  %s1 = inlined_call_operand.vmem [shape: f32[2,1,32], index: 1, kind: input, shape index: {}]
  %s2 = inlined_call_operand.vmem [shape: bf16[32,32], index: 2, kind: input, shape index: {}]
  %s3 = inlined_call_operand.vmem [shape: f32[1,32], index: 3, kind: input, shape index: {}]
  %s4 = inlined_call_operand.vmem [shape: bf16[32,32], index: 4, kind: input, shape index: {}]
  %s5 = inlined_call_operand.vmem [shape: f32[1,32], index: 5, kind: input, shape index: {}]
  %s6 = inlined_call_operand.vmem [shape: f32[1,32], index: 6, kind: input, shape index: {}]
  %s7 = inlined_call_operand.vmem [shape: f32[1,32], index: 7, kind: input, shape index: {}]
  %s8 = inlined_call_operand.vmem [shape: bf16[32,128], index: 8, kind: input, shape index: {}]
  %s9 = inlined_call_operand.vmem [shape: f32[1,128], index: 9, kind: input, shape index: {}]
  %s10 = inlined_call_operand.vmem [shape: bf16[128,32], index: 10, kind: input, shape index: {}]
  %s11 = inlined_call_operand.vmem [shape: f32[1,32], index: 11, kind: input, shape index: {}]
  %s12 = inlined_call_operand.vmem [shape: f32[2,8,32], index: 12, kind: output, shape index: {}]
  %s13 = sld [smem:[#allocation0]]
  $region81: #{transformer_formula_encoder.8} parent=0
    _
  %s15 = ssub.s32 1, %s13
  %s16 = scalar_select 0, %s15, %s13
  loop: start=0, step=1, limit=4
  $region2: #{transformer_formula_encoder.8} parent=0 // loop_pre_header
    _
  $region3: #{transformer_formula_encoder.8} parent=0 // loop_header
    %s18 = sphi 0, %s22
    %p19 = scmp.ge.s32.totalorder %s18, 4
    %s25 = sphi 0, %s37
    %s26 = sphi 0, %s33
    %s27 = sphi 0, %s25
    %s28 = sphi 0, %s26
    %s29 = sphi 0, %s27
    %s30 = sphi 0, %s28
    %s42 = sphi 0, %s44
    %s45 = sphi 0, %s42
    %s46 = sphi 0, %s45
    %s62 = sphi 0, %s46
    %s68 = sphi 0, %s70
    %s71 = sphi 0, %s68
    %s72 = sphi 0, %s71
    %s88 = sphi 0, %s72
    %s92 = sphi 0, %s92
    %s94 = sphi 0, %s92
    %s95 = sphi 0, %s94
    %s109 = sphi 0, %s95
    %s113 = sphi 0, %s113
    %s115 = sphi 0, %s113
    %s116 = sphi 0, %s115
    %s130 = sphi 0, %s116
    %s134 = sphi 0, %s134
    %s136 = sphi 0, %s134
    %s137 = sphi 0, %s136
    %s151 = sphi 0, %s137
    %s155 = sphi 0, %s155
    %s157 = sphi 0, %s155
    %s158 = sphi 0, %s157
    %s172 = sphi 0, %s158
    %s176 = sphi 0, %s176
    %s178 = sphi 0, %s176
    %s179 = sphi 0, %s178
    %s193 = sphi 0, %s179
    %s197 = sphi 0, %s197
    %s199 = sphi 0, %s197
    %s200 = sphi 0, %s199
    %s214 = sphi 0, %s200
    %s218 = sphi 0, %s218
    %s220 = sphi 0, %s218
    %s221 = sphi 0, %s220
    %s235 = sphi 0, %s221
    %s239 = sphi 0, %s239
    %s241 = sphi 0, %s239
    %s242 = sphi 0, %s241
    %s256 = sphi 0, %s242
    %s260 = sphi 0, %s260
    %s262 = sphi 0, %s260
    %s263 = sphi 0, %s262
    %s277 = sphi 0, %s263
    %s281 = sphi 0, %s281
    %s283 = sphi 0, %s281
    %s284 = sphi 0, %s283
    %s298 = sphi 0, %s284
    %s306 = sphi 0, %s308
    %s309 = sphi 0, %s306
    %s310 = sphi 0, %s309
    %s326 = sphi 0, %s310
  $region4: #{transformer_formula_encoder.8} parent=0 // loop_header_branch
    %21 = sbr.rel (%p19) target = $region8
  $region5: #{transformer_formula_encoder.8} parent=0 // loop_body
    %s23 = ssub.s32 %s18, 1
    %s24 = ssub.s32 %s18, 2
    %s31 = sadd.s32 1, %s26
    %p32 = scmp.ge.s32.totalorder %s31, 1
    %s33 = scalar_select %p32, 0, %s31
    %s34 = sadd.s32 1, %s25
    %s35 = scalar_select %p32, %s34, %s25
    %p36 = scmp.ge.s32.totalorder %s35, 2
    %s37 = scalar_select %p36, 0, %s35
    %s38 = ssub.s32 %s25, %s37
    %s39 = ssub.s32 %s26, %s33
    %s40 = sor.u32 %s38, %s39
    %p41 = scmp.eq.s32.totalorder %s40, 0
    %s43 = sadd.s32 %s42, 1
    %s44 = scalar_select %p41, %s42, %s43
    %p47 = pneg %p41
    %p48 = scmp.eq.s32.totalorder %s18, 1
    %p49 = por %p47, %p48
    %p50 = scmp.ne.s32.totalorder %s42, %s45
    %p51 = scmp.eq.s32.totalorder %s18, 0
    %p52 = por %p50, %p51
    %p53 = scmp.ne.s32.totalorder %s42, %s45
    %p54 = scmp.eq.s32.totalorder %s23, 1
    %p55 = por %p53, %p54
    %p56 = scmp.ne.s32.totalorder %s45, %s46
    %p57 = scmp.eq.s32.totalorder %s23, 0
    %p58 = por %p56, %p57
    %p59 = scmp.ne.s32.totalorder %s45, %s46
    %p60 = scmp.eq.s32.totalorder %s24, 1
    %p61 = por %p59, %p60
    %p63 = scmp.ne.s32.totalorder %s46, %s62
    %p64 = scmp.eq.s32.totalorder %s24, 0
    %p65 = por %p63, %p64
    %s66 = ssub.s32 %s25, %s37
    %p67 = scmp.eq.s32.totalorder %s66, 0
    %s69 = sadd.s32 %s68, 1
    %s70 = scalar_select %p67, %s68, %s69
    %p73 = pneg %p67
    %p74 = scmp.eq.s32.totalorder %s18, 1
    %p75 = por %p73, %p74
    %p76 = scmp.ne.s32.totalorder %s68, %s71
    %p77 = scmp.eq.s32.totalorder %s18, 0
    %p78 = por %p76, %p77
    %p79 = scmp.ne.s32.totalorder %s68, %s71
    %p80 = scmp.eq.s32.totalorder %s23, 1
    %p81 = por %p79, %p80
    %p82 = scmp.ne.s32.totalorder %s71, %s72
    %p83 = scmp.eq.s32.totalorder %s23, 0
    %p84 = por %p82, %p83
    %p85 = scmp.ne.s32.totalorder %s71, %s72
    %p86 = scmp.eq.s32.totalorder %s24, 1
    %p87 = por %p85, %p86
    %p89 = scmp.ne.s32.totalorder %s72, %s88
    %p90 = scmp.eq.s32.totalorder %s24, 0
    %p91 = por %p89, %p90
    %s93 = sadd.s32 %s92, 1
    %p96 = scmp.eq.s32.totalorder %s18, 1
    %p97 = scmp.ne.s32.totalorder %s92, %s94
    %p98 = scmp.eq.s32.totalorder %s18, 0
    %p99 = por %p97, %p98
    %p100 = scmp.ne.s32.totalorder %s92, %s94
    %p101 = scmp.eq.s32.totalorder %s23, 1
    %p102 = por %p100, %p101
    %p103 = scmp.ne.s32.totalorder %s94, %s95
    %p104 = scmp.eq.s32.totalorder %s23, 0
    %p105 = por %p103, %p104
    %p106 = scmp.ne.s32.totalorder %s94, %s95
    %p107 = scmp.eq.s32.totalorder %s24, 1
    %p108 = por %p106, %p107
    %p110 = scmp.ne.s32.totalorder %s95, %s109
    %p111 = scmp.eq.s32.totalorder %s24, 0
    %p112 = por %p110, %p111
    %s114 = sadd.s32 %s113, 1
    %p117 = scmp.eq.s32.totalorder %s18, 1
    %p118 = scmp.ne.s32.totalorder %s113, %s115
    %p119 = scmp.eq.s32.totalorder %s18, 0
    %p120 = por %p118, %p119
    %p121 = scmp.ne.s32.totalorder %s113, %s115
    %p122 = scmp.eq.s32.totalorder %s23, 1
    %p123 = por %p121, %p122
    %p124 = scmp.ne.s32.totalorder %s115, %s116
    %p125 = scmp.eq.s32.totalorder %s23, 0
    %p126 = por %p124, %p125
    %p127 = scmp.ne.s32.totalorder %s115, %s116
    %p128 = scmp.eq.s32.totalorder %s24, 1
    %p129 = por %p127, %p128
    %p131 = scmp.ne.s32.totalorder %s116, %s130
    %p132 = scmp.eq.s32.totalorder %s24, 0
    %p133 = por %p131, %p132
    %s135 = sadd.s32 %s134, 1
    %p138 = scmp.eq.s32.totalorder %s18, 1
    %p139 = scmp.ne.s32.totalorder %s134, %s136
    %p140 = scmp.eq.s32.totalorder %s18, 0
    %p141 = por %p139, %p140
    %p142 = scmp.ne.s32.totalorder %s134, %s136
    %p143 = scmp.eq.s32.totalorder %s23, 1
    %p144 = por %p142, %p143
    %p145 = scmp.ne.s32.totalorder %s136, %s137
    %p146 = scmp.eq.s32.totalorder %s23, 0
    %p147 = por %p145, %p146
    %p148 = scmp.ne.s32.totalorder %s136, %s137
    %p149 = scmp.eq.s32.totalorder %s24, 1
    %p150 = por %p148, %p149
    %p152 = scmp.ne.s32.totalorder %s137, %s151
    %p153 = scmp.eq.s32.totalorder %s24, 0
    %p154 = por %p152, %p153
    %s156 = sadd.s32 %s155, 1
    %p159 = scmp.eq.s32.totalorder %s18, 1
    %p160 = scmp.ne.s32.totalorder %s155, %s157
    %p161 = scmp.eq.s32.totalorder %s18, 0
    %p162 = por %p160, %p161
    %p163 = scmp.ne.s32.totalorder %s155, %s157
    %p164 = scmp.eq.s32.totalorder %s23, 1
    %p165 = por %p163, %p164
    %p166 = scmp.ne.s32.totalorder %s157, %s158
    %p167 = scmp.eq.s32.totalorder %s23, 0
    %p168 = por %p166, %p167
    %p169 = scmp.ne.s32.totalorder %s157, %s158
    %p170 = scmp.eq.s32.totalorder %s24, 1
    %p171 = por %p169, %p170
    %p173 = scmp.ne.s32.totalorder %s158, %s172
    %p174 = scmp.eq.s32.totalorder %s24, 0
    %p175 = por %p173, %p174
    %s177 = sadd.s32 %s176, 1
    %p180 = scmp.eq.s32.totalorder %s18, 1
    %p181 = scmp.ne.s32.totalorder %s176, %s178
    %p182 = scmp.eq.s32.totalorder %s18, 0
    %p183 = por %p181, %p182
    %p184 = scmp.ne.s32.totalorder %s176, %s178
    %p185 = scmp.eq.s32.totalorder %s23, 1
    %p186 = por %p184, %p185
    %p187 = scmp.ne.s32.totalorder %s178, %s179
    %p188 = scmp.eq.s32.totalorder %s23, 0
    %p189 = por %p187, %p188
    %p190 = scmp.ne.s32.totalorder %s178, %s179
    %p191 = scmp.eq.s32.totalorder %s24, 1
    %p192 = por %p190, %p191
    %p194 = scmp.ne.s32.totalorder %s179, %s193
    %p195 = scmp.eq.s32.totalorder %s24, 0
    %p196 = por %p194, %p195
    %s198 = sadd.s32 %s197, 1
    %p201 = scmp.eq.s32.totalorder %s18, 1
    %p202 = scmp.ne.s32.totalorder %s197, %s199
    %p203 = scmp.eq.s32.totalorder %s18, 0
    %p204 = por %p202, %p203
    %p205 = scmp.ne.s32.totalorder %s197, %s199
    %p206 = scmp.eq.s32.totalorder %s23, 1
    %p207 = por %p205, %p206
    %p208 = scmp.ne.s32.totalorder %s199, %s200
    %p209 = scmp.eq.s32.totalorder %s23, 0
    %p210 = por %p208, %p209
    %p211 = scmp.ne.s32.totalorder %s199, %s200
    %p212 = scmp.eq.s32.totalorder %s24, 1
    %p213 = por %p211, %p212
    %p215 = scmp.ne.s32.totalorder %s200, %s214
    %p216 = scmp.eq.s32.totalorder %s24, 0
    %p217 = por %p215, %p216
    %s219 = sadd.s32 %s218, 1
    %p222 = scmp.eq.s32.totalorder %s18, 1
    %p223 = scmp.ne.s32.totalorder %s218, %s220
    %p224 = scmp.eq.s32.totalorder %s18, 0
    %p225 = por %p223, %p224
    %p226 = scmp.ne.s32.totalorder %s218, %s220
    %p227 = scmp.eq.s32.totalorder %s23, 1
    %p228 = por %p226, %p227
    %p229 = scmp.ne.s32.totalorder %s220, %s221
    %p230 = scmp.eq.s32.totalorder %s23, 0
    %p231 = por %p229, %p230
    %p232 = scmp.ne.s32.totalorder %s220, %s221
    %p233 = scmp.eq.s32.totalorder %s24, 1
    %p234 = por %p232, %p233
    %p236 = scmp.ne.s32.totalorder %s221, %s235
    %p237 = scmp.eq.s32.totalorder %s24, 0
    %p238 = por %p236, %p237
    %s240 = sadd.s32 %s239, 1
    %p243 = scmp.eq.s32.totalorder %s18, 1
    %p244 = scmp.ne.s32.totalorder %s239, %s241
    %p245 = scmp.eq.s32.totalorder %s18, 0
    %p246 = por %p244, %p245
    %p247 = scmp.ne.s32.totalorder %s239, %s241
    %p248 = scmp.eq.s32.totalorder %s23, 1
    %p249 = por %p247, %p248
    %p250 = scmp.ne.s32.totalorder %s241, %s242
    %p251 = scmp.eq.s32.totalorder %s23, 0
    %p252 = por %p250, %p251
    %p253 = scmp.ne.s32.totalorder %s241, %s242
    %p254 = scmp.eq.s32.totalorder %s24, 1
    %p255 = por %p253, %p254
    %p257 = scmp.ne.s32.totalorder %s242, %s256
    %p258 = scmp.eq.s32.totalorder %s24, 0
    %p259 = por %p257, %p258
    %s261 = sadd.s32 %s260, 1
    %p264 = scmp.eq.s32.totalorder %s18, 1
    %p265 = scmp.ne.s32.totalorder %s260, %s262
    %p266 = scmp.eq.s32.totalorder %s18, 0
    %p267 = por %p265, %p266
    %p268 = scmp.ne.s32.totalorder %s260, %s262
    %p269 = scmp.eq.s32.totalorder %s23, 1
    %p270 = por %p268, %p269
    %p271 = scmp.ne.s32.totalorder %s262, %s263
    %p272 = scmp.eq.s32.totalorder %s23, 0
    %p273 = por %p271, %p272
    %p274 = scmp.ne.s32.totalorder %s262, %s263
    %p275 = scmp.eq.s32.totalorder %s24, 1
    %p276 = por %p274, %p275
    %p278 = scmp.ne.s32.totalorder %s263, %s277
    %p279 = scmp.eq.s32.totalorder %s24, 0
    %p280 = por %p278, %p279
    %s282 = sadd.s32 %s281, 1
    %p285 = scmp.eq.s32.totalorder %s18, 1
    %p286 = scmp.ne.s32.totalorder %s281, %s283
    %p287 = scmp.eq.s32.totalorder %s18, 0
    %p288 = por %p286, %p287
    %p289 = scmp.ne.s32.totalorder %s281, %s283
    %p290 = scmp.eq.s32.totalorder %s23, 1
    %p291 = por %p289, %p290
    %p292 = scmp.ne.s32.totalorder %s283, %s284
    %p293 = scmp.eq.s32.totalorder %s23, 0
    %p294 = por %p292, %p293
    %p295 = scmp.ne.s32.totalorder %s283, %s284
    %p296 = scmp.eq.s32.totalorder %s24, 1
    %p297 = por %p295, %p296
    %p299 = scmp.ne.s32.totalorder %s284, %s298
    %p300 = scmp.eq.s32.totalorder %s24, 0
    %p301 = por %p299, %p300
    %s302 = ssub.s32 %s25, %s37
    %s303 = ssub.s32 %s26, %s33
    %s304 = sor.u32 %s302, %s303
    %p305 = scmp.eq.s32.totalorder %s304, 0
    %s307 = sadd.s32 %s306, 1
    %s308 = scalar_select %p305, %s306, %s307
    %p311 = pneg %p305
    %p312 = scmp.eq.s32.totalorder %s18, 1
    %p313 = por %p311, %p312
    %p314 = scmp.ne.s32.totalorder %s306, %s309
    %p315 = scmp.eq.s32.totalorder %s18, 0
    %p316 = por %p314, %p315
    %p317 = scmp.ne.s32.totalorder %s306, %s309
    %p318 = scmp.eq.s32.totalorder %s23, 1
    %p319 = por %p317, %p318
    %p320 = scmp.ne.s32.totalorder %s309, %s310
    %p321 = scmp.eq.s32.totalorder %s23, 0
    %p322 = por %p320, %p321
    %p323 = scmp.ne.s32.totalorder %s309, %s310
    %p324 = scmp.eq.s32.totalorder %s24, 1
    %p325 = por %p323, %p324
    %p327 = scmp.ne.s32.totalorder %s310, %s326
    %p328 = scmp.eq.s32.totalorder %s24, 0
    %p329 = por %p327, %p328
    %p330 = scmp.le.s32.totalorder 1, %s18
    %p331 = scmp.lt.s32.totalorder %s18, 3
    %p332 = pnand %p330, %p331
    %p333 = pneg %p332
    // Predicated region
    $region9: #{transformer_formula_encoder.8} parent=5 // pred_check
      _
    $region10: #{transformer_formula_encoder.8} parent=5 // pred_check_branch
      %335 = sbr.rel (%p332) target = $region12
    $region11: #{transformer_formula_encoder.8} parent=5 // pred_region
      %s336 = ssub.s32 %s18, 1
      // Predicated region
      $region13: #{transformer_formula_encoder.8} parent=11 // pred_check
        %p337 = pneg %p105
      $region14: #{transformer_formula_encoder.8} parent=11 // pred_check_branch
        %339 = sbr.rel (%p337) target = $region16
      $region15: #{transformer_formula_encoder.8} parent=11 // pred_region
        _
      $region16: #{transformer_formula_encoder.8} parent=11 // pred_fallthru
        _
      // Predicated region
      $region17: #{transformer_formula_encoder.8} parent=11 // pred_check
        %p340 = pneg %p126
      $region18: #{transformer_formula_encoder.8} parent=11 // pred_check_branch
        %342 = sbr.rel (%p340) target = $region20
      $region19: #{transformer_formula_encoder.8} parent=11 // pred_region
        _
      $region20: #{transformer_formula_encoder.8} parent=11 // pred_fallthru
        _
      // Predicated region
      $region21: #{transformer_formula_encoder.8} parent=11 // pred_check
        %p343 = pneg %p147
      $region22: #{transformer_formula_encoder.8} parent=11 // pred_check_branch
        %345 = sbr.rel (%p343) target = $region24
      $region23: #{transformer_formula_encoder.8} parent=11 // pred_region
        _
      $region24: #{transformer_formula_encoder.8} parent=11 // pred_fallthru
        _
      // Predicated region
      $region25: #{transformer_formula_encoder.8} parent=11 // pred_check
        %p346 = pneg %p168
      $region26: #{transformer_formula_encoder.8} parent=11 // pred_check_branch
        %348 = sbr.rel (%p346) target = $region28
      $region27: #{transformer_formula_encoder.8} parent=11 // pred_region
        _
      $region28: #{transformer_formula_encoder.8} parent=11 // pred_fallthru
        _
      // Predicated region
      $region29: #{transformer_formula_encoder.8} parent=11 // pred_check
        %p349 = pneg %p189
      $region30: #{transformer_formula_encoder.8} parent=11 // pred_check_branch
        %351 = sbr.rel (%p349) target = $region32
      $region31: #{transformer_formula_encoder.8} parent=11 // pred_region
        _
      $region32: #{transformer_formula_encoder.8} parent=11 // pred_fallthru
        _
      // Predicated region
      $region33: #{transformer_formula_encoder.8} parent=11 // pred_check
        %p352 = pneg %p210
      $region34: #{transformer_formula_encoder.8} parent=11 // pred_check_branch
        %354 = sbr.rel (%p352) target = $region36
      $region35: #{transformer_formula_encoder.8} parent=11 // pred_region
        _
      $region36: #{transformer_formula_encoder.8} parent=11 // pred_fallthru
        _
      // Predicated region
      $region37: #{transformer_formula_encoder.8} parent=11 // pred_check
        %p355 = pneg %p231
      $region38: #{transformer_formula_encoder.8} parent=11 // pred_check_branch
        %357 = sbr.rel (%p355) target = $region40
      $region39: #{transformer_formula_encoder.8} parent=11 // pred_region
        _
      $region40: #{transformer_formula_encoder.8} parent=11 // pred_fallthru
        _
      // Predicated region
      $region41: #{transformer_formula_encoder.8} parent=11 // pred_check
        %p358 = pneg %p252
      $region42: #{transformer_formula_encoder.8} parent=11 // pred_check_branch
        %360 = sbr.rel (%p358) target = $region44
      $region43: #{transformer_formula_encoder.8} parent=11 // pred_region
        _
      $region44: #{transformer_formula_encoder.8} parent=11 // pred_fallthru
        _
      // Predicated region
      $region45: #{transformer_formula_encoder.8} parent=11 // pred_check
        %p361 = pneg %p273
      $region46: #{transformer_formula_encoder.8} parent=11 // pred_check_branch
        %363 = sbr.rel (%p361) target = $region48
      $region47: #{transformer_formula_encoder.8} parent=11 // pred_region
        _
      $region48: #{transformer_formula_encoder.8} parent=11 // pred_fallthru
        _
      // Predicated region
      $region49: #{transformer_formula_encoder.8} parent=11 // pred_check
        %p364 = pneg %p294
      $region50: #{transformer_formula_encoder.8} parent=11 // pred_check_branch
        %366 = sbr.rel (%p364) target = $region52
      $region51: #{transformer_formula_encoder.8} parent=11 // pred_region
        _
      $region52: #{transformer_formula_encoder.8} parent=11 // pred_fallthru
        _
    $region12: #{transformer_formula_encoder.8} parent=5 // pred_fallthru
      _
    %p367 = scmp.lt.s32.totalorder %s18, 2
    // Predicated region
    $region53: #{transformer_formula_encoder.8} parent=5 // pred_check
      %p368 = pneg %p367
    $region54: #{transformer_formula_encoder.8} parent=5 // pred_check_branch
      %370 = sbr.rel (%p368) target = $region56
    $region55: #{transformer_formula_encoder.8} parent=5 // pred_region
      // Predicated region
      $region57: #{transformer_formula_encoder.8} parent=55 // pred_check
        %p371 = pneg %p52
      $region58: #{transformer_formula_encoder.8} parent=55 // pred_check_branch
        %373 = sbr.rel (%p371) target = $region60
      $region59: #{transformer_formula_encoder.8} parent=55 // pred_region
        %p374 = scmp.lt.s32.totalorder %s25, 1
        %s375 = scalar_select %p374, %s25, 1
        %p376 = scmp.lt.s32.totalorder %s26, 0
        %s377 = scalar_select %p376, %s26, 0
        %s378 = sadd.s32 %s377, %s375
        %s379 = smul.addr %s378, 8
        %s380 = scalar_lea.vmem %s0, %s379
      $region60: #{transformer_formula_encoder.8} parent=55 // pred_fallthru
        _
      // Predicated region
      $region61: #{transformer_formula_encoder.8} parent=55 // pred_check
        %p381 = pneg %p78
      $region62: #{transformer_formula_encoder.8} parent=55 // pred_check_branch
        %383 = sbr.rel (%p381) target = $region64
      $region63: #{transformer_formula_encoder.8} parent=55 // pred_region
        %p384 = scmp.lt.s32.totalorder %s25, 1
        %s385 = scalar_select %p384, %s25, 1
        %s386 = scalar_lea.vmem %s1, %s385
      $region64: #{transformer_formula_encoder.8} parent=55 // pred_fallthru
        _
    $region56: #{transformer_formula_encoder.8} parent=5 // pred_fallthru
      _
    %p387 = scmp.le.s32.totalorder 1, %s18
    %p388 = scmp.lt.s32.totalorder %s18, 3
    %p389 = pnand %p387, %p388
    %p390 = pneg %p389
    // Predicated region
    $region65: #{transformer_formula_encoder.8} parent=5 // pred_check
      _
    $region66: #{transformer_formula_encoder.8} parent=5 // pred_check_branch
      %392 = sbr.rel (%p389) target = $region68
    $region67: #{transformer_formula_encoder.8} parent=5 // pred_region
      %s393 = ssub.s32 %s18, 1
      %p394 = scmp.lt.s32.totalorder %s27, 1
      %s395 = scalar_select %p394, %s27, 1
      %p396 = scmp.lt.s32.totalorder %s28, 0
      %s397 = scalar_select %p396, %s28, 0
      %s398 = sadd.s32 %s397, %s395
      %s399 = smul.addr %s398, 8
      %s400 = scalar_lea.vmem %s0, %s399
      %p401 = pneg %p58
      %p402 = pneg %p55
      %p403 = scmp.lt.s32.totalorder %s27, 1
      %s404 = scalar_select %p403, %s27, 1
      %s405 = scalar_lea.vmem %s1, %s404
      %p406 = pneg %p84
      %p407 = pneg %p81
      %p408 = pneg %p105
      %p409 = pneg %p102
      %p410 = pneg %p126
      %p411 = pneg %p123
      %p412 = pneg %p147
      %p413 = pneg %p144
      %p414 = pneg %p168
      %p415 = pneg %p165
      %p416 = pneg %p189
      %p417 = pneg %p186
      %p418 = pneg %p210
      %p419 = pneg %p207
      %p420 = pneg %p231
      %p421 = pneg %p228
      %p422 = pneg %p252
      %p423 = pneg %p249
      %p424 = pneg %p273
      %p425 = pneg %p270
      %p426 = pneg %p294
      %p427 = pneg %p291
      %p428 = pneg %p322
      %p429 = pneg %p319
      %p430 = scmp.lt.s32.totalorder %s27, 1
      %s431 = scalar_select %p430, %s27, 1
      %p432 = scmp.lt.s32.totalorder %s28, 0
      %s433 = scalar_select %p432, %s28, 0
      %s434 = sadd.s32 %s433, %s431
      %s435 = smul.addr %s434, 8
      %s436 = scalar_lea.vmem %s12, %s435
      %p437 = scmp.lt.s32.totalorder %s27, 1
      %s438 = scalar_select %p437, %s27, 1
      %p439 = scmp.lt.s32.totalorder %s28, 0
      %s440 = scalar_select %p439, %s28, 0
      %s441 = sadd.s32 %s440, %s438
      %s442 = smul.addr %s441, 8
      %s443 = scalar_lea.vmem %s0, %s442
      %p444 = scmp.lt.s32.totalorder %s27, 1
      %s445 = scalar_select %p444, %s27, 1
      %s446 = scalar_lea.vmem %s1, %s445
      %p447 = scmp.lt.s32.totalorder %s27, 1
      %s448 = scalar_select %p447, %s27, 1
      %p449 = scmp.lt.s32.totalorder %s28, 0
      %s450 = scalar_select %p449, %s28, 0
      %s451 = sadd.s32 %s450, %s448
      %s452 = smul.addr %s451, 8
      %s453 = scalar_lea.vmem %s12, %s452
      %v455 = vld [vmem:[%s446] sm:$0x1]
      %v456 = vpack.c.bf16 %v455, %v455
      %v457 = vld [vmem:[%s2] sm:$0xf]
      %v458 = vld [vmem:[%s2 + $0x4] sm:$0xf]
      %v459 = vld [vmem:[%s2 + $0x8] sm:$0xf]
      %v460 = vld [vmem:[%s2 + $0xc] sm:$0xf]
      %v461 = vld [vmem:[%s3] sm:$0x1]
      %v466 = vunpack.c.l.b16 %v457
      %v467 = vunpack.c.l.b16 %v458
      %v468 = vunpack.c.l.b16 %v459
      %v469 = vunpack.c.l.b16 %v460
      %v470 = vpack.c.b16 %v467, %v466
      %v471 = vpack.c.b16 %v469, %v468
      %vm474 = vcmask 261120
      %v476 = vsel %vm474, %v456, 0
      %478 = vmatprep.subr.bf16.mxu0 0
      %479 = vmatpush1.bf16.msra.mxu0 %v470
      %480 = vmatprep.subr.bf16.mxu0 0
      %481 = vmatpush1.bf16.msra.mxu0 %v471
      %482 = vmatprep.subr.bf16.mxu0 0
      %483 = vmatpush1.bf16.msra.mxu0 0
      %484 = vmatprep.subr.bf16.mxu0 0
      %485 = vmatpush1.bf16.msra.mxu0 0
      %486 = vmatprep.subr.bf16.mxu0 0
      %487 = vmatpush1.bf16.msra.mxu0 0
      %488 = vmatprep.subr.bf16.mxu0 0
      %489 = vmatpush1.bf16.msra.mxu0 0
      %490 = vmatprep.subr.bf16.mxu0 0
      %491 = vmatpush1.bf16.msra.mxu0 0
      %492 = vmatprep.subr.bf16.mxu0 0
      %493 = vmatpush1.bf16.msra.mxu0 0
      %494 = vmatprep.subr.bf16.mxu0 0
      %495 = vmatpush1.bf16.msra.mxu0 0
      %496 = vmatprep.subr.bf16.mxu0 0
      %497 = vmatpush1.bf16.msra.mxu0 0
      %498 = vmatprep.subr.bf16.mxu0 0
      %499 = vmatpush1.bf16.msra.mxu0 0
      %500 = vmatprep.subr.bf16.mxu0 0
      %501 = vmatpush1.bf16.msra.mxu0 0
      %502 = vmatprep.subr.bf16.mxu0 0
      %503 = vmatpush1.bf16.msra.mxu0 0
      %504 = vmatprep.subr.bf16.mxu0 0
      %505 = vmatpush1.bf16.msra.mxu0 0
      %506 = vmatprep.subr.bf16.mxu0 0
      %507 = vmatpush1.bf16.msra.mxu0 0
      %508 = vmatprep.subr.bf16.mxu0 0
      %509 = vmatpush1.bf16.msra.mxu0 0
      %510 = vmatprep.mubr.bf16.mxu0 0
      %511 = vmatmul.mubr.bf16.gmra.mrb[0].mxu0 %v476
      %v512 = vpop.f32.mrb[0].mxu0
      %v513 = vadd.f32 %v461, %v512
      %v514 = vpop.f32.mrb[0].mxu0
      %v515 = vpop.f32.mrb[0].mxu0
      %v516 = vpop.f32.mrb[0].mxu0
      %517 = vdwg.mxu0
      %v518 = vpack.c.bf16 %v513, %v513
      %v519 = vld [vmem:[%s4] sm:$0xf]
      %v520 = vld [vmem:[%s4 + $0x4] sm:$0xf]
      %v521 = vld [vmem:[%s4 + $0x8] sm:$0xf]
      %v522 = vld [vmem:[%s4 + $0xc] sm:$0xf]
      %v523 = vld [vmem:[%s5] sm:$0x1]
      %v528 = vunpack.c.l.b16 %v519
      %v529 = vunpack.c.l.b16 %v520
      %v530 = vunpack.c.l.b16 %v521
      %v531 = vunpack.c.l.b16 %v522
      %v532 = vpack.c.b16 %v529, %v528
      %v533 = vpack.c.b16 %v531, %v530
      %v537 = vsel %vm474, %v518, 0
      %539 = vmatprep.subr.bf16.mxu0 0
      %540 = vmatpush1.bf16.msra.mxu0 %v532
      %541 = vmatprep.subr.bf16.mxu0 0
      %542 = vmatpush1.bf16.msra.mxu0 %v533
      %543 = vmatprep.subr.bf16.mxu0 0
      %544 = vmatpush1.bf16.msra.mxu0 0
      %545 = vmatprep.subr.bf16.mxu0 0
      %546 = vmatpush1.bf16.msra.mxu0 0
      %547 = vmatprep.subr.bf16.mxu0 0
      %548 = vmatpush1.bf16.msra.mxu0 0
      %549 = vmatprep.subr.bf16.mxu0 0
      %550 = vmatpush1.bf16.msra.mxu0 0
      %551 = vmatprep.subr.bf16.mxu0 0
      %552 = vmatpush1.bf16.msra.mxu0 0
      %553 = vmatprep.subr.bf16.mxu0 0
      %554 = vmatpush1.bf16.msra.mxu0 0
      %555 = vmatprep.subr.bf16.mxu0 0
      %556 = vmatpush1.bf16.msra.mxu0 0
      %557 = vmatprep.subr.bf16.mxu0 0
      %558 = vmatpush1.bf16.msra.mxu0 0
      %559 = vmatprep.subr.bf16.mxu0 0
      %560 = vmatpush1.bf16.msra.mxu0 0
      %561 = vmatprep.subr.bf16.mxu0 0
      %562 = vmatpush1.bf16.msra.mxu0 0
      %563 = vmatprep.subr.bf16.mxu0 0
      %564 = vmatpush1.bf16.msra.mxu0 0
      %565 = vmatprep.subr.bf16.mxu0 0
      %566 = vmatpush1.bf16.msra.mxu0 0
      %567 = vmatprep.subr.bf16.mxu0 0
      %568 = vmatpush1.bf16.msra.mxu0 0
      %569 = vmatprep.subr.bf16.mxu0 0
      %570 = vmatpush1.bf16.msra.mxu0 0
      %571 = vmatprep.mubr.bf16.mxu0 0
      %572 = vmatmul.mubr.bf16.gmra.mrb[0].mxu0 %v537
      %v573 = vpop.f32.mrb[0].mxu0
      %v574 = vadd.f32 %v523, %v573
      %v575 = vpop.f32.mrb[0].mxu0
      %v576 = vpop.f32.mrb[0].mxu0
      %v577 = vpop.f32.mrb[0].mxu0
      %578 = vdwg.mxu0
      %v579 = vld [vmem:[%s443] sm:$0xff]
      %v580 = vlaneseq
      %v581 = vshrl.u32 %v580, 7
      %v582 = vsub.s32 0, %v581
      %v583 = vrot.slane %v574, %v582
      %v584 = vadd.f32 %v579, %v583
      %v585 = vld [vmem:[%s6] sm:$0x1]
      %v586 = vld [vmem:[%s7] sm:$0x1]
      %v587 = vsel %vm474, %v584, 0.0
      %588 = vadd.xlane.f32.xlu0 %v587
      %v589 = vpop.xlane.xlu0 %588
      %v590 = vrcp.pop 32.0
      %v591 = vmul.f32 %v589, %v590
      %v592 = vsub.f32 %v584, %v591
      %v593 = vmul.f32 %v592, %v592
      %v594 = vsel %vm474, %v593, 0.0
      %595 = vadd.xlane.f32.xlu0 %v594
      %v596 = vpop.xlane.xlu0 %595
      %v597 = vmul.f32 %v596, %v590
      %v598 = vadd.f32 %v597, 1e-05
      %v599 = vrsqrt.pop %v598
      %v600 = vmul.f32 %v592, %v599
      %v602 = vlaneseq
      %v603 = vshrl.u32 %v602, 7
      %v604 = vsub.s32 0, %v603
      %v605 = vrot.slane %v585, %v604
      %v607 = vmul.f32 %v600, %v605
      %v609 = vlaneseq
      %v610 = vshrl.u32 %v609, 7
      %v611 = vsub.s32 0, %v610
      %v612 = vrot.slane %v586, %v611
      %v614 = vadd.f32 %v607, %v612
      %v615 = vpack.c.bf16 %v614, %v614
      %v616 = vld [vmem:[%s8] sm:$0xf]
      %v617 = vld [vmem:[%s8 + $0x4] sm:$0xf]
      %v618 = vld [vmem:[%s8 + $0x8] sm:$0xf]
      %v619 = vld [vmem:[%s8 + $0xc] sm:$0xf]
      %v620 = vld [vmem:[%s9] sm:$0x1]
      %v622 = vlaneseq
      %v623 = vshrl.u32 %v622, 7
      %v624 = vsub.s32 0, %v623
      %v625 = vrot.slane %v620, %v624
      %v631 = vunpack.c.l.b16 %v616
      %v632 = vunpack.c.l.b16 %v617
      %v633 = vunpack.c.l.b16 %v618
      %v634 = vunpack.c.l.b16 %v619
      %v635 = vpack.c.b16 %v632, %v631
      %v636 = vpack.c.b16 %v634, %v633
      %v640 = vsel %vm474, %v615, 0
      %642 = vmatprep.subr.bf16.mxu0 0
      %643 = vmatpush1.bf16.msra.mxu0 %v635
      %644 = vmatprep.subr.bf16.mxu0 0
      %645 = vmatpush1.bf16.msra.mxu0 %v636
      %646 = vmatprep.subr.bf16.mxu0 0
      %647 = vmatpush1.bf16.msra.mxu0 0
      %648 = vmatprep.subr.bf16.mxu0 0
      %649 = vmatpush1.bf16.msra.mxu0 0
      %650 = vmatprep.subr.bf16.mxu0 0
      %651 = vmatpush1.bf16.msra.mxu0 0
      %652 = vmatprep.subr.bf16.mxu0 0
      %653 = vmatpush1.bf16.msra.mxu0 0
      %654 = vmatprep.subr.bf16.mxu0 0
      %655 = vmatpush1.bf16.msra.mxu0 0
      %656 = vmatprep.subr.bf16.mxu0 0
      %657 = vmatpush1.bf16.msra.mxu0 0
      %658 = vmatprep.subr.bf16.mxu0 0
      %659 = vmatpush1.bf16.msra.mxu0 0
      %660 = vmatprep.subr.bf16.mxu0 0
      %661 = vmatpush1.bf16.msra.mxu0 0
      %662 = vmatprep.subr.bf16.mxu0 0
      %663 = vmatpush1.bf16.msra.mxu0 0
      %664 = vmatprep.subr.bf16.mxu0 0
      %665 = vmatpush1.bf16.msra.mxu0 0
      %666 = vmatprep.subr.bf16.mxu0 0
      %667 = vmatpush1.bf16.msra.mxu0 0
      %668 = vmatprep.subr.bf16.mxu0 0
      %669 = vmatpush1.bf16.msra.mxu0 0
      %670 = vmatprep.subr.bf16.mxu0 0
      %671 = vmatpush1.bf16.msra.mxu0 0
      %672 = vmatprep.subr.bf16.mxu0 0
      %673 = vmatpush1.bf16.msra.mxu0 0
      %674 = vmatprep.mubr.bf16.mxu0 0
      %675 = vmatmul.mubr.bf16.gmra.mrb[0].mxu0 %v640
      %v676 = vpop.f32.mrb[0].mxu0
      %v677 = vadd.f32 %v625, %v676
      %v678 = vpop.f32.mrb[0].mxu0
      %v679 = vpop.f32.mrb[0].mxu0
      %v680 = vpop.f32.mrb[0].mxu0
      %681 = vdwg.mxu0
      %v682 = vmul.f32 %v677, 0.5
      %v683 = vmul.f32 %v677, 0.70710677
      %vm684 = vcmp.ge.f32.partialorder %v683, 0.0
      %v685 = vsel %vm684, 1.0, -1.0
      %v686 = vand.u32 2147483647, %v683
      %v687 = vmul.f32 %v686, 0.3275911
      %v688 = vadd.f32 %v687, 1.0
      %v689 = vrcp.pop %v688
      %v690 = vmul.f32 1.0, %v689
      %v691 = vmul.f32 %v690, 1.0614054
      %v692 = vadd.f32 %v691, -1.4531521
      %v693 = vmul.f32 %v692, %v690
      %v694 = vadd.f32 %v693, 1.4214138
      %v695 = vmul.f32 %v694, %v690
      %v696 = vadd.f32 %v695, -0.28449672
      %v697 = vmul.f32 %v696, %v690
      %v698 = vadd.f32 %v697, 0.2548296
      %v699 = vmul.f32 %v698, %v690
      %v700 = vsub.f32 0.0, %v686
      %v701 = vmul.f32 %v700, %v686
      %v702 = vmul.f32 %v701, 1.442695
      %v703 = vpow.pop %v702
      %v704 = vmul.f32 %v699, %v703
      %v705 = vsub.f32 1.0, %v704
      %v706 = vmul.f32 %v685, %v705
      %v707 = vadd.f32 %v706, 1.0
      %v708 = vmul.f32 %v682, %v707
      %v709 = vpack.c.bf16 %v708, %v708
      %v710 = vld [vmem:[%s10] sm:$0xf]
      %v711 = vld [vmem:[%s10 + $0x4] sm:$0xf]
      %v712 = vld [vmem:[%s10 + $0x8] sm:$0xf]
      %v713 = vld [vmem:[%s10 + $0xc] sm:$0xf]
      %v714 = vld [vmem:[%s10 + $0x10] sm:$0xf]
      %v715 = vld [vmem:[%s10 + $0x14] sm:$0xf]
      %v716 = vld [vmem:[%s10 + $0x18] sm:$0xf]
      %v717 = vld [vmem:[%s10 + $0x1c] sm:$0xf]
      %v718 = vld [vmem:[%s10 + $0x20] sm:$0xf]
      %v719 = vld [vmem:[%s10 + $0x24] sm:$0xf]
      %v720 = vld [vmem:[%s10 + $0x28] sm:$0xf]
      %v721 = vld [vmem:[%s10 + $0x2c] sm:$0xf]
      %v722 = vld [vmem:[%s10 + $0x30] sm:$0xf]
      %v723 = vld [vmem:[%s10 + $0x34] sm:$0xf]
      %v724 = vld [vmem:[%s10 + $0x38] sm:$0xf]
      %v725 = vld [vmem:[%s10 + $0x3c] sm:$0xf]
      %v726 = vld [vmem:[%s11] sm:$0x1]
      %v728 = vlaneseq
      %v729 = vshrl.u32 %v728, 7
      %v730 = vsub.s32 0, %v729
      %v731 = vrot.slane %v726, %v730
      %v749 = vunpack.c.l.b16 %v710
      %v750 = vunpack.c.l.b16 %v711
      %v751 = vunpack.c.l.b16 %v712
      %v752 = vunpack.c.l.b16 %v713
      %v753 = vunpack.c.l.b16 %v714
      %v754 = vunpack.c.l.b16 %v715
      %v755 = vunpack.c.l.b16 %v716
      %v756 = vunpack.c.l.b16 %v717
      %v757 = vunpack.c.l.b16 %v718
      %v758 = vunpack.c.l.b16 %v719
      %v759 = vunpack.c.l.b16 %v720
      %v760 = vunpack.c.l.b16 %v721
      %v761 = vunpack.c.l.b16 %v722
      %v762 = vunpack.c.l.b16 %v723
      %v763 = vunpack.c.l.b16 %v724
      %v764 = vunpack.c.l.b16 %v725
      %v765 = vpack.c.b16 %v750, %v749
      %v766 = vpack.c.b16 %v752, %v751
      %v767 = vpack.c.b16 %v754, %v753
      %v768 = vpack.c.b16 %v756, %v755
      %v769 = vpack.c.b16 %v758, %v757
      %v770 = vpack.c.b16 %v760, %v759
      %v771 = vpack.c.b16 %v762, %v761
      %v772 = vpack.c.b16 %v764, %v763
      %781 = vmatprep.subr.bf16.mxu0 0
      %782 = vmatpush1.bf16.msra.mxu0 %v765
      %783 = vmatprep.subr.bf16.mxu0 0
      %784 = vmatpush1.bf16.msra.mxu0 %v766
      %785 = vmatprep.subr.bf16.mxu0 0
      %786 = vmatpush1.bf16.msra.mxu0 %v767
      %787 = vmatprep.subr.bf16.mxu0 0
      %788 = vmatpush1.bf16.msra.mxu0 %v768
      %789 = vmatprep.subr.bf16.mxu0 0
      %790 = vmatpush1.bf16.msra.mxu0 %v769
      %791 = vmatprep.subr.bf16.mxu0 0
      %792 = vmatpush1.bf16.msra.mxu0 %v770
      %793 = vmatprep.subr.bf16.mxu0 0
      %794 = vmatpush1.bf16.msra.mxu0 %v771
      %795 = vmatprep.subr.bf16.mxu0 0
      %796 = vmatpush1.bf16.msra.mxu0 %v772
      %797 = vmatprep.subr.bf16.mxu0 0
      %798 = vmatpush1.bf16.msra.mxu0 0
      %799 = vmatprep.subr.bf16.mxu0 0
      %800 = vmatpush1.bf16.msra.mxu0 0
      %801 = vmatprep.subr.bf16.mxu0 0
      %802 = vmatpush1.bf16.msra.mxu0 0
      %803 = vmatprep.subr.bf16.mxu0 0
      %804 = vmatpush1.bf16.msra.mxu0 0
      %805 = vmatprep.subr.bf16.mxu0 0
      %806 = vmatpush1.bf16.msra.mxu0 0
      %807 = vmatprep.subr.bf16.mxu0 0
      %808 = vmatpush1.bf16.msra.mxu0 0
      %809 = vmatprep.subr.bf16.mxu0 0
      %810 = vmatpush1.bf16.msra.mxu0 0
      %811 = vmatprep.subr.bf16.mxu0 0
      %812 = vmatpush1.bf16.msra.mxu0 0
      %813 = vmatprep.mubr.bf16.mxu0 0
      %814 = vmatmul.mubr.bf16.gmra.mrb[0].mxu0 %v709
      %v815 = vpop.f32.mrb[0].mxu0
      %v816 = vadd.f32 %v731, %v815
      %v817 = vpop.f32.mrb[0].mxu0
      %v818 = vpop.f32.mrb[0].mxu0
      %v819 = vpop.f32.mrb[0].mxu0
      %820 = vdwg.mxu0
      %v821 = vadd.f32 %v584, %v816
      %822 = vst.msk [vmem:[%s453] sm:$0xff] %vm474, %v821
      %p823 = scmp.lt.s32.totalorder %s27, 1
      %s824 = scalar_select %p823, %s27, 1
      %p825 = scmp.lt.s32.totalorder %s28, 0
      %s826 = scalar_select %p825, %s28, 0
      %s827 = sadd.s32 %s826, %s824
      %s828 = smul.addr %s827, 8
      %s829 = scalar_lea.vmem %s12, %s828
      // Predicated region
      $region69: #{transformer_formula_encoder.8} parent=67 // pred_check
        %p830 = pneg %p319
      $region70: #{transformer_formula_encoder.8} parent=67 // pred_check_branch
        %832 = sbr.rel (%p830) target = $region72
      $region71: #{transformer_formula_encoder.8} parent=67 // pred_region
        _
      $region72: #{transformer_formula_encoder.8} parent=67 // pred_fallthru
        _
    $region68: #{transformer_formula_encoder.8} parent=5 // pred_fallthru
      _
    %p833 = scmp.le.s32.totalorder 2, %s18
    // Predicated region
    $region73: #{transformer_formula_encoder.8} parent=5 // pred_check
      %p834 = pneg %p833
    $region74: #{transformer_formula_encoder.8} parent=5 // pred_check_branch
      %836 = sbr.rel (%p834) target = $region76
    $region75: #{transformer_formula_encoder.8} parent=5 // pred_region
      %s837 = ssub.s32 %s18, 2
      // Predicated region
      $region77: #{transformer_formula_encoder.8} parent=75 // pred_check
        %p838 = pneg %p325
      $region78: #{transformer_formula_encoder.8} parent=75 // pred_check_branch
        %840 = sbr.rel (%p838) target = $region80
      $region79: #{transformer_formula_encoder.8} parent=75 // pred_region
        %p841 = scmp.lt.s32.totalorder %s29, 1
        %s842 = scalar_select %p841, %s29, 1
        %p843 = scmp.lt.s32.totalorder %s30, 0
        %s844 = scalar_select %p843, %s30, 0
        %s845 = sadd.s32 %s844, %s842
        %s846 = smul.addr %s845, 8
        %s847 = scalar_lea.vmem %s12, %s846
      $region80: #{transformer_formula_encoder.8} parent=75 // pred_fallthru
        _
    $region76: #{transformer_formula_encoder.8} parent=5 // pred_fallthru
      _
  $region6: #{transformer_formula_encoder.8} parent=0 // loop_footer
    %s22 = sadd.s32 1, %s18
  $region7: #{transformer_formula_encoder.8} parent=0 // loop_footer_branch
    %17 = sbr.rel target = $region3
  $region8: #{transformer_formula_encoder.8} parent=0 // loop_exit
    _

// kernel: transformer_formula_encoder.6
$region0: #{transformer_formula_encoder.6}
  #allocation0 [shape = 'u32[]', space=smem, size = 0x4, offset = 0x4, fixed_abs, tag = 'smem constant byte address 0x4 - core index']
  #allocation1 [shape = 'u32[144,128]{1,0:T(1,128)}', space=vmem, size = 0x12000, scoped, tag = 'internal scratch']
  #allocation2 [shape = 'f32[1,1]{1,0:T(1,128)S(6)}', space=smem, size = 0x200, scoped, tag = 'scoped memory for transformer_formula_encoder.6']
  %s0 = inlined_call_operand.vmem [shape: f32[2,8,32], index: 0, kind: input, shape index: {}]
  %s1 = inlined_call_operand.vmem [shape: f32[2,8,8], index: 1, kind: input, shape index: {}]
  %s2 = inlined_call_operand.vmem [shape: bf16[2,12,64], index: 2, kind: input, shape index: {}]
  %s3 = inlined_call_operand.vmem [shape: f32[1,32], index: 3, kind: input, shape index: {}]
  %s4 = inlined_call_operand.vmem [shape: f32[1,32], index: 4, kind: input, shape index: {}]
  %s5 = inlined_call_operand.vmem [shape: bf16[3,4,32,8], index: 5, kind: input, shape index: {}]
  %s6 = inlined_call_operand.vmem [shape: f32[3,4,1,8], index: 6, kind: input, shape index: {}]
  %s7 = inlined_call_operand.vmem [shape: bf16[8,12], index: 7, kind: input, shape index: {}]
  %s8 = inlined_call_operand.vmem [shape: bf16[4,8], index: 8, kind: input, shape index: {}]
  %s9 = inlined_call_operand.vmem [shape: bf16[4,8,32], index: 9, kind: input, shape index: {}]
  %s10 = inlined_call_operand.vmem [shape: f32[1,32], index: 10, kind: input, shape index: {}]
  %s11 = inlined_call_operand.<no memory space> [shape: f32[1,1], index: 11, kind: input, shape index: {}]
  %s12 = inlined_call_operand.vmem [shape: f32[2,8,32], index: 12, kind: output, shape index: {}]
  %s13 = sld [smem:[#allocation0]]
  $region81: #{transformer_formula_encoder.6} parent=0
    _
  %s15 = ssub.s32 1, %s13
  %s16 = scalar_select 0, %s15, %s13
  %17 = sst [smem:[#allocation2]] %s11
  loop: start=0, step=1, limit=4
  $region2: #{transformer_formula_encoder.6} parent=0 // loop_pre_header
    _
  $region3: #{transformer_formula_encoder.6} parent=0 // loop_header
    %s19 = sphi 0, %s23
    %p20 = scmp.ge.s32.totalorder %s19, 4
    %s29 = sphi 0, %s31
    %s32 = sphi 0, %s29
    %s33 = sphi 0, %s32
    %s49 = sphi 0, %s33
    %s55 = sphi 0, %s57
    %s58 = sphi 0, %s55
    %s59 = sphi 0, %s58
    %s75 = sphi 0, %s59
    %s81 = sphi 0, %s83
    %s84 = sphi 0, %s81
    %s85 = sphi 0, %s84
    %s101 = sphi 0, %s85
    %s105 = sphi 0, %s105
    %s107 = sphi 0, %s105
    %s108 = sphi 0, %s107
    %s122 = sphi 0, %s108
    %s126 = sphi 0, %s126
    %s128 = sphi 0, %s126
    %s129 = sphi 0, %s128
    %s143 = sphi 0, %s129
    %s147 = sphi 0, %s147
    %s149 = sphi 0, %s147
    %s150 = sphi 0, %s149
    %s164 = sphi 0, %s150
    %s168 = sphi 0, %s168
    %s170 = sphi 0, %s168
    %s171 = sphi 0, %s170
    %s185 = sphi 0, %s171
    %s189 = sphi 0, %s189
    %s191 = sphi 0, %s189
    %s192 = sphi 0, %s191
    %s206 = sphi 0, %s192
    %s210 = sphi 0, %s210
    %s212 = sphi 0, %s210
    %s213 = sphi 0, %s212
    %s227 = sphi 0, %s213
    %s231 = sphi 0, %s231
    %s233 = sphi 0, %s231
    %s234 = sphi 0, %s233
    %s248 = sphi 0, %s234
    %s252 = sphi 0, %s252
    %s254 = sphi 0, %s252
    %s255 = sphi 0, %s254
    %s269 = sphi 0, %s255
    %s273 = sphi 0, %s273
    %s275 = sphi 0, %s273
    %s276 = sphi 0, %s275
    %s290 = sphi 0, %s276
    %s296 = sphi 0, %s298
    %s299 = sphi 0, %s296
    %s300 = sphi 0, %s299
    %s316 = sphi 0, %s300
  $region4: #{transformer_formula_encoder.6} parent=0 // loop_header_branch
    %22 = sbr.rel (%p20) target = $region8
  $region5: #{transformer_formula_encoder.6} parent=0 // loop_body
    %s24 = ssub.s32 %s19, 1
    %s25 = ssub.s32 %s19, 2
    %s26 = sadd.s32 %s19, 1
    %s27 = ssub.s32 %s19, %s26
    %p28 = scmp.eq.s32.totalorder %s27, 0
    %s30 = sadd.s32 %s29, 1
    %s31 = scalar_select %p28, %s29, %s30
    %p34 = pneg %p28
    %p35 = scmp.eq.s32.totalorder %s19, 1
    %p36 = por %p34, %p35
    %p37 = scmp.ne.s32.totalorder %s29, %s32
    %p38 = scmp.eq.s32.totalorder %s19, 0
    %p39 = por %p37, %p38
    %p40 = scmp.ne.s32.totalorder %s29, %s32
    %p41 = scmp.eq.s32.totalorder %s24, 1
    %p42 = por %p40, %p41
    %p43 = scmp.ne.s32.totalorder %s32, %s33
    %p44 = scmp.eq.s32.totalorder %s24, 0
    %p45 = por %p43, %p44
    %p46 = scmp.ne.s32.totalorder %s32, %s33
    %p47 = scmp.eq.s32.totalorder %s25, 1
    %p48 = por %p46, %p47
    %p50 = scmp.ne.s32.totalorder %s33, %s49
    %p51 = scmp.eq.s32.totalorder %s25, 0
    %p52 = por %p50, %p51
    %s53 = ssub.s32 %s19, %s26
    %p54 = scmp.eq.s32.totalorder %s53, 0
    %s56 = sadd.s32 %s55, 1
    %s57 = scalar_select %p54, %s55, %s56
    %p60 = pneg %p54
    %p61 = scmp.eq.s32.totalorder %s19, 1
    %p62 = por %p60, %p61
    %p63 = scmp.ne.s32.totalorder %s55, %s58
    %p64 = scmp.eq.s32.totalorder %s19, 0
    %p65 = por %p63, %p64
    %p66 = scmp.ne.s32.totalorder %s55, %s58
    %p67 = scmp.eq.s32.totalorder %s24, 1
    %p68 = por %p66, %p67
    %p69 = scmp.ne.s32.totalorder %s58, %s59
    %p70 = scmp.eq.s32.totalorder %s24, 0
    %p71 = por %p69, %p70
    %p72 = scmp.ne.s32.totalorder %s58, %s59
    %p73 = scmp.eq.s32.totalorder %s25, 1
    %p74 = por %p72, %p73
    %p76 = scmp.ne.s32.totalorder %s59, %s75
    %p77 = scmp.eq.s32.totalorder %s25, 0
    %p78 = por %p76, %p77
    %s79 = ssub.s32 %s19, %s26
    %p80 = scmp.eq.s32.totalorder %s79, 0
    %s82 = sadd.s32 %s81, 1
    %s83 = scalar_select %p80, %s81, %s82
    %p86 = pneg %p80
    %p87 = scmp.eq.s32.totalorder %s19, 1
    %p88 = por %p86, %p87
    %p89 = scmp.ne.s32.totalorder %s81, %s84
    %p90 = scmp.eq.s32.totalorder %s19, 0
    %p91 = por %p89, %p90
    %p92 = scmp.ne.s32.totalorder %s81, %s84
    %p93 = scmp.eq.s32.totalorder %s24, 1
    %p94 = por %p92, %p93
    %p95 = scmp.ne.s32.totalorder %s84, %s85
    %p96 = scmp.eq.s32.totalorder %s24, 0
    %p97 = por %p95, %p96
    %p98 = scmp.ne.s32.totalorder %s84, %s85
    %p99 = scmp.eq.s32.totalorder %s25, 1
    %p100 = por %p98, %p99
    %p102 = scmp.ne.s32.totalorder %s85, %s101
    %p103 = scmp.eq.s32.totalorder %s25, 0
    %p104 = por %p102, %p103
    %s106 = sadd.s32 %s105, 1
    %p109 = scmp.eq.s32.totalorder %s19, 1
    %p110 = scmp.ne.s32.totalorder %s105, %s107
    %p111 = scmp.eq.s32.totalorder %s19, 0
    %p112 = por %p110, %p111
    %p113 = scmp.ne.s32.totalorder %s105, %s107
    %p114 = scmp.eq.s32.totalorder %s24, 1
    %p115 = por %p113, %p114
    %p116 = scmp.ne.s32.totalorder %s107, %s108
    %p117 = scmp.eq.s32.totalorder %s24, 0
    %p118 = por %p116, %p117
    %p119 = scmp.ne.s32.totalorder %s107, %s108
    %p120 = scmp.eq.s32.totalorder %s25, 1
    %p121 = por %p119, %p120
    %p123 = scmp.ne.s32.totalorder %s108, %s122
    %p124 = scmp.eq.s32.totalorder %s25, 0
    %p125 = por %p123, %p124
    %s127 = sadd.s32 %s126, 1
    %p130 = scmp.eq.s32.totalorder %s19, 1
    %p131 = scmp.ne.s32.totalorder %s126, %s128
    %p132 = scmp.eq.s32.totalorder %s19, 0
    %p133 = por %p131, %p132
    %p134 = scmp.ne.s32.totalorder %s126, %s128
    %p135 = scmp.eq.s32.totalorder %s24, 1
    %p136 = por %p134, %p135
    %p137 = scmp.ne.s32.totalorder %s128, %s129
    %p138 = scmp.eq.s32.totalorder %s24, 0
    %p139 = por %p137, %p138
    %p140 = scmp.ne.s32.totalorder %s128, %s129
    %p141 = scmp.eq.s32.totalorder %s25, 1
    %p142 = por %p140, %p141
    %p144 = scmp.ne.s32.totalorder %s129, %s143
    %p145 = scmp.eq.s32.totalorder %s25, 0
    %p146 = por %p144, %p145
    %s148 = sadd.s32 %s147, 1
    %p151 = scmp.eq.s32.totalorder %s19, 1
    %p152 = scmp.ne.s32.totalorder %s147, %s149
    %p153 = scmp.eq.s32.totalorder %s19, 0
    %p154 = por %p152, %p153
    %p155 = scmp.ne.s32.totalorder %s147, %s149
    %p156 = scmp.eq.s32.totalorder %s24, 1
    %p157 = por %p155, %p156
    %p158 = scmp.ne.s32.totalorder %s149, %s150
    %p159 = scmp.eq.s32.totalorder %s24, 0
    %p160 = por %p158, %p159
    %p161 = scmp.ne.s32.totalorder %s149, %s150
    %p162 = scmp.eq.s32.totalorder %s25, 1
    %p163 = por %p161, %p162
    %p165 = scmp.ne.s32.totalorder %s150, %s164
    %p166 = scmp.eq.s32.totalorder %s25, 0
    %p167 = por %p165, %p166
    %s169 = sadd.s32 %s168, 1
    %p172 = scmp.eq.s32.totalorder %s19, 1
    %p173 = scmp.ne.s32.totalorder %s168, %s170
    %p174 = scmp.eq.s32.totalorder %s19, 0
    %p175 = por %p173, %p174
    %p176 = scmp.ne.s32.totalorder %s168, %s170
    %p177 = scmp.eq.s32.totalorder %s24, 1
    %p178 = por %p176, %p177
    %p179 = scmp.ne.s32.totalorder %s170, %s171
    %p180 = scmp.eq.s32.totalorder %s24, 0
    %p181 = por %p179, %p180
    %p182 = scmp.ne.s32.totalorder %s170, %s171
    %p183 = scmp.eq.s32.totalorder %s25, 1
    %p184 = por %p182, %p183
    %p186 = scmp.ne.s32.totalorder %s171, %s185
    %p187 = scmp.eq.s32.totalorder %s25, 0
    %p188 = por %p186, %p187
    %s190 = sadd.s32 %s189, 1
    %p193 = scmp.eq.s32.totalorder %s19, 1
    %p194 = scmp.ne.s32.totalorder %s189, %s191
    %p195 = scmp.eq.s32.totalorder %s19, 0
    %p196 = por %p194, %p195
    %p197 = scmp.ne.s32.totalorder %s189, %s191
    %p198 = scmp.eq.s32.totalorder %s24, 1
    %p199 = por %p197, %p198
    %p200 = scmp.ne.s32.totalorder %s191, %s192
    %p201 = scmp.eq.s32.totalorder %s24, 0
    %p202 = por %p200, %p201
    %p203 = scmp.ne.s32.totalorder %s191, %s192
    %p204 = scmp.eq.s32.totalorder %s25, 1
    %p205 = por %p203, %p204
    %p207 = scmp.ne.s32.totalorder %s192, %s206
    %p208 = scmp.eq.s32.totalorder %s25, 0
    %p209 = por %p207, %p208
    %s211 = sadd.s32 %s210, 1
    %p214 = scmp.eq.s32.totalorder %s19, 1
    %p215 = scmp.ne.s32.totalorder %s210, %s212
    %p216 = scmp.eq.s32.totalorder %s19, 0
    %p217 = por %p215, %p216
    %p218 = scmp.ne.s32.totalorder %s210, %s212
    %p219 = scmp.eq.s32.totalorder %s24, 1
    %p220 = por %p218, %p219
    %p221 = scmp.ne.s32.totalorder %s212, %s213
    %p222 = scmp.eq.s32.totalorder %s24, 0
    %p223 = por %p221, %p222
    %p224 = scmp.ne.s32.totalorder %s212, %s213
    %p225 = scmp.eq.s32.totalorder %s25, 1
    %p226 = por %p224, %p225
    %p228 = scmp.ne.s32.totalorder %s213, %s227
    %p229 = scmp.eq.s32.totalorder %s25, 0
    %p230 = por %p228, %p229
    %s232 = sadd.s32 %s231, 1
    %p235 = scmp.eq.s32.totalorder %s19, 1
    %p236 = scmp.ne.s32.totalorder %s231, %s233
    %p237 = scmp.eq.s32.totalorder %s19, 0
    %p238 = por %p236, %p237
    %p239 = scmp.ne.s32.totalorder %s231, %s233
    %p240 = scmp.eq.s32.totalorder %s24, 1
    %p241 = por %p239, %p240
    %p242 = scmp.ne.s32.totalorder %s233, %s234
    %p243 = scmp.eq.s32.totalorder %s24, 0
    %p244 = por %p242, %p243
    %p245 = scmp.ne.s32.totalorder %s233, %s234
    %p246 = scmp.eq.s32.totalorder %s25, 1
    %p247 = por %p245, %p246
    %p249 = scmp.ne.s32.totalorder %s234, %s248
    %p250 = scmp.eq.s32.totalorder %s25, 0
    %p251 = por %p249, %p250
    %s253 = sadd.s32 %s252, 1
    %p256 = scmp.eq.s32.totalorder %s19, 1
    %p257 = scmp.ne.s32.totalorder %s252, %s254
    %p258 = scmp.eq.s32.totalorder %s19, 0
    %p259 = por %p257, %p258
    %p260 = scmp.ne.s32.totalorder %s252, %s254
    %p261 = scmp.eq.s32.totalorder %s24, 1
    %p262 = por %p260, %p261
    %p263 = scmp.ne.s32.totalorder %s254, %s255
    %p264 = scmp.eq.s32.totalorder %s24, 0
    %p265 = por %p263, %p264
    %p266 = scmp.ne.s32.totalorder %s254, %s255
    %p267 = scmp.eq.s32.totalorder %s25, 1
    %p268 = por %p266, %p267
    %p270 = scmp.ne.s32.totalorder %s255, %s269
    %p271 = scmp.eq.s32.totalorder %s25, 0
    %p272 = por %p270, %p271
    %s274 = sadd.s32 %s273, 1
    %p277 = scmp.eq.s32.totalorder %s19, 1
    %p278 = scmp.ne.s32.totalorder %s273, %s275
    %p279 = scmp.eq.s32.totalorder %s19, 0
    %p280 = por %p278, %p279
    %p281 = scmp.ne.s32.totalorder %s273, %s275
    %p282 = scmp.eq.s32.totalorder %s24, 1
    %p283 = por %p281, %p282
    %p284 = scmp.ne.s32.totalorder %s275, %s276
    %p285 = scmp.eq.s32.totalorder %s24, 0
    %p286 = por %p284, %p285
    %p287 = scmp.ne.s32.totalorder %s275, %s276
    %p288 = scmp.eq.s32.totalorder %s25, 1
    %p289 = por %p287, %p288
    %p291 = scmp.ne.s32.totalorder %s276, %s290
    %p292 = scmp.eq.s32.totalorder %s25, 0
    %p293 = por %p291, %p292
    %s294 = ssub.s32 %s19, %s26
    %p295 = scmp.eq.s32.totalorder %s294, 0
    %s297 = sadd.s32 %s296, 1
    %s298 = scalar_select %p295, %s296, %s297
    %p301 = pneg %p295
    %p302 = scmp.eq.s32.totalorder %s19, 1
    %p303 = por %p301, %p302
    %p304 = scmp.ne.s32.totalorder %s296, %s299
    %p305 = scmp.eq.s32.totalorder %s19, 0
    %p306 = por %p304, %p305
    %p307 = scmp.ne.s32.totalorder %s296, %s299
    %p308 = scmp.eq.s32.totalorder %s24, 1
    %p309 = por %p307, %p308
    %p310 = scmp.ne.s32.totalorder %s299, %s300
    %p311 = scmp.eq.s32.totalorder %s24, 0
    %p312 = por %p310, %p311
    %p313 = scmp.ne.s32.totalorder %s299, %s300
    %p314 = scmp.eq.s32.totalorder %s25, 1
    %p315 = por %p313, %p314
    %p317 = scmp.ne.s32.totalorder %s300, %s316
    %p318 = scmp.eq.s32.totalorder %s25, 0
    %p319 = por %p317, %p318
    %p320 = scmp.le.s32.totalorder 1, %s19
    %p321 = scmp.lt.s32.totalorder %s19, 3
    %p322 = pnand %p320, %p321
    %p323 = pneg %p322
    // Predicated region
    $region9: #{transformer_formula_encoder.6} parent=5 // pred_check
      _
    $region10: #{transformer_formula_encoder.6} parent=5 // pred_check_branch
      %325 = sbr.rel (%p322) target = $region12
    $region11: #{transformer_formula_encoder.6} parent=5 // pred_region
      %s326 = ssub.s32 %s19, 1
      // Predicated region
      $region13: #{transformer_formula_encoder.6} parent=11 // pred_check
        %p327 = pneg %p118
      $region14: #{transformer_formula_encoder.6} parent=11 // pred_check_branch
        %329 = sbr.rel (%p327) target = $region16
      $region15: #{transformer_formula_encoder.6} parent=11 // pred_region
        _
      $region16: #{transformer_formula_encoder.6} parent=11 // pred_fallthru
        _
      // Predicated region
      $region17: #{transformer_formula_encoder.6} parent=11 // pred_check
        %p330 = pneg %p139
      $region18: #{transformer_formula_encoder.6} parent=11 // pred_check_branch
        %332 = sbr.rel (%p330) target = $region20
      $region19: #{transformer_formula_encoder.6} parent=11 // pred_region
        _
      $region20: #{transformer_formula_encoder.6} parent=11 // pred_fallthru
        _
      // Predicated region
      $region21: #{transformer_formula_encoder.6} parent=11 // pred_check
        %p333 = pneg %p160
      $region22: #{transformer_formula_encoder.6} parent=11 // pred_check_branch
        %335 = sbr.rel (%p333) target = $region24
      $region23: #{transformer_formula_encoder.6} parent=11 // pred_region
        _
      $region24: #{transformer_formula_encoder.6} parent=11 // pred_fallthru
        _
      // Predicated region
      $region25: #{transformer_formula_encoder.6} parent=11 // pred_check
        %p336 = pneg %p181
      $region26: #{transformer_formula_encoder.6} parent=11 // pred_check_branch
        %338 = sbr.rel (%p336) target = $region28
      $region27: #{transformer_formula_encoder.6} parent=11 // pred_region
        _
      $region28: #{transformer_formula_encoder.6} parent=11 // pred_fallthru
        _
      // Predicated region
      $region29: #{transformer_formula_encoder.6} parent=11 // pred_check
        %p339 = pneg %p202
      $region30: #{transformer_formula_encoder.6} parent=11 // pred_check_branch
        %341 = sbr.rel (%p339) target = $region32
      $region31: #{transformer_formula_encoder.6} parent=11 // pred_region
        _
      $region32: #{transformer_formula_encoder.6} parent=11 // pred_fallthru
        _
      // Predicated region
      $region33: #{transformer_formula_encoder.6} parent=11 // pred_check
        %p342 = pneg %p223
      $region34: #{transformer_formula_encoder.6} parent=11 // pred_check_branch
        %344 = sbr.rel (%p342) target = $region36
      $region35: #{transformer_formula_encoder.6} parent=11 // pred_region
        _
      $region36: #{transformer_formula_encoder.6} parent=11 // pred_fallthru
        _
      // Predicated region
      $region37: #{transformer_formula_encoder.6} parent=11 // pred_check
        %p345 = pneg %p244
      $region38: #{transformer_formula_encoder.6} parent=11 // pred_check_branch
        %347 = sbr.rel (%p345) target = $region40
      $region39: #{transformer_formula_encoder.6} parent=11 // pred_region
        _
      $region40: #{transformer_formula_encoder.6} parent=11 // pred_fallthru
        _
      // Predicated region
      $region41: #{transformer_formula_encoder.6} parent=11 // pred_check
        %p348 = pneg %p265
      $region42: #{transformer_formula_encoder.6} parent=11 // pred_check_branch
        %350 = sbr.rel (%p348) target = $region44
      $region43: #{transformer_formula_encoder.6} parent=11 // pred_region
        _
      $region44: #{transformer_formula_encoder.6} parent=11 // pred_fallthru
        _
      // Predicated region
      $region45: #{transformer_formula_encoder.6} parent=11 // pred_check
        %p351 = pneg %p286
      $region46: #{transformer_formula_encoder.6} parent=11 // pred_check_branch
        %353 = sbr.rel (%p351) target = $region48
      $region47: #{transformer_formula_encoder.6} parent=11 // pred_region
        _
      $region48: #{transformer_formula_encoder.6} parent=11 // pred_fallthru
        _
    $region12: #{transformer_formula_encoder.6} parent=5 // pred_fallthru
      _
    %p354 = scmp.lt.s32.totalorder %s19, 2
    // Predicated region
    $region49: #{transformer_formula_encoder.6} parent=5 // pred_check
      %p355 = pneg %p354
    $region50: #{transformer_formula_encoder.6} parent=5 // pred_check_branch
      %357 = sbr.rel (%p355) target = $region52
    $region51: #{transformer_formula_encoder.6} parent=5 // pred_region
      // Predicated region
      $region53: #{transformer_formula_encoder.6} parent=51 // pred_check
        %p358 = pneg %p39
      $region54: #{transformer_formula_encoder.6} parent=51 // pred_check_branch
        %360 = sbr.rel (%p358) target = $region56
      $region55: #{transformer_formula_encoder.6} parent=51 // pred_region
        %p361 = scmp.lt.s32.totalorder %s19, 1
        %s362 = scalar_select %p361, %s19, 1
        %s363 = smul.addr %s362, 8
        %s364 = scalar_lea.vmem %s0, %s363
      $region56: #{transformer_formula_encoder.6} parent=51 // pred_fallthru
        _
      // Predicated region
      $region57: #{transformer_formula_encoder.6} parent=51 // pred_check
        %p365 = pneg %p65
      $region58: #{transformer_formula_encoder.6} parent=51 // pred_check_branch
        %367 = sbr.rel (%p365) target = $region60
      $region59: #{transformer_formula_encoder.6} parent=51 // pred_region
        %p368 = scmp.lt.s32.totalorder %s19, 1
        %s369 = scalar_select %p368, %s19, 1
        %s370 = smul.addr %s369, 8
        %s371 = scalar_lea.vmem %s1, %s370
      $region60: #{transformer_formula_encoder.6} parent=51 // pred_fallthru
        _
      // Predicated region
      $region61: #{transformer_formula_encoder.6} parent=51 // pred_check
        %p372 = pneg %p91
      $region62: #{transformer_formula_encoder.6} parent=51 // pred_check_branch
        %374 = sbr.rel (%p372) target = $region64
      $region63: #{transformer_formula_encoder.6} parent=51 // pred_region
        %p375 = scmp.lt.s32.totalorder %s19, 1
        %s376 = scalar_select %p375, %s19, 1
        %s377 = smul.addr %s376, 2
        %s378 = smul.addr %s377, 4
        %s379 = scalar_lea.vmem %s2, %s378
      $region64: #{transformer_formula_encoder.6} parent=51 // pred_fallthru
        _
    $region52: #{transformer_formula_encoder.6} parent=5 // pred_fallthru
      _
    %p380 = scmp.le.s32.totalorder 1, %s19
    %p381 = scmp.lt.s32.totalorder %s19, 3
    %p382 = pnand %p380, %p381
    %p383 = pneg %p382
    // Predicated region
    $region65: #{transformer_formula_encoder.6} parent=5 // pred_check
      _
    $region66: #{transformer_formula_encoder.6} parent=5 // pred_check_branch
      %385 = sbr.rel (%p382) target = $region68
    $region67: #{transformer_formula_encoder.6} parent=5 // pred_region
      %s386 = ssub.s32 %s19, 1
      %p387 = scmp.lt.s32.totalorder %s24, 1
      %s388 = scalar_select %p387, %s24, 1
      %s389 = smul.addr %s388, 8
      %s390 = scalar_lea.vmem %s0, %s389
      %p391 = pneg %p45
      %p392 = pneg %p42
      %p393 = scmp.lt.s32.totalorder %s24, 1
      %s394 = scalar_select %p393, %s24, 1
      %s395 = smul.addr %s394, 8
      %s396 = scalar_lea.vmem %s1, %s395
      %p397 = pneg %p71
      %p398 = pneg %p68
      %p399 = scmp.lt.s32.totalorder %s24, 1
      %s400 = scalar_select %p399, %s24, 1
      %s401 = smul.addr %s400, 2
      %s402 = smul.addr %s401, 4
      %s403 = scalar_lea.vmem %s2, %s402
      %p404 = pneg %p97
      %p405 = pneg %p94
      %p406 = pneg %p118
      %p407 = pneg %p115
      %p408 = pneg %p139
      %p409 = pneg %p136
      %p410 = pneg %p160
      %p411 = pneg %p157
      %p412 = pneg %p181
      %p413 = pneg %p178
      %p414 = pneg %p202
      %p415 = pneg %p199
      %p416 = pneg %p223
      %p417 = pneg %p220
      %p418 = pneg %p244
      %p419 = pneg %p241
      %p420 = pneg %p265
      %p421 = pneg %p262
      %p422 = pneg %p286
      %p423 = pneg %p283
      %p424 = pneg %p312
      %p425 = pneg %p309
      %p426 = scmp.lt.s32.totalorder %s24, 1
      %s427 = scalar_select %p426, %s24, 1
      %s428 = smul.addr %s427, 8
      %s429 = scalar_lea.vmem %s12, %s428
      %p430 = scmp.lt.s32.totalorder %s24, 1
      %s431 = scalar_select %p430, %s24, 1
      %s432 = smul.addr %s431, 8
      %s433 = scalar_lea.vmem %s0, %s432
      %p434 = scmp.lt.s32.totalorder %s24, 1
      %s435 = scalar_select %p434, %s24, 1
      %s436 = smul.addr %s435, 8
      %s437 = scalar_lea.vmem %s1, %s436
      %p438 = scmp.lt.s32.totalorder %s24, 1
      %s439 = scalar_select %p438, %s24, 1
      %s440 = smul.addr %s439, 2
      %s441 = smul.addr %s440, 4
      %s442 = scalar_lea.vmem %s2, %s441
      %p443 = scmp.lt.s32.totalorder %s24, 1
      %s444 = scalar_select %p443, %s24, 1
      %s445 = smul.addr %s444, 8
      %s446 = scalar_lea.vmem %s12, %s445
      %v448 = vld [vmem:[%s433] sm:$0xff]
      %v449 = vld [vmem:[%s437] sm:$0xff]
      %v450 = vld [vmem:[%s3] sm:$0x1]
      %v451 = vld [vmem:[%s4] sm:$0x1]
      %vm452 = vcmask 261120
      %v453 = vsel %vm452, %v448, 0.0
      %454 = vadd.xlane.f32.xlu0 %v453
      %v455 = vpop.xlane.xlu0 %454
      %v456 = vrcp.pop 32.0
      %v457 = vmul.f32 %v455, %v456
      %v458 = vsub.f32 %v448, %v457
      %v459 = vmul.f32 %v458, %v458
      %v460 = vsel %vm452, %v459, 0.0
      %461 = vadd.xlane.f32.xlu0 %v460
      %v462 = vpop.xlane.xlu0 %461
      %v463 = vmul.f32 %v462, %v456
      %v464 = vadd.f32 %v463, 1e-05
      %v465 = vrsqrt.pop %v464
      %v466 = vmul.f32 %v458, %v465
      %v468 = vlaneseq
      %v469 = vshrl.u32 %v468, 7
      %v470 = vsub.s32 0, %v469
      %v471 = vrot.slane %v450, %v470
      %v473 = vmul.f32 %v466, %v471
      %v475 = vlaneseq
      %v476 = vshrl.u32 %v475, 7
      %v477 = vsub.s32 0, %v476
      %v478 = vrot.slane %v451, %v477
      %v480 = vadd.f32 %v473, %v478
      %v481 = vpack.c.bf16 %v480, %v480
      %v482 = vld [vmem:[%s7] sm:$0xf]
      %v483 = vld [vmem:[%s442] sm:$0xf]
      %v484 = vld [vmem:[%s442 + $0x4] sm:$0x3]
      %v487 = vunpack.c.l.b16 %v483
      %v488 = vunpack.c.l.b16 %v484
      %v489 = vpack.c.b16 %v488, %v487
      %vm490 = vcmask 97280
      %v492 = vsel %vm490, %v482, 0
      %vm494 = vcmask 1045504
      %v496 = vsel %vm494, %v489, 0
      %498 = vmatprep.subr.bf16.mxu0 0
      %499 = vmatpush1.bf16.msra.mxu0 %v496
      %500 = vmatprep.subr.bf16.mxu0 0
      %501 = vmatpush1.bf16.msra.mxu0 0
      %502 = vmatprep.subr.bf16.mxu0 0
      %503 = vmatpush1.bf16.msra.mxu0 0
      %504 = vmatprep.subr.bf16.mxu0 0
      %505 = vmatpush1.bf16.msra.mxu0 0
      %506 = vmatprep.subr.bf16.mxu0 0
      %507 = vmatpush1.bf16.msra.mxu0 0
      %508 = vmatprep.subr.bf16.mxu0 0
      %509 = vmatpush1.bf16.msra.mxu0 0
      %510 = vmatprep.subr.bf16.mxu0 0
      %511 = vmatpush1.bf16.msra.mxu0 0
      %512 = vmatprep.subr.bf16.mxu0 0
      %513 = vmatpush1.bf16.msra.mxu0 0
      %514 = vmatprep.subr.bf16.mxu0 0
      %515 = vmatpush1.bf16.msra.mxu0 0
      %516 = vmatprep.subr.bf16.mxu0 0
      %517 = vmatpush1.bf16.msra.mxu0 0
      %518 = vmatprep.subr.bf16.mxu0 0
      %519 = vmatpush1.bf16.msra.mxu0 0
      %520 = vmatprep.subr.bf16.mxu0 0
      %521 = vmatpush1.bf16.msra.mxu0 0
      %522 = vmatprep.subr.bf16.mxu0 0
      %523 = vmatpush1.bf16.msra.mxu0 0
      %524 = vmatprep.subr.bf16.mxu0 0
      %525 = vmatpush1.bf16.msra.mxu0 0
      %526 = vmatprep.subr.bf16.mxu0 0
      %527 = vmatpush1.bf16.msra.mxu0 0
      %528 = vmatprep.subr.bf16.mxu0 0
      %529 = vmatpush1.bf16.msra.mxu0 0
      %530 = vmatprep.mubr.bf16.mxu0 0
      %531 = vmatmul.mubr.bf16.gmra.mrb[0].mxu0 %v492
      %v532 = vpop.f32.mrb[0].mxu0
      %v533 = vadd.f32 0.0, %v532
      %v534 = vpop.f32.mrb[0].mxu0
      %v535 = vpop.f32.mrb[0].mxu0
      %v536 = vpop.f32.mrb[0].mxu0
      %537 = vdwg.mxu0
      %v538 = vmul.f32 %v533, 0.5
      %v539 = vmul.f32 %v533, 0.70710677
      %vm540 = vcmp.ge.f32.partialorder %v539, 0.0
      %v541 = vsel %vm540, 1.0, -1.0
      %v542 = vand.u32 2147483647, %v539
      %v543 = vmul.f32 %v542, 0.3275911
      %v544 = vadd.f32 %v543, 1.0
      %v545 = vrcp.pop %v544
      %v546 = vmul.f32 1.0, %v545
      %v547 = vmul.f32 %v546, 1.0614054
      %v548 = vadd.f32 %v547, -1.4531521
      %v549 = vmul.f32 %v548, %v546
      %v550 = vadd.f32 %v549, 1.4214138
      %v551 = vmul.f32 %v550, %v546
      %v552 = vadd.f32 %v551, -0.28449672
      %v553 = vmul.f32 %v552, %v546
      %v554 = vadd.f32 %v553, 0.2548296
      %v555 = vmul.f32 %v554, %v546
      %v556 = vsub.f32 0.0, %v542
      %v557 = vmul.f32 %v556, %v542
      %v558 = vmul.f32 %v557, 1.442695
      %v559 = vpow.pop %v558
      %v560 = vmul.f32 %v555, %v559
      %v561 = vsub.f32 1.0, %v560
      %v562 = vmul.f32 %v541, %v561
      %v563 = vadd.f32 %v562, 1.0
      %v564 = vmul.f32 %v538, %v563
      %v565 = vpack.c.bf16 %v564, %v564
      %v566 = vld [vmem:[%s8] sm:$0x3]
      %vm567 = vcmask 64512
      %v569 = vsel %vm567, %v566, 0
      %vm571 = vcmask 1043456
      %v573 = vsel %vm571, %v565, 0
      %575 = vmatprep.subr.bf16.mxu0 0
      %576 = vmatpush1.bf16.msra.mxu0 %v573
      %577 = vmatprep.subr.bf16.mxu0 0
      %578 = vmatpush1.bf16.msra.mxu0 0
      %579 = vmatprep.subr.bf16.mxu0 0
      %580 = vmatpush1.bf16.msra.mxu0 0
      %581 = vmatprep.subr.bf16.mxu0 0
      %582 = vmatpush1.bf16.msra.mxu0 0
      %583 = vmatprep.subr.bf16.mxu0 0
      %584 = vmatpush1.bf16.msra.mxu0 0
      %585 = vmatprep.subr.bf16.mxu0 0
      %586 = vmatpush1.bf16.msra.mxu0 0
      %587 = vmatprep.subr.bf16.mxu0 0
      %588 = vmatpush1.bf16.msra.mxu0 0
      %589 = vmatprep.subr.bf16.mxu0 0
      %590 = vmatpush1.bf16.msra.mxu0 0
      %591 = vmatprep.subr.bf16.mxu0 0
      %592 = vmatpush1.bf16.msra.mxu0 0
      %593 = vmatprep.subr.bf16.mxu0 0
      %594 = vmatpush1.bf16.msra.mxu0 0
      %595 = vmatprep.subr.bf16.mxu0 0
      %596 = vmatpush1.bf16.msra.mxu0 0
      %597 = vmatprep.subr.bf16.mxu0 0
      %598 = vmatpush1.bf16.msra.mxu0 0
      %599 = vmatprep.subr.bf16.mxu0 0
      %600 = vmatpush1.bf16.msra.mxu0 0
      %601 = vmatprep.subr.bf16.mxu0 0
      %602 = vmatpush1.bf16.msra.mxu0 0
      %603 = vmatprep.subr.bf16.mxu0 0
      %604 = vmatpush1.bf16.msra.mxu0 0
      %605 = vmatprep.subr.bf16.mxu0 0
      %606 = vmatpush1.bf16.msra.mxu0 0
      %607 = vmatprep.mubr.bf16.mxu0 0
      %608 = vmatmul.mubr.bf16.gmra.mrb[0].mxu0 %v569
      %v609 = vpop.f32.mrb[0].mxu0
      %v610 = vadd.f32 0.0, %v609
      %v611 = vpop.f32.mrb[0].mxu0
      %v612 = vpop.f32.mrb[0].mxu0
      %v613 = vpop.f32.mrb[0].mxu0
      %614 = vdwg.mxu0
      %s615 = sld [smem:[#allocation2]]
      %v616 = vstv %s615
      %v617 = vmul.f32 %v610, %v616
      %619 = vrot.lane.b32.xlu0 %v617, 120
      %v620 = vpop.permute.xlu0 %619
      %622 = vrot.lane.b32.xlu0 %v617, 112
      %v623 = vpop.permute.xlu0 %622
      %625 = vrot.lane.b32.xlu0 %v617, 104
      %v626 = vpop.permute.xlu0 %625
      %628 = vrot.lane.b32.xlu0 %v617, 96
      %v629 = vpop.permute.xlu0 %628
      %631 = vrot.lane.b32.xlu0 %v617, 88
      %v632 = vpop.permute.xlu0 %631
      %634 = vrot.lane.b32.xlu0 %v617, 80
      %v635 = vpop.permute.xlu0 %634
      %637 = vrot.lane.b32.xlu0 %v617, 72
      %v638 = vpop.permute.xlu0 %637
      %v640 = vcombine.low %v617, %v623
      %v642 = vunpack.c.l.s4 1983009808
      %v643 = vunpack.c.0.s8 %v642
      %v644 = vlaneseq
      %v645 = vshrl.u32 %v644, 7
      %v646 = vsub.s32 %v643, %v645
      %v647 = vrot.slane %v640, %v646
      %v648 = vcombine.low %v620, %v626
      %v650 = vunpack.c.l.s4 1983009808
      %v651 = vunpack.c.0.s8 %v650
      %v652 = vlaneseq
      %v653 = vshrl.u32 %v652, 7
      %v654 = vsub.s32 %v651, %v653
      %v655 = vrot.slane %v648, %v654
      %v656 = vcombine.low %v629, %v635
      %v658 = vunpack.c.l.s4 1983009808
      %v659 = vunpack.c.0.s8 %v658
      %v660 = vlaneseq
      %v661 = vshrl.u32 %v660, 7
      %v662 = vsub.s32 %v659, %v661
      %v663 = vrot.slane %v656, %v662
      %v664 = vcombine.low %v632, %v638
      %v666 = vunpack.c.l.s4 1983009808
      %v667 = vunpack.c.0.s8 %v666
      %v668 = vlaneseq
      %v669 = vshrl.u32 %v668, 7
      %v670 = vsub.s32 %v667, %v669
      %v671 = vrot.slane %v664, %v670
      %v672 = vcombine.low %v647, %v655
      %v673 = vcombine.high %v647, %v655
      %v675 = vunpack.c.l.s4 1934713408
      %v676 = vunpack.c.0.s8 %v675
      %v677 = vlaneseq
      %v678 = vshrl.u32 %v677, 7
      %v679 = vsub.s32 %v676, %v678
      %v680 = vrot.slane %v672, %v679
      %v682 = vunpack.c.l.s4 1934713408
      %v683 = vunpack.c.0.s8 %v682
      %v684 = vlaneseq
      %v685 = vshrl.u32 %v684, 7
      %v686 = vsub.s32 %v683, %v685
      %v687 = vrot.slane %v673, %v686
      %v688 = vcombine.low %v663, %v671
      %v689 = vcombine.high %v663, %v671
      %v691 = vunpack.c.l.s4 1934713408
      %v692 = vunpack.c.0.s8 %v691
      %v693 = vlaneseq
      %v694 = vshrl.u32 %v693, 7
      %v695 = vsub.s32 %v692, %v694
      %v696 = vrot.slane %v688, %v695
      %v698 = vunpack.c.l.s4 1934713408
      %v699 = vunpack.c.0.s8 %v698
      %v700 = vlaneseq
      %v701 = vshrl.u32 %v700, 7
      %v702 = vsub.s32 %v699, %v701
      %v703 = vrot.slane %v689, %v702
      %v704 = vcombine.low %v680, %v696
      %v705 = vcombine.high %v680, %v696
      %v706 = vcombine.low %v687, %v703
      %v707 = vcombine.high %v687, %v703
      %v708 = vld [vmem:[%s5] sm:$0xf]
      %v709 = vld [vmem:[%s5 + $0x4] sm:$0xf]
      %v710 = vld [vmem:[%s5 + $0x8] sm:$0xf]
      %v711 = vld [vmem:[%s5 + $0xc] sm:$0xf]
      %v712 = vld [vmem:[%s6] sm:$0x1]
      %v714 = vlaneseq
      %v715 = vshrl.u32 %v714, 7
      %v716 = vsub.s32 0, %v715
      %v717 = vrot.slane %v712, %v716
      %v723 = vunpack.c.l.b16 %v708
      %v724 = vunpack.c.l.b16 %v709
      %v725 = vunpack.c.l.b16 %v710
      %v726 = vunpack.c.l.b16 %v711
      %v727 = vpack.c.b16 %v724, %v723
      %v728 = vpack.c.b16 %v726, %v725
      %v732 = vsel %vm452, %v481, 0
      %734 = vmatprep.subr.bf16.mxu0 0
      %735 = vmatpush1.bf16.msra.mxu0 %v727
      %736 = vmatprep.subr.bf16.mxu0 0
      %737 = vmatpush1.bf16.msra.mxu0 %v728
      %738 = vmatprep.subr.bf16.mxu0 0
      %739 = vmatpush1.bf16.msra.mxu0 0
      %740 = vmatprep.subr.bf16.mxu0 0
      %741 = vmatpush1.bf16.msra.mxu0 0
      %742 = vmatprep.subr.bf16.mxu0 0
      %743 = vmatpush1.bf16.msra.mxu0 0
      %744 = vmatprep.subr.bf16.mxu0 0
      %745 = vmatpush1.bf16.msra.mxu0 0
      %746 = vmatprep.subr.bf16.mxu0 0
      %747 = vmatpush1.bf16.msra.mxu0 0
      %748 = vmatprep.subr.bf16.mxu0 0
      %749 = vmatpush1.bf16.msra.mxu0 0
      %750 = vmatprep.subr.bf16.mxu0 0
      %751 = vmatpush1.bf16.msra.mxu0 0
      %752 = vmatprep.subr.bf16.mxu0 0
      %753 = vmatpush1.bf16.msra.mxu0 0
      %754 = vmatprep.subr.bf16.mxu0 0
      %755 = vmatpush1.bf16.msra.mxu0 0
      %756 = vmatprep.subr.bf16.mxu0 0
      %757 = vmatpush1.bf16.msra.mxu0 0
      %758 = vmatprep.subr.bf16.mxu0 0
      %759 = vmatpush1.bf16.msra.mxu0 0
      %760 = vmatprep.subr.bf16.mxu0 0
      %761 = vmatpush1.bf16.msra.mxu0 0
      %762 = vmatprep.subr.bf16.mxu0 0
      %763 = vmatpush1.bf16.msra.mxu0 0
      %764 = vmatprep.subr.bf16.mxu0 0
      %765 = vmatpush1.bf16.msra.mxu0 0
      %766 = vmatprep.mubr.bf16.mxu0 0
      %767 = vmatmul.mubr.bf16.gmra.mrb[0].mxu0 %v732
      %v768 = vpop.f32.mrb[0].mxu0
      %v769 = vadd.f32 %v717, %v768
      %v770 = vpop.f32.mrb[0].mxu0
      %v771 = vpop.f32.mrb[0].mxu0
      %v772 = vpop.f32.mrb[0].mxu0
      %773 = vdwg.mxu0
      %s774 = scalar_lea.vmem %s5, 64
      %v775 = vld [vmem:[%s774] sm:$0xf]
      %v776 = vld [vmem:[%s774 + $0x4] sm:$0xf]
      %v777 = vld [vmem:[%s774 + $0x8] sm:$0xf]
      %v778 = vld [vmem:[%s774 + $0xc] sm:$0xf]
      %s779 = scalar_lea.vmem %s6, 4
      %v780 = vld [vmem:[%s779] sm:$0x1]
      %v782 = vlaneseq
      %v783 = vshrl.u32 %v782, 7
      %v784 = vsub.s32 0, %v783
      %v785 = vrot.slane %v780, %v784
      %v791 = vunpack.c.l.b16 %v775
      %v792 = vunpack.c.l.b16 %v776
      %v793 = vunpack.c.l.b16 %v777
      %v794 = vunpack.c.l.b16 %v778
      %v795 = vpack.c.b16 %v792, %v791
      %v796 = vpack.c.b16 %v794, %v793
      %799 = vmatprep.subr.bf16.mxu0 0
      %800 = vmatpush1.bf16.msra.mxu0 %v795
      %801 = vmatprep.subr.bf16.mxu0 0
      %802 = vmatpush1.bf16.msra.mxu0 %v796
      %803 = vmatprep.subr.bf16.mxu0 0
      %804 = vmatpush1.bf16.msra.mxu0 0
      %805 = vmatprep.subr.bf16.mxu0 0
      %806 = vmatpush1.bf16.msra.mxu0 0
      %807 = vmatprep.subr.bf16.mxu0 0
      %808 = vmatpush1.bf16.msra.mxu0 0
      %809 = vmatprep.subr.bf16.mxu0 0
      %810 = vmatpush1.bf16.msra.mxu0 0
      %811 = vmatprep.subr.bf16.mxu0 0
      %812 = vmatpush1.bf16.msra.mxu0 0
      %813 = vmatprep.subr.bf16.mxu0 0
      %814 = vmatpush1.bf16.msra.mxu0 0
      %815 = vmatprep.subr.bf16.mxu0 0
      %816 = vmatpush1.bf16.msra.mxu0 0
      %817 = vmatprep.subr.bf16.mxu0 0
      %818 = vmatpush1.bf16.msra.mxu0 0
      %819 = vmatprep.subr.bf16.mxu0 0
      %820 = vmatpush1.bf16.msra.mxu0 0
      %821 = vmatprep.subr.bf16.mxu0 0
      %822 = vmatpush1.bf16.msra.mxu0 0
      %823 = vmatprep.subr.bf16.mxu0 0
      %824 = vmatpush1.bf16.msra.mxu0 0
      %825 = vmatprep.subr.bf16.mxu0 0
      %826 = vmatpush1.bf16.msra.mxu0 0
      %827 = vmatprep.subr.bf16.mxu0 0
      %828 = vmatpush1.bf16.msra.mxu0 0
      %829 = vmatprep.subr.bf16.mxu0 0
      %830 = vmatpush1.bf16.msra.mxu0 0
      %831 = vmatprep.mubr.bf16.mxu0 0
      %832 = vmatmul.mubr.bf16.gmra.mrb[0].mxu0 %v732
      %v833 = vpop.f32.mrb[0].mxu0
      %v834 = vadd.f32 %v785, %v833
      %v835 = vpop.f32.mrb[0].mxu0
      %v836 = vpop.f32.mrb[0].mxu0
      %v837 = vpop.f32.mrb[0].mxu0
      %838 = vdwg.mxu0
      %s839 = scalar_lea.vmem %s5, 128
      %v840 = vld [vmem:[%s839] sm:$0xf]
      %v841 = vld [vmem:[%s839 + $0x4] sm:$0xf]
      %v842 = vld [vmem:[%s839 + $0x8] sm:$0xf]
      %v843 = vld [vmem:[%s839 + $0xc] sm:$0xf]
      %s844 = scalar_lea.vmem %s6, 8
      %v845 = vld [vmem:[%s844] sm:$0x1]
      %v847 = vlaneseq
      %v848 = vshrl.u32 %v847, 7
      %v849 = vsub.s32 0, %v848
      %v850 = vrot.slane %v845, %v849
      %v856 = vunpack.c.l.b16 %v840
      %v857 = vunpack.c.l.b16 %v841
      %v858 = vunpack.c.l.b16 %v842
      %v859 = vunpack.c.l.b16 %v843
      %v860 = vpack.c.b16 %v857, %v856
      %v861 = vpack.c.b16 %v859, %v858
      %864 = vmatprep.subr.bf16.mxu0 0
      %865 = vmatpush1.bf16.msra.mxu0 %v860
      %866 = vmatprep.subr.bf16.mxu0 0
      %867 = vmatpush1.bf16.msra.mxu0 %v861
      %868 = vmatprep.subr.bf16.mxu0 0
      %869 = vmatpush1.bf16.msra.mxu0 0
      %870 = vmatprep.subr.bf16.mxu0 0
      %871 = vmatpush1.bf16.msra.mxu0 0
      %872 = vmatprep.subr.bf16.mxu0 0
      %873 = vmatpush1.bf16.msra.mxu0 0
      %874 = vmatprep.subr.bf16.mxu0 0
      %875 = vmatpush1.bf16.msra.mxu0 0
      %876 = vmatprep.subr.bf16.mxu0 0
      %877 = vmatpush1.bf16.msra.mxu0 0
      %878 = vmatprep.subr.bf16.mxu0 0
      %879 = vmatpush1.bf16.msra.mxu0 0
      %880 = vmatprep.subr.bf16.mxu0 0
      %881 = vmatpush1.bf16.msra.mxu0 0
      %882 = vmatprep.subr.bf16.mxu0 0
      %883 = vmatpush1.bf16.msra.mxu0 0
      %884 = vmatprep.subr.bf16.mxu0 0
      %885 = vmatpush1.bf16.msra.mxu0 0
      %886 = vmatprep.subr.bf16.mxu0 0
      %887 = vmatpush1.bf16.msra.mxu0 0
      %888 = vmatprep.subr.bf16.mxu0 0
      %889 = vmatpush1.bf16.msra.mxu0 0
      %890 = vmatprep.subr.bf16.mxu0 0
      %891 = vmatpush1.bf16.msra.mxu0 0
      %892 = vmatprep.subr.bf16.mxu0 0
      %893 = vmatpush1.bf16.msra.mxu0 0
      %894 = vmatprep.subr.bf16.mxu0 0
      %895 = vmatpush1.bf16.msra.mxu0 0
      %896 = vmatprep.mubr.bf16.mxu0 0
      %897 = vmatmul.mubr.bf16.gmra.mrb[0].mxu0 %v732
      %v898 = vpop.f32.mrb[0].mxu0
      %v899 = vadd.f32 %v850, %v898
      %v900 = vpop.f32.mrb[0].mxu0
      %v901 = vpop.f32.mrb[0].mxu0
      %v902 = vpop.f32.mrb[0].mxu0
      %903 = vdwg.mxu0
      %v904 = vpack.c.bf16 %v769, %v769
      %v905 = vpack.c.bf16 %v834, %v834
      %v907 = vsel %vm567, %v904, 0
      %v910 = vsel %vm567, %v905, 0
      %912 = vmatprep.subr.bf16.mxu0 0
      %913 = vmatpush1.bf16.xpose.msra.mxu0 %v910
      %914 = vmatprep.subr.bf16.mxu0 0
      %915 = vmatpush1.bf16.xpose.msra.mxu0 0
      %916 = vmatprep.subr.bf16.mxu0 0
      %917 = vmatpush1.bf16.xpose.msra.mxu0 0
      %918 = vmatprep.subr.bf16.mxu0 0
      %919 = vmatpush1.bf16.xpose.msra.mxu0 0
      %920 = vmatprep.subr.bf16.mxu0 0
      %921 = vmatpush1.bf16.xpose.msra.mxu0 0
      %922 = vmatprep.subr.bf16.mxu0 0
      %923 = vmatpush1.bf16.xpose.msra.mxu0 0
      %924 = vmatprep.subr.bf16.mxu0 0
      %925 = vmatpush1.bf16.xpose.msra.mxu0 0
      %926 = vmatprep.subr.bf16.mxu0 0
      %927 = vmatpush1.bf16.xpose.msra.mxu0 0
      %928 = vmatprep.subr.bf16.mxu0 0
      %929 = vmatpush1.bf16.xpose.msra.mxu0 0
      %930 = vmatprep.subr.bf16.mxu0 0
      %931 = vmatpush1.bf16.xpose.msra.mxu0 0
      %932 = vmatprep.subr.bf16.mxu0 0
      %933 = vmatpush1.bf16.xpose.msra.mxu0 0
      %934 = vmatprep.subr.bf16.mxu0 0
      %935 = vmatpush1.bf16.xpose.msra.mxu0 0
      %936 = vmatprep.subr.bf16.mxu0 0
      %937 = vmatpush1.bf16.xpose.msra.mxu0 0
      %938 = vmatprep.subr.bf16.mxu0 0
      %939 = vmatpush1.bf16.xpose.msra.mxu0 0
      %940 = vmatprep.subr.bf16.mxu0 0
      %941 = vmatpush1.bf16.xpose.msra.mxu0 0
      %942 = vmatprep.subr.bf16.mxu0 0
      %943 = vmatpush1.bf16.xpose.msra.mxu0 0
      %944 = vmatprep.mubr.bf16.mxu0 0
      %945 = vmatmul.mubr.bf16.gmra.mrb[0].mxu0 %v907
      %v946 = vpop.f32.mrb[0].mxu0
      %v947 = vadd.f32 0.0, %v946
      %v948 = vpop.f32.mrb[0].mxu0
      %v949 = vpop.f32.mrb[0].mxu0
      %v950 = vpop.f32.mrb[0].mxu0
      %951 = vdwg.mxu0
      %v952 = vmul.f32 %v947, 0.35355338
      %vm953 = vcmp.eq.f32.partialorder %v449, 0.0
      %v954 = vsel %vm953, -1e+09, %v952
      %v955 = vsel %vm567, %v954, -inf
      %956 = vmax.xlane.f32.xlu0 %v955
      %v957 = vpop.xlane.xlu0 %956
      %v958 = vsub.f32 %v954, %v957
      %v959 = vmul.f32 %v958, 1.442695
      %v960 = vpow.pop %v959
      %v961 = vsel %vm567, %v960, 0.0
      %962 = vadd.xlane.f32.xlu0 %v961
      %v963 = vpop.xlane.xlu0 %962
      %v964 = vrcp.pop %v963
      %v965 = vmul.f32 %v960, %v964
      %v966 = vadd.f32 %v965, %v704
      %v967 = vpack.c.bf16 %v966, %v966
      %v968 = vpack.c.bf16 %v899, %v899
      %v970 = vsel %vm567, %v967, 0
      %v973 = vsel %vm571, %v968, 0
      %975 = vmatprep.subr.bf16.mxu0 0
      %976 = vmatpush1.bf16.msra.mxu0 %v973
      %977 = vmatprep.subr.bf16.mxu0 0
      %978 = vmatpush1.bf16.msra.mxu0 0
      %979 = vmatprep.subr.bf16.mxu0 0
      %980 = vmatpush1.bf16.msra.mxu0 0
      %981 = vmatprep.subr.bf16.mxu0 0
      %982 = vmatpush1.bf16.msra.mxu0 0
      %983 = vmatprep.subr.bf16.mxu0 0
      %984 = vmatpush1.bf16.msra.mxu0 0
      %985 = vmatprep.subr.bf16.mxu0 0
      %986 = vmatpush1.bf16.msra.mxu0 0
      %987 = vmatprep.subr.bf16.mxu0 0
      %988 = vmatpush1.bf16.msra.mxu0 0
      %989 = vmatprep.subr.bf16.mxu0 0
      %990 = vmatpush1.bf16.msra.mxu0 0
      %991 = vmatprep.subr.bf16.mxu0 0
      %992 = vmatpush1.bf16.msra.mxu0 0
      %993 = vmatprep.subr.bf16.mxu0 0
      %994 = vmatpush1.bf16.msra.mxu0 0
      %995 = vmatprep.subr.bf16.mxu0 0
      %996 = vmatpush1.bf16.msra.mxu0 0
      %997 = vmatprep.subr.bf16.mxu0 0
      %998 = vmatpush1.bf16.msra.mxu0 0
      %999 = vmatprep.subr.bf16.mxu0 0
      %1000 = vmatpush1.bf16.msra.mxu0 0
      %1001 = vmatprep.subr.bf16.mxu0 0
      %1002 = vmatpush1.bf16.msra.mxu0 0
      %1003 = vmatprep.subr.bf16.mxu0 0
      %1004 = vmatpush1.bf16.msra.mxu0 0
      %1005 = vmatprep.subr.bf16.mxu0 0
      %1006 = vmatpush1.bf16.msra.mxu0 0
      %1007 = vmatprep.mubr.bf16.mxu0 0
      %1008 = vmatmul.mubr.bf16.gmra.mrb[0].mxu0 %v970
      %v1009 = vpop.f32.mrb[0].mxu0
      %v1010 = vadd.f32 0.0, %v1009
      %v1011 = vpop.f32.mrb[0].mxu0
      %v1012 = vpop.f32.mrb[0].mxu0
      %v1013 = vpop.f32.mrb[0].mxu0
      %1014 = vdwg.mxu0
      %v1015 = vpack.c.bf16 %v1010, %v1010
      %v1016 = vld [vmem:[%s9] sm:$0xf]
      %s1017 = scalar_lea.vmem %s5, 16
      %v1018 = vld [vmem:[%s1017] sm:$0xf]
      %v1019 = vld [vmem:[%s1017 + $0x4] sm:$0xf]
      %v1020 = vld [vmem:[%s1017 + $0x8] sm:$0xf]
      %v1021 = vld [vmem:[%s1017 + $0xc] sm:$0xf]
      %s1022 = scalar_lea.vmem %s6, 1
      %v1023 = vld [vmem:[%s1022] sm:$0x1]
      %v1025 = vlaneseq
      %v1026 = vshrl.u32 %v1025, 7
      %v1027 = vsub.s32 0, %v1026
      %v1028 = vrot.slane %v1023, %v1027
      %v1034 = vunpack.c.l.b16 %v1018
      %v1035 = vunpack.c.l.b16 %v1019
      %v1036 = vunpack.c.l.b16 %v1020
      %v1037 = vunpack.c.l.b16 %v1021
      %v1038 = vpack.c.b16 %v1035, %v1034
      %v1039 = vpack.c.b16 %v1037, %v1036
      %1042 = vmatprep.subr.bf16.mxu0 0
      %1043 = vmatpush1.bf16.msra.mxu0 %v1038
      %1044 = vmatprep.subr.bf16.mxu0 0
      %1045 = vmatpush1.bf16.msra.mxu0 %v1039
      %1046 = vmatprep.subr.bf16.mxu0 0
      %1047 = vmatpush1.bf16.msra.mxu0 0
      %1048 = vmatprep.subr.bf16.mxu0 0
      %1049 = vmatpush1.bf16.msra.mxu0 0
      %1050 = vmatprep.subr.bf16.mxu0 0
      %1051 = vmatpush1.bf16.msra.mxu0 0
      %1052 = vmatprep.subr.bf16.mxu0 0
      %1053 = vmatpush1.bf16.msra.mxu0 0
      %1054 = vmatprep.subr.bf16.mxu0 0
      %1055 = vmatpush1.bf16.msra.mxu0 0
      %1056 = vmatprep.subr.bf16.mxu0 0
      %1057 = vmatpush1.bf16.msra.mxu0 0
      %1058 = vmatprep.subr.bf16.mxu0 0
      %1059 = vmatpush1.bf16.msra.mxu0 0
      %1060 = vmatprep.subr.bf16.mxu0 0
      %1061 = vmatpush1.bf16.msra.mxu0 0
      %1062 = vmatprep.subr.bf16.mxu0 0
      %1063 = vmatpush1.bf16.msra.mxu0 0
      %1064 = vmatprep.subr.bf16.mxu0 0
      %1065 = vmatpush1.bf16.msra.mxu0 0
      %1066 = vmatprep.subr.bf16.mxu0 0
      %1067 = vmatpush1.bf16.msra.mxu0 0
      %1068 = vmatprep.subr.bf16.mxu0 0
      %1069 = vmatpush1.bf16.msra.mxu0 0
      %1070 = vmatprep.subr.bf16.mxu0 0
      %1071 = vmatpush1.bf16.msra.mxu0 0
      %1072 = vmatprep.subr.bf16.mxu0 0
      %1073 = vmatpush1.bf16.msra.mxu0 0
      %1074 = vmatprep.mubr.bf16.mxu0 0
      %1075 = vmatmul.mubr.bf16.gmra.mrb[0].mxu0 %v732
      %v1076 = vpop.f32.mrb[0].mxu0
      %v1077 = vadd.f32 %v1028, %v1076
      %v1078 = vpop.f32.mrb[0].mxu0
      %v1079 = vpop.f32.mrb[0].mxu0
      %v1080 = vpop.f32.mrb[0].mxu0
      %1081 = vdwg.mxu0
      %s1082 = scalar_lea.vmem %s5, 80
      %v1083 = vld [vmem:[%s1082] sm:$0xf]
      %v1084 = vld [vmem:[%s1082 + $0x4] sm:$0xf]
      %v1085 = vld [vmem:[%s1082 + $0x8] sm:$0xf]
      %v1086 = vld [vmem:[%s1082 + $0xc] sm:$0xf]
      %s1087 = scalar_lea.vmem %s6, 5
      %v1088 = vld [vmem:[%s1087] sm:$0x1]
      %v1090 = vlaneseq
      %v1091 = vshrl.u32 %v1090, 7
      %v1092 = vsub.s32 0, %v1091
      %v1093 = vrot.slane %v1088, %v1092
      %v1099 = vunpack.c.l.b16 %v1083
      %v1100 = vunpack.c.l.b16 %v1084
      %v1101 = vunpack.c.l.b16 %v1085
      %v1102 = vunpack.c.l.b16 %v1086
      %v1103 = vpack.c.b16 %v1100, %v1099
      %v1104 = vpack.c.b16 %v1102, %v1101
      %1107 = vmatprep.subr.bf16.mxu0 0
      %1108 = vmatpush1.bf16.msra.mxu0 %v1103
      %1109 = vmatprep.subr.bf16.mxu0 0
      %1110 = vmatpush1.bf16.msra.mxu0 %v1104
      %1111 = vmatprep.subr.bf16.mxu0 0
      %1112 = vmatpush1.bf16.msra.mxu0 0
      %1113 = vmatprep.subr.bf16.mxu0 0
      %1114 = vmatpush1.bf16.msra.mxu0 0
      %1115 = vmatprep.subr.bf16.mxu0 0
      %1116 = vmatpush1.bf16.msra.mxu0 0
      %1117 = vmatprep.subr.bf16.mxu0 0
      %1118 = vmatpush1.bf16.msra.mxu0 0
      %1119 = vmatprep.subr.bf16.mxu0 0
      %1120 = vmatpush1.bf16.msra.mxu0 0
      %1121 = vmatprep.subr.bf16.mxu0 0
      %1122 = vmatpush1.bf16.msra.mxu0 0
      %1123 = vmatprep.subr.bf16.mxu0 0
      %1124 = vmatpush1.bf16.msra.mxu0 0
      %1125 = vmatprep.subr.bf16.mxu0 0
      %1126 = vmatpush1.bf16.msra.mxu0 0
      %1127 = vmatprep.subr.bf16.mxu0 0
      %1128 = vmatpush1.bf16.msra.mxu0 0
      %1129 = vmatprep.subr.bf16.mxu0 0
      %1130 = vmatpush1.bf16.msra.mxu0 0
      %1131 = vmatprep.subr.bf16.mxu0 0
      %1132 = vmatpush1.bf16.msra.mxu0 0
      %1133 = vmatprep.subr.bf16.mxu0 0
      %1134 = vmatpush1.bf16.msra.mxu0 0
      %1135 = vmatprep.subr.bf16.mxu0 0
      %1136 = vmatpush1.bf16.msra.mxu0 0
      %1137 = vmatprep.subr.bf16.mxu0 0
      %1138 = vmatpush1.bf16.msra.mxu0 0
      %1139 = vmatprep.mubr.bf16.mxu0 0
      %1140 = vmatmul.mubr.bf16.gmra.mrb[0].mxu0 %v732
      %v1141 = vpop.f32.mrb[0].mxu0
      %v1142 = vadd.f32 %v1093, %v1141
      %v1143 = vpop.f32.mrb[0].mxu0
      %v1144 = vpop.f32.mrb[0].mxu0
      %v1145 = vpop.f32.mrb[0].mxu0
      %1146 = vdwg.mxu0
      %s1147 = scalar_lea.vmem %s5, 144
      %v1148 = vld [vmem:[%s1147] sm:$0xf]
      %v1149 = vld [vmem:[%s1147 + $0x4] sm:$0xf]
      %v1150 = vld [vmem:[%s1147 + $0x8] sm:$0xf]
      %v1151 = vld [vmem:[%s1147 + $0xc] sm:$0xf]
      %s1152 = scalar_lea.vmem %s6, 9
      %v1153 = vld [vmem:[%s1152] sm:$0x1]
      %v1155 = vlaneseq
      %v1156 = vshrl.u32 %v1155, 7
      %v1157 = vsub.s32 0, %v1156
      %v1158 = vrot.slane %v1153, %v1157
      %v1164 = vunpack.c.l.b16 %v1148
      %v1165 = vunpack.c.l.b16 %v1149
      %v1166 = vunpack.c.l.b16 %v1150
      %v1167 = vunpack.c.l.b16 %v1151
      %v1168 = vpack.c.b16 %v1165, %v1164
      %v1169 = vpack.c.b16 %v1167, %v1166
      %1172 = vmatprep.subr.bf16.mxu0 0
      %1173 = vmatpush1.bf16.msra.mxu0 %v1168
      %1174 = vmatprep.subr.bf16.mxu0 0
      %1175 = vmatpush1.bf16.msra.mxu0 %v1169
      %1176 = vmatprep.subr.bf16.mxu0 0
      %1177 = vmatpush1.bf16.msra.mxu0 0
      %1178 = vmatprep.subr.bf16.mxu0 0
      %1179 = vmatpush1.bf16.msra.mxu0 0
      %1180 = vmatprep.subr.bf16.mxu0 0
      %1181 = vmatpush1.bf16.msra.mxu0 0
      %1182 = vmatprep.subr.bf16.mxu0 0
      %1183 = vmatpush1.bf16.msra.mxu0 0
      %1184 = vmatprep.subr.bf16.mxu0 0
      %1185 = vmatpush1.bf16.msra.mxu0 0
      %1186 = vmatprep.subr.bf16.mxu0 0
      %1187 = vmatpush1.bf16.msra.mxu0 0
      %1188 = vmatprep.subr.bf16.mxu0 0
      %1189 = vmatpush1.bf16.msra.mxu0 0
      %1190 = vmatprep.subr.bf16.mxu0 0
      %1191 = vmatpush1.bf16.msra.mxu0 0
      %1192 = vmatprep.subr.bf16.mxu0 0
      %1193 = vmatpush1.bf16.msra.mxu0 0
      %1194 = vmatprep.subr.bf16.mxu0 0
      %1195 = vmatpush1.bf16.msra.mxu0 0
      %1196 = vmatprep.subr.bf16.mxu0 0
      %1197 = vmatpush1.bf16.msra.mxu0 0
      %1198 = vmatprep.subr.bf16.mxu0 0
      %1199 = vmatpush1.bf16.msra.mxu0 0
      %1200 = vmatprep.subr.bf16.mxu0 0
      %1201 = vmatpush1.bf16.msra.mxu0 0
      %1202 = vmatprep.subr.bf16.mxu0 0
      %1203 = vmatpush1.bf16.msra.mxu0 0
      %1204 = vmatprep.mubr.bf16.mxu0 0
      %1205 = vmatmul.mubr.bf16.gmra.mrb[0].mxu0 %v732
      %v1206 = vpop.f32.mrb[0].mxu0
      %v1207 = vadd.f32 %v1158, %v1206
      %v1208 = vpop.f32.mrb[0].mxu0
      %v1209 = vpop.f32.mrb[0].mxu0
      %v1210 = vpop.f32.mrb[0].mxu0
      %1211 = vdwg.mxu0
      %v1212 = vpack.c.bf16 %v1077, %v1077
      %v1213 = vpack.c.bf16 %v1142, %v1142
      %v1215 = vsel %vm567, %v1212, 0
      %v1218 = vsel %vm567, %v1213, 0
      %1220 = vmatprep.subr.bf16.mxu0 0
      %1221 = vmatpush1.bf16.xpose.msra.mxu0 %v1218
      %1222 = vmatprep.subr.bf16.mxu0 0
      %1223 = vmatpush1.bf16.xpose.msra.mxu0 0
      %1224 = vmatprep.subr.bf16.mxu0 0
      %1225 = vmatpush1.bf16.xpose.msra.mxu0 0
      %1226 = vmatprep.subr.bf16.mxu0 0
      %1227 = vmatpush1.bf16.xpose.msra.mxu0 0
      %1228 = vmatprep.subr.bf16.mxu0 0
      %1229 = vmatpush1.bf16.xpose.msra.mxu0 0
      %1230 = vmatprep.subr.bf16.mxu0 0
      %1231 = vmatpush1.bf16.xpose.msra.mxu0 0
      %1232 = vmatprep.subr.bf16.mxu0 0
      %1233 = vmatpush1.bf16.xpose.msra.mxu0 0
      %1234 = vmatprep.subr.bf16.mxu0 0
      %1235 = vmatpush1.bf16.xpose.msra.mxu0 0
      %1236 = vmatprep.subr.bf16.mxu0 0
      %1237 = vmatpush1.bf16.xpose.msra.mxu0 0
      %1238 = vmatprep.subr.bf16.mxu0 0
      %1239 = vmatpush1.bf16.xpose.msra.mxu0 0
      %1240 = vmatprep.subr.bf16.mxu0 0
      %1241 = vmatpush1.bf16.xpose.msra.mxu0 0
      %1242 = vmatprep.subr.bf16.mxu0 0
      %1243 = vmatpush1.bf16.xpose.msra.mxu0 0
      %1244 = vmatprep.subr.bf16.mxu0 0
      %1245 = vmatpush1.bf16.xpose.msra.mxu0 0
      %1246 = vmatprep.subr.bf16.mxu0 0
      %1247 = vmatpush1.bf16.xpose.msra.mxu0 0
      %1248 = vmatprep.subr.bf16.mxu0 0
      %1249 = vmatpush1.bf16.xpose.msra.mxu0 0
      %1250 = vmatprep.subr.bf16.mxu0 0
      %1251 = vmatpush1.bf16.xpose.msra.mxu0 0
      %1252 = vmatprep.mubr.bf16.mxu0 0
      %1253 = vmatmul.mubr.bf16.gmra.mrb[0].mxu0 %v1215
      %v1254 = vpop.f32.mrb[0].mxu0
      %v1255 = vadd.f32 0.0, %v1254
      %v1256 = vpop.f32.mrb[0].mxu0
      %v1257 = vpop.f32.mrb[0].mxu0
      %v1258 = vpop.f32.mrb[0].mxu0
      %1259 = vdwg.mxu0
      %v1260 = vmul.f32 %v1255, 0.35355338
      %v1261 = vsel %vm953, -1e+09, %v1260
      %v1262 = vsel %vm567, %v1261, -inf
      %1263 = vmax.xlane.f32.xlu0 %v1262
      %v1264 = vpop.xlane.xlu0 %1263
      %v1265 = vsub.f32 %v1261, %v1264
      %v1266 = vmul.f32 %v1265, 1.442695
      %v1267 = vpow.pop %v1266
      %v1268 = vsel %vm567, %v1267, 0.0
      %1269 = vadd.xlane.f32.xlu0 %v1268
      %v1270 = vpop.xlane.xlu0 %1269
      %v1271 = vrcp.pop %v1270
      %v1272 = vmul.f32 %v1267, %v1271
      %v1273 = vadd.f32 %v1272, %v705
      %v1274 = vpack.c.bf16 %v1273, %v1273
      %v1275 = vpack.c.bf16 %v1207, %v1207
      %v1277 = vsel %vm567, %v1274, 0
      %v1280 = vsel %vm571, %v1275, 0
      %1282 = vmatprep.subr.bf16.mxu0 0
      %1283 = vmatpush1.bf16.msra.mxu0 %v1280
      %1284 = vmatprep.subr.bf16.mxu0 0
      %1285 = vmatpush1.bf16.msra.mxu0 0
      %1286 = vmatprep.subr.bf16.mxu0 0
      %1287 = vmatpush1.bf16.msra.mxu0 0
      %1288 = vmatprep.subr.bf16.mxu0 0
      %1289 = vmatpush1.bf16.msra.mxu0 0
      %1290 = vmatprep.subr.bf16.mxu0 0
      %1291 = vmatpush1.bf16.msra.mxu0 0
      %1292 = vmatprep.subr.bf16.mxu0 0
      %1293 = vmatpush1.bf16.msra.mxu0 0
      %1294 = vmatprep.subr.bf16.mxu0 0
      %1295 = vmatpush1.bf16.msra.mxu0 0
      %1296 = vmatprep.subr.bf16.mxu0 0
      %1297 = vmatpush1.bf16.msra.mxu0 0
      %1298 = vmatprep.subr.bf16.mxu0 0
      %1299 = vmatpush1.bf16.msra.mxu0 0
      %1300 = vmatprep.subr.bf16.mxu0 0
      %1301 = vmatpush1.bf16.msra.mxu0 0
      %1302 = vmatprep.subr.bf16.mxu0 0
      %1303 = vmatpush1.bf16.msra.mxu0 0
      %1304 = vmatprep.subr.bf16.mxu0 0
      %1305 = vmatpush1.bf16.msra.mxu0 0
      %1306 = vmatprep.subr.bf16.mxu0 0
      %1307 = vmatpush1.bf16.msra.mxu0 0
      %1308 = vmatprep.subr.bf16.mxu0 0
      %1309 = vmatpush1.bf16.msra.mxu0 0
      %1310 = vmatprep.subr.bf16.mxu0 0
      %1311 = vmatpush1.bf16.msra.mxu0 0
      %1312 = vmatprep.subr.bf16.mxu0 0
      %1313 = vmatpush1.bf16.msra.mxu0 0
      %1314 = vmatprep.mubr.bf16.mxu0 0
      %1315 = vmatmul.mubr.bf16.gmra.mrb[0].mxu0 %v1277
      %v1316 = vpop.f32.mrb[0].mxu0
      %v1317 = vadd.f32 0.0, %v1316
      %v1318 = vpop.f32.mrb[0].mxu0
      %v1319 = vpop.f32.mrb[0].mxu0
      %v1320 = vpop.f32.mrb[0].mxu0
      %1321 = vdwg.mxu0
      %v1322 = vpack.c.bf16 %v1317, %v1317
      %s1323 = scalar_lea.vmem %s9, 4
      %v1324 = vld [vmem:[%s1323] sm:$0xf]
      %v1326 = vsel %vm567, %v1322, 0
      %v1329 = vsel %vm571, %v1324, 0
      %1331 = vmatprep.subr.bf16.mxu0 0
      %1332 = vmatpush1.bf16.msra.mxu0 %v1329
      %1333 = vmatprep.subr.bf16.mxu0 0
      %1334 = vmatpush1.bf16.msra.mxu0 0
      %1335 = vmatprep.subr.bf16.mxu0 0
      %1336 = vmatpush1.bf16.msra.mxu0 0
      %1337 = vmatprep.subr.bf16.mxu0 0
      %1338 = vmatpush1.bf16.msra.mxu0 0
      %1339 = vmatprep.subr.bf16.mxu0 0
      %1340 = vmatpush1.bf16.msra.mxu0 0
      %1341 = vmatprep.subr.bf16.mxu0 0
      %1342 = vmatpush1.bf16.msra.mxu0 0
      %1343 = vmatprep.subr.bf16.mxu0 0
      %1344 = vmatpush1.bf16.msra.mxu0 0
      %1345 = vmatprep.subr.bf16.mxu0 0
      %1346 = vmatpush1.bf16.msra.mxu0 0
      %1347 = vmatprep.subr.bf16.mxu0 0
      %1348 = vmatpush1.bf16.msra.mxu0 0
      %1349 = vmatprep.subr.bf16.mxu0 0
      %1350 = vmatpush1.bf16.msra.mxu0 0
      %1351 = vmatprep.subr.bf16.mxu0 0
      %1352 = vmatpush1.bf16.msra.mxu0 0
      %1353 = vmatprep.subr.bf16.mxu0 0
      %1354 = vmatpush1.bf16.msra.mxu0 0
      %1355 = vmatprep.subr.bf16.mxu0 0
      %1356 = vmatpush1.bf16.msra.mxu0 0
      %1357 = vmatprep.subr.bf16.mxu0 0
      %1358 = vmatpush1.bf16.msra.mxu0 0
      %1359 = vmatprep.subr.bf16.mxu0 0
      %1360 = vmatpush1.bf16.msra.mxu0 0
      %1361 = vmatprep.subr.bf16.mxu0 0
      %1362 = vmatpush1.bf16.msra.mxu0 0
      %1363 = vmatprep.mubr.bf16.mxu0 0
      %1364 = vmatmul.mubr.bf16.gmra.mrb[0].mxu0 %v1326
      %v1365 = vpop.f32.mrb[0].mxu0
      %v1366 = vadd.f32 0.0, %v1365
      %v1367 = vpop.f32.mrb[0].mxu0
      %v1368 = vpop.f32.mrb[0].mxu0
      %v1369 = vpop.f32.mrb[0].mxu0
      %1370 = vdwg.mxu0
      %v1372 = vsel %vm567, %v1015, 0
      %v1375 = vsel %vm571, %v1016, 0
      %1377 = vmatprep.subr.bf16.mxu0 0
      %1378 = vmatpush1.bf16.msra.mxu0 %v1375
      %1379 = vmatprep.subr.bf16.mxu0 0
      %1380 = vmatpush1.bf16.msra.mxu0 0
      %1381 = vmatprep.subr.bf16.mxu0 0
      %1382 = vmatpush1.bf16.msra.mxu0 0
      %1383 = vmatprep.subr.bf16.mxu0 0
      %1384 = vmatpush1.bf16.msra.mxu0 0
      %1385 = vmatprep.subr.bf16.mxu0 0
      %1386 = vmatpush1.bf16.msra.mxu0 0
      %1387 = vmatprep.subr.bf16.mxu0 0
      %1388 = vmatpush1.bf16.msra.mxu0 0
      %1389 = vmatprep.subr.bf16.mxu0 0
      %1390 = vmatpush1.bf16.msra.mxu0 0
      %1391 = vmatprep.subr.bf16.mxu0 0
      %1392 = vmatpush1.bf16.msra.mxu0 0
      %1393 = vmatprep.subr.bf16.mxu0 0
      %1394 = vmatpush1.bf16.msra.mxu0 0
      %1395 = vmatprep.subr.bf16.mxu0 0
      %1396 = vmatpush1.bf16.msra.mxu0 0
      %1397 = vmatprep.subr.bf16.mxu0 0
      %1398 = vmatpush1.bf16.msra.mxu0 0
      %1399 = vmatprep.subr.bf16.mxu0 0
      %1400 = vmatpush1.bf16.msra.mxu0 0
      %1401 = vmatprep.subr.bf16.mxu0 0
      %1402 = vmatpush1.bf16.msra.mxu0 0
      %1403 = vmatprep.subr.bf16.mxu0 0
      %1404 = vmatpush1.bf16.msra.mxu0 0
      %1405 = vmatprep.subr.bf16.mxu0 0
      %1406 = vmatpush1.bf16.msra.mxu0 0
      %1407 = vmatprep.subr.bf16.mxu0 0
      %1408 = vmatpush1.bf16.msra.mxu0 0
      %1409 = vmatprep.mubr.bf16.mxu0 0
      %1410 = vmatmul.mubr.bf16.gmra.mrb[0].mxu0 %v1372
      %v1411 = vpop.f32.mrb[0].mxu0
      %v1412 = vadd.f32 %v1366, %v1411
      %v1413 = vpop.f32.mrb[0].mxu0
      %v1414 = vpop.f32.mrb[0].mxu0
      %v1415 = vpop.f32.mrb[0].mxu0
      %1416 = vdwg.mxu0
      %s1417 = scalar_lea.vmem %s5, 32
      %v1418 = vld [vmem:[%s1417] sm:$0xf]
      %v1419 = vld [vmem:[%s1417 + $0x4] sm:$0xf]
      %v1420 = vld [vmem:[%s1417 + $0x8] sm:$0xf]
      %v1421 = vld [vmem:[%s1417 + $0xc] sm:$0xf]
      %s1422 = scalar_lea.vmem %s6, 2
      %v1423 = vld [vmem:[%s1422] sm:$0x1]
      %v1425 = vlaneseq
      %v1426 = vshrl.u32 %v1425, 7
      %v1427 = vsub.s32 0, %v1426
      %v1428 = vrot.slane %v1423, %v1427
      %v1434 = vunpack.c.l.b16 %v1418
      %v1435 = vunpack.c.l.b16 %v1419
      %v1436 = vunpack.c.l.b16 %v1420
      %v1437 = vunpack.c.l.b16 %v1421
      %v1438 = vpack.c.b16 %v1435, %v1434
      %v1439 = vpack.c.b16 %v1437, %v1436
      %1442 = vmatprep.subr.bf16.mxu0 0
      %1443 = vmatpush1.bf16.msra.mxu0 %v1438
      %1444 = vmatprep.subr.bf16.mxu0 0
      %1445 = vmatpush1.bf16.msra.mxu0 %v1439
      %1446 = vmatprep.subr.bf16.mxu0 0
      %1447 = vmatpush1.bf16.msra.mxu0 0
      %1448 = vmatprep.subr.bf16.mxu0 0
      %1449 = vmatpush1.bf16.msra.mxu0 0
      %1450 = vmatprep.subr.bf16.mxu0 0
      %1451 = vmatpush1.bf16.msra.mxu0 0
      %1452 = vmatprep.subr.bf16.mxu0 0
      %1453 = vmatpush1.bf16.msra.mxu0 0
      %1454 = vmatprep.subr.bf16.mxu0 0
      %1455 = vmatpush1.bf16.msra.mxu0 0
      %1456 = vmatprep.subr.bf16.mxu0 0
      %1457 = vmatpush1.bf16.msra.mxu0 0
      %1458 = vmatprep.subr.bf16.mxu0 0
      %1459 = vmatpush1.bf16.msra.mxu0 0
      %1460 = vmatprep.subr.bf16.mxu0 0
      %1461 = vmatpush1.bf16.msra.mxu0 0
      %1462 = vmatprep.subr.bf16.mxu0 0
      %1463 = vmatpush1.bf16.msra.mxu0 0
      %1464 = vmatprep.subr.bf16.mxu0 0
      %1465 = vmatpush1.bf16.msra.mxu0 0
      %1466 = vmatprep.subr.bf16.mxu0 0
      %1467 = vmatpush1.bf16.msra.mxu0 0
      %1468 = vmatprep.subr.bf16.mxu0 0
      %1469 = vmatpush1.bf16.msra.mxu0 0
      %1470 = vmatprep.subr.bf16.mxu0 0
      %1471 = vmatpush1.bf16.msra.mxu0 0
      %1472 = vmatprep.subr.bf16.mxu0 0
      %1473 = vmatpush1.bf16.msra.mxu0 0
      %1474 = vmatprep.mubr.bf16.mxu0 0
      %1475 = vmatmul.mubr.bf16.gmra.mrb[0].mxu0 %v732
      %v1476 = vpop.f32.mrb[0].mxu0
      %v1477 = vadd.f32 %v1428, %v1476
      %v1478 = vpop.f32.mrb[0].mxu0
      %v1479 = vpop.f32.mrb[0].mxu0
      %v1480 = vpop.f32.mrb[0].mxu0
      %1481 = vdwg.mxu0
      %s1482 = scalar_lea.vmem %s5, 96
      %v1483 = vld [vmem:[%s1482] sm:$0xf]
      %v1484 = vld [vmem:[%s1482 + $0x4] sm:$0xf]
      %v1485 = vld [vmem:[%s1482 + $0x8] sm:$0xf]
      %v1486 = vld [vmem:[%s1482 + $0xc] sm:$0xf]
      %s1487 = scalar_lea.vmem %s6, 6
      %v1488 = vld [vmem:[%s1487] sm:$0x1]
      %v1490 = vlaneseq
      %v1491 = vshrl.u32 %v1490, 7
      %v1492 = vsub.s32 0, %v1491
      %v1493 = vrot.slane %v1488, %v1492
      %v1499 = vunpack.c.l.b16 %v1483
      %v1500 = vunpack.c.l.b16 %v1484
      %v1501 = vunpack.c.l.b16 %v1485
      %v1502 = vunpack.c.l.b16 %v1486
      %v1503 = vpack.c.b16 %v1500, %v1499
      %v1504 = vpack.c.b16 %v1502, %v1501
      %1507 = vmatprep.subr.bf16.mxu0 0
      %1508 = vmatpush1.bf16.msra.mxu0 %v1503
      %1509 = vmatprep.subr.bf16.mxu0 0
      %1510 = vmatpush1.bf16.msra.mxu0 %v1504
      %1511 = vmatprep.subr.bf16.mxu0 0
      %1512 = vmatpush1.bf16.msra.mxu0 0
      %1513 = vmatprep.subr.bf16.mxu0 0
      %1514 = vmatpush1.bf16.msra.mxu0 0
      %1515 = vmatprep.subr.bf16.mxu0 0
      %1516 = vmatpush1.bf16.msra.mxu0 0
      %1517 = vmatprep.subr.bf16.mxu0 0
      %1518 = vmatpush1.bf16.msra.mxu0 0
      %1519 = vmatprep.subr.bf16.mxu0 0
      %1520 = vmatpush1.bf16.msra.mxu0 0
      %1521 = vmatprep.subr.bf16.mxu0 0
      %1522 = vmatpush1.bf16.msra.mxu0 0
      %1523 = vmatprep.subr.bf16.mxu0 0
      %1524 = vmatpush1.bf16.msra.mxu0 0
      %1525 = vmatprep.subr.bf16.mxu0 0
      %1526 = vmatpush1.bf16.msra.mxu0 0
      %1527 = vmatprep.subr.bf16.mxu0 0
      %1528 = vmatpush1.bf16.msra.mxu0 0
      %1529 = vmatprep.subr.bf16.mxu0 0
      %1530 = vmatpush1.bf16.msra.mxu0 0
      %1531 = vmatprep.subr.bf16.mxu0 0
      %1532 = vmatpush1.bf16.msra.mxu0 0
      %1533 = vmatprep.subr.bf16.mxu0 0
      %1534 = vmatpush1.bf16.msra.mxu0 0
      %1535 = vmatprep.subr.bf16.mxu0 0
      %1536 = vmatpush1.bf16.msra.mxu0 0
      %1537 = vmatprep.subr.bf16.mxu0 0
      %1538 = vmatpush1.bf16.msra.mxu0 0
      %1539 = vmatprep.mubr.bf16.mxu0 0
      %1540 = vmatmul.mubr.bf16.gmra.mrb[0].mxu0 %v732
      %v1541 = vpop.f32.mrb[0].mxu0
      %v1542 = vadd.f32 %v1493, %v1541
      %v1543 = vpop.f32.mrb[0].mxu0
      %v1544 = vpop.f32.mrb[0].mxu0
      %v1545 = vpop.f32.mrb[0].mxu0
      %1546 = vdwg.mxu0
      %s1547 = scalar_lea.vmem %s5, 160
      %v1548 = vld [vmem:[%s1547] sm:$0xf]
      %v1549 = vld [vmem:[%s1547 + $0x4] sm:$0xf]
      %v1550 = vld [vmem:[%s1547 + $0x8] sm:$0xf]
      %v1551 = vld [vmem:[%s1547 + $0xc] sm:$0xf]
      %s1552 = scalar_lea.vmem %s6, 10
      %v1553 = vld [vmem:[%s1552] sm:$0x1]
      %v1555 = vlaneseq
      %v1556 = vshrl.u32 %v1555, 7
      %v1557 = vsub.s32 0, %v1556
      %v1558 = vrot.slane %v1553, %v1557
      %v1564 = vunpack.c.l.b16 %v1548
      %v1565 = vunpack.c.l.b16 %v1549
      %v1566 = vunpack.c.l.b16 %v1550
      %v1567 = vunpack.c.l.b16 %v1551
      %v1568 = vpack.c.b16 %v1565, %v1564
      %v1569 = vpack.c.b16 %v1567, %v1566
      %1572 = vmatprep.subr.bf16.mxu0 0
      %1573 = vmatpush1.bf16.msra.mxu0 %v1568
      %1574 = vmatprep.subr.bf16.mxu0 0
      %1575 = vmatpush1.bf16.msra.mxu0 %v1569
      %1576 = vmatprep.subr.bf16.mxu0 0
      %1577 = vmatpush1.bf16.msra.mxu0 0
      %1578 = vmatprep.subr.bf16.mxu0 0
      %1579 = vmatpush1.bf16.msra.mxu0 0
      %1580 = vmatprep.subr.bf16.mxu0 0
      %1581 = vmatpush1.bf16.msra.mxu0 0
      %1582 = vmatprep.subr.bf16.mxu0 0
      %1583 = vmatpush1.bf16.msra.mxu0 0
      %1584 = vmatprep.subr.bf16.mxu0 0
      %1585 = vmatpush1.bf16.msra.mxu0 0
      %1586 = vmatprep.subr.bf16.mxu0 0
      %1587 = vmatpush1.bf16.msra.mxu0 0
      %1588 = vmatprep.subr.bf16.mxu0 0
      %1589 = vmatpush1.bf16.msra.mxu0 0
      %1590 = vmatprep.subr.bf16.mxu0 0
      %1591 = vmatpush1.bf16.msra.mxu0 0
      %1592 = vmatprep.subr.bf16.mxu0 0
      %1593 = vmatpush1.bf16.msra.mxu0 0
      %1594 = vmatprep.subr.bf16.mxu0 0
      %1595 = vmatpush1.bf16.msra.mxu0 0
      %1596 = vmatprep.subr.bf16.mxu0 0
      %1597 = vmatpush1.bf16.msra.mxu0 0
      %1598 = vmatprep.subr.bf16.mxu0 0
      %1599 = vmatpush1.bf16.msra.mxu0 0
      %1600 = vmatprep.subr.bf16.mxu0 0
      %1601 = vmatpush1.bf16.msra.mxu0 0
      %1602 = vmatprep.subr.bf16.mxu0 0
      %1603 = vmatpush1.bf16.msra.mxu0 0
      %1604 = vmatprep.mubr.bf16.mxu0 0
      %1605 = vmatmul.mubr.bf16.gmra.mrb[0].mxu0 %v732
      %v1606 = vpop.f32.mrb[0].mxu0
      %v1607 = vadd.f32 %v1558, %v1606
      %v1608 = vpop.f32.mrb[0].mxu0
      %v1609 = vpop.f32.mrb[0].mxu0
      %v1610 = vpop.f32.mrb[0].mxu0
      %1611 = vdwg.mxu0
      %v1612 = vpack.c.bf16 %v1477, %v1477
      %v1613 = vpack.c.bf16 %v1542, %v1542
      %v1615 = vsel %vm567, %v1612, 0
      %v1618 = vsel %vm567, %v1613, 0
      %1620 = vmatprep.subr.bf16.mxu0 0
      %1621 = vmatpush1.bf16.xpose.msra.mxu0 %v1618
      %1622 = vmatprep.subr.bf16.mxu0 0
      %1623 = vmatpush1.bf16.xpose.msra.mxu0 0
      %1624 = vmatprep.subr.bf16.mxu0 0
      %1625 = vmatpush1.bf16.xpose.msra.mxu0 0
      %1626 = vmatprep.subr.bf16.mxu0 0
      %1627 = vmatpush1.bf16.xpose.msra.mxu0 0
      %1628 = vmatprep.subr.bf16.mxu0 0
      %1629 = vmatpush1.bf16.xpose.msra.mxu0 0
      %1630 = vmatprep.subr.bf16.mxu0 0
      %1631 = vmatpush1.bf16.xpose.msra.mxu0 0
      %1632 = vmatprep.subr.bf16.mxu0 0
      %1633 = vmatpush1.bf16.xpose.msra.mxu0 0
      %1634 = vmatprep.subr.bf16.mxu0 0
      %1635 = vmatpush1.bf16.xpose.msra.mxu0 0
      %1636 = vmatprep.subr.bf16.mxu0 0
      %1637 = vmatpush1.bf16.xpose.msra.mxu0 0
      %1638 = vmatprep.subr.bf16.mxu0 0
      %1639 = vmatpush1.bf16.xpose.msra.mxu0 0
      %1640 = vmatprep.subr.bf16.mxu0 0
      %1641 = vmatpush1.bf16.xpose.msra.mxu0 0
      %1642 = vmatprep.subr.bf16.mxu0 0
      %1643 = vmatpush1.bf16.xpose.msra.mxu0 0
      %1644 = vmatprep.subr.bf16.mxu0 0
      %1645 = vmatpush1.bf16.xpose.msra.mxu0 0
      %1646 = vmatprep.subr.bf16.mxu0 0
      %1647 = vmatpush1.bf16.xpose.msra.mxu0 0
      %1648 = vmatprep.subr.bf16.mxu0 0
      %1649 = vmatpush1.bf16.xpose.msra.mxu0 0
      %1650 = vmatprep.subr.bf16.mxu0 0
      %1651 = vmatpush1.bf16.xpose.msra.mxu0 0
      %1652 = vmatprep.mubr.bf16.mxu0 0
      %1653 = vmatmul.mubr.bf16.gmra.mrb[0].mxu0 %v1615
      %v1654 = vpop.f32.mrb[0].mxu0
      %v1655 = vadd.f32 0.0, %v1654
      %v1656 = vpop.f32.mrb[0].mxu0
      %v1657 = vpop.f32.mrb[0].mxu0
      %v1658 = vpop.f32.mrb[0].mxu0
      %1659 = vdwg.mxu0
      %v1660 = vmul.f32 %v1655, 0.35355338
      %v1661 = vsel %vm953, -1e+09, %v1660
      %v1662 = vsel %vm567, %v1661, -inf
      %1663 = vmax.xlane.f32.xlu0 %v1662
      %v1664 = vpop.xlane.xlu0 %1663
      %v1665 = vsub.f32 %v1661, %v1664
      %v1666 = vmul.f32 %v1665, 1.442695
      %v1667 = vpow.pop %v1666
      %v1668 = vsel %vm567, %v1667, 0.0
      %1669 = vadd.xlane.f32.xlu0 %v1668
      %v1670 = vpop.xlane.xlu0 %1669
      %v1671 = vrcp.pop %v1670
      %v1672 = vmul.f32 %v1667, %v1671
      %v1673 = vadd.f32 %v1672, %v706
      %v1674 = vpack.c.bf16 %v1673, %v1673
      %v1675 = vpack.c.bf16 %v1607, %v1607
      %v1677 = vsel %vm567, %v1674, 0
      %v1680 = vsel %vm571, %v1675, 0
      %1682 = vmatprep.subr.bf16.mxu0 0
      %1683 = vmatpush1.bf16.msra.mxu0 %v1680
      %1684 = vmatprep.subr.bf16.mxu0 0
      %1685 = vmatpush1.bf16.msra.mxu0 0
      %1686 = vmatprep.subr.bf16.mxu0 0
      %1687 = vmatpush1.bf16.msra.mxu0 0
      %1688 = vmatprep.subr.bf16.mxu0 0
      %1689 = vmatpush1.bf16.msra.mxu0 0
      %1690 = vmatprep.subr.bf16.mxu0 0
      %1691 = vmatpush1.bf16.msra.mxu0 0
      %1692 = vmatprep.subr.bf16.mxu0 0
      %1693 = vmatpush1.bf16.msra.mxu0 0
      %1694 = vmatprep.subr.bf16.mxu0 0
      %1695 = vmatpush1.bf16.msra.mxu0 0
      %1696 = vmatprep.subr.bf16.mxu0 0
      %1697 = vmatpush1.bf16.msra.mxu0 0
      %1698 = vmatprep.subr.bf16.mxu0 0
      %1699 = vmatpush1.bf16.msra.mxu0 0
      %1700 = vmatprep.subr.bf16.mxu0 0
      %1701 = vmatpush1.bf16.msra.mxu0 0
      %1702 = vmatprep.subr.bf16.mxu0 0
      %1703 = vmatpush1.bf16.msra.mxu0 0
      %1704 = vmatprep.subr.bf16.mxu0 0
      %1705 = vmatpush1.bf16.msra.mxu0 0
      %1706 = vmatprep.subr.bf16.mxu0 0
      %1707 = vmatpush1.bf16.msra.mxu0 0
      %1708 = vmatprep.subr.bf16.mxu0 0
      %1709 = vmatpush1.bf16.msra.mxu0 0
      %1710 = vmatprep.subr.bf16.mxu0 0
      %1711 = vmatpush1.bf16.msra.mxu0 0
      %1712 = vmatprep.subr.bf16.mxu0 0
      %1713 = vmatpush1.bf16.msra.mxu0 0
      %1714 = vmatprep.mubr.bf16.mxu0 0
      %1715 = vmatmul.mubr.bf16.gmra.mrb[0].mxu0 %v1677
      %v1716 = vpop.f32.mrb[0].mxu0
      %v1717 = vadd.f32 0.0, %v1716
      %v1718 = vpop.f32.mrb[0].mxu0
      %v1719 = vpop.f32.mrb[0].mxu0
      %v1720 = vpop.f32.mrb[0].mxu0
      %1721 = vdwg.mxu0
      %v1722 = vpack.c.bf16 %v1717, %v1717
      %s1723 = scalar_lea.vmem %s9, 8
      %v1724 = vld [vmem:[%s1723] sm:$0xf]
      %v1726 = vsel %vm567, %v1722, 0
      %v1729 = vsel %vm571, %v1724, 0
      %1731 = vmatprep.subr.bf16.mxu0 0
      %1732 = vmatpush1.bf16.msra.mxu0 %v1729
      %1733 = vmatprep.subr.bf16.mxu0 0
      %1734 = vmatpush1.bf16.msra.mxu0 0
      %1735 = vmatprep.subr.bf16.mxu0 0
      %1736 = vmatpush1.bf16.msra.mxu0 0
      %1737 = vmatprep.subr.bf16.mxu0 0
      %1738 = vmatpush1.bf16.msra.mxu0 0
      %1739 = vmatprep.subr.bf16.mxu0 0
      %1740 = vmatpush1.bf16.msra.mxu0 0
      %1741 = vmatprep.subr.bf16.mxu0 0
      %1742 = vmatpush1.bf16.msra.mxu0 0
      %1743 = vmatprep.subr.bf16.mxu0 0
      %1744 = vmatpush1.bf16.msra.mxu0 0
      %1745 = vmatprep.subr.bf16.mxu0 0
      %1746 = vmatpush1.bf16.msra.mxu0 0
      %1747 = vmatprep.subr.bf16.mxu0 0
      %1748 = vmatpush1.bf16.msra.mxu0 0
      %1749 = vmatprep.subr.bf16.mxu0 0
      %1750 = vmatpush1.bf16.msra.mxu0 0
      %1751 = vmatprep.subr.bf16.mxu0 0
      %1752 = vmatpush1.bf16.msra.mxu0 0
      %1753 = vmatprep.subr.bf16.mxu0 0
      %1754 = vmatpush1.bf16.msra.mxu0 0
      %1755 = vmatprep.subr.bf16.mxu0 0
      %1756 = vmatpush1.bf16.msra.mxu0 0
      %1757 = vmatprep.subr.bf16.mxu0 0
      %1758 = vmatpush1.bf16.msra.mxu0 0
      %1759 = vmatprep.subr.bf16.mxu0 0
      %1760 = vmatpush1.bf16.msra.mxu0 0
      %1761 = vmatprep.subr.bf16.mxu0 0
      %1762 = vmatpush1.bf16.msra.mxu0 0
      %1763 = vmatprep.mubr.bf16.mxu0 0
      %1764 = vmatmul.mubr.bf16.gmra.mrb[0].mxu0 %v1726
      %v1765 = vpop.f32.mrb[0].mxu0
      %v1766 = vadd.f32 0.0, %v1765
      %v1767 = vpop.f32.mrb[0].mxu0
      %v1768 = vpop.f32.mrb[0].mxu0
      %v1769 = vpop.f32.mrb[0].mxu0
      %1770 = vdwg.mxu0
      %v1771 = vadd.f32 %v1412, %v1766
      %s1772 = scalar_lea.vmem %s5, 48
      %v1773 = vld [vmem:[%s1772] sm:$0xf]
      %v1774 = vld [vmem:[%s1772 + $0x4] sm:$0xf]
      %v1775 = vld [vmem:[%s1772 + $0x8] sm:$0xf]
      %v1776 = vld [vmem:[%s1772 + $0xc] sm:$0xf]
      %s1777 = scalar_lea.vmem %s6, 3
      %v1778 = vld [vmem:[%s1777] sm:$0x1]
      %v1780 = vlaneseq
      %v1781 = vshrl.u32 %v1780, 7
      %v1782 = vsub.s32 0, %v1781
      %v1783 = vrot.slane %v1778, %v1782
      %v1789 = vunpack.c.l.b16 %v1773
      %v1790 = vunpack.c.l.b16 %v1774
      %v1791 = vunpack.c.l.b16 %v1775
      %v1792 = vunpack.c.l.b16 %v1776
      %v1793 = vpack.c.b16 %v1790, %v1789
      %v1794 = vpack.c.b16 %v1792, %v1791
      %1797 = vmatprep.subr.bf16.mxu0 0
      %1798 = vmatpush1.bf16.msra.mxu0 %v1793
      %1799 = vmatprep.subr.bf16.mxu0 0
      %1800 = vmatpush1.bf16.msra.mxu0 %v1794
      %1801 = vmatprep.subr.bf16.mxu0 0
      %1802 = vmatpush1.bf16.msra.mxu0 0
      %1803 = vmatprep.subr.bf16.mxu0 0
      %1804 = vmatpush1.bf16.msra.mxu0 0
      %1805 = vmatprep.subr.bf16.mxu0 0
      %1806 = vmatpush1.bf16.msra.mxu0 0
      %1807 = vmatprep.subr.bf16.mxu0 0
      %1808 = vmatpush1.bf16.msra.mxu0 0
      %1809 = vmatprep.subr.bf16.mxu0 0
      %1810 = vmatpush1.bf16.msra.mxu0 0
      %1811 = vmatprep.subr.bf16.mxu0 0
      %1812 = vmatpush1.bf16.msra.mxu0 0
      %1813 = vmatprep.subr.bf16.mxu0 0
      %1814 = vmatpush1.bf16.msra.mxu0 0
      %1815 = vmatprep.subr.bf16.mxu0 0
      %1816 = vmatpush1.bf16.msra.mxu0 0
      %1817 = vmatprep.subr.bf16.mxu0 0
      %1818 = vmatpush1.bf16.msra.mxu0 0
      %1819 = vmatprep.subr.bf16.mxu0 0
      %1820 = vmatpush1.bf16.msra.mxu0 0
      %1821 = vmatprep.subr.bf16.mxu0 0
      %1822 = vmatpush1.bf16.msra.mxu0 0
      %1823 = vmatprep.subr.bf16.mxu0 0
      %1824 = vmatpush1.bf16.msra.mxu0 0
      %1825 = vmatprep.subr.bf16.mxu0 0
      %1826 = vmatpush1.bf16.msra.mxu0 0
      %1827 = vmatprep.subr.bf16.mxu0 0
      %1828 = vmatpush1.bf16.msra.mxu0 0
      %1829 = vmatprep.mubr.bf16.mxu0 0
      %1830 = vmatmul.mubr.bf16.gmra.mrb[0].mxu0 %v732
      %v1831 = vpop.f32.mrb[0].mxu0
      %v1832 = vadd.f32 %v1783, %v1831
      %v1833 = vpop.f32.mrb[0].mxu0
      %v1834 = vpop.f32.mrb[0].mxu0
      %v1835 = vpop.f32.mrb[0].mxu0
      %1836 = vdwg.mxu0
      %s1837 = scalar_lea.vmem %s5, 112
      %v1838 = vld [vmem:[%s1837] sm:$0xf]
      %v1839 = vld [vmem:[%s1837 + $0x4] sm:$0xf]
      %v1840 = vld [vmem:[%s1837 + $0x8] sm:$0xf]
      %v1841 = vld [vmem:[%s1837 + $0xc] sm:$0xf]
      %s1842 = scalar_lea.vmem %s6, 7
      %v1843 = vld [vmem:[%s1842] sm:$0x1]
      %v1845 = vlaneseq
      %v1846 = vshrl.u32 %v1845, 7
      %v1847 = vsub.s32 0, %v1846
      %v1848 = vrot.slane %v1843, %v1847
      %v1854 = vunpack.c.l.b16 %v1838
      %v1855 = vunpack.c.l.b16 %v1839
      %v1856 = vunpack.c.l.b16 %v1840
      %v1857 = vunpack.c.l.b16 %v1841
      %v1858 = vpack.c.b16 %v1855, %v1854
      %v1859 = vpack.c.b16 %v1857, %v1856
      %1862 = vmatprep.subr.bf16.mxu0 0
      %1863 = vmatpush1.bf16.msra.mxu0 %v1858
      %1864 = vmatprep.subr.bf16.mxu0 0
      %1865 = vmatpush1.bf16.msra.mxu0 %v1859
      %1866 = vmatprep.subr.bf16.mxu0 0
      %1867 = vmatpush1.bf16.msra.mxu0 0
      %1868 = vmatprep.subr.bf16.mxu0 0
      %1869 = vmatpush1.bf16.msra.mxu0 0
      %1870 = vmatprep.subr.bf16.mxu0 0
      %1871 = vmatpush1.bf16.msra.mxu0 0
      %1872 = vmatprep.subr.bf16.mxu0 0
      %1873 = vmatpush1.bf16.msra.mxu0 0
      %1874 = vmatprep.subr.bf16.mxu0 0
      %1875 = vmatpush1.bf16.msra.mxu0 0
      %1876 = vmatprep.subr.bf16.mxu0 0
      %1877 = vmatpush1.bf16.msra.mxu0 0
      %1878 = vmatprep.subr.bf16.mxu0 0
      %1879 = vmatpush1.bf16.msra.mxu0 0
      %1880 = vmatprep.subr.bf16.mxu0 0
      %1881 = vmatpush1.bf16.msra.mxu0 0
      %1882 = vmatprep.subr.bf16.mxu0 0
      %1883 = vmatpush1.bf16.msra.mxu0 0
      %1884 = vmatprep.subr.bf16.mxu0 0
      %1885 = vmatpush1.bf16.msra.mxu0 0
      %1886 = vmatprep.subr.bf16.mxu0 0
      %1887 = vmatpush1.bf16.msra.mxu0 0
      %1888 = vmatprep.subr.bf16.mxu0 0
      %1889 = vmatpush1.bf16.msra.mxu0 0
      %1890 = vmatprep.subr.bf16.mxu0 0
      %1891 = vmatpush1.bf16.msra.mxu0 0
      %1892 = vmatprep.subr.bf16.mxu0 0
      %1893 = vmatpush1.bf16.msra.mxu0 0
      %1894 = vmatprep.mubr.bf16.mxu0 0
      %1895 = vmatmul.mubr.bf16.gmra.mrb[0].mxu0 %v732
      %v1896 = vpop.f32.mrb[0].mxu0
      %v1897 = vadd.f32 %v1848, %v1896
      %v1898 = vpop.f32.mrb[0].mxu0
      %v1899 = vpop.f32.mrb[0].mxu0
      %v1900 = vpop.f32.mrb[0].mxu0
      %1901 = vdwg.mxu0
      %s1902 = scalar_lea.vmem %s5, 176
      %v1903 = vld [vmem:[%s1902] sm:$0xf]
      %v1904 = vld [vmem:[%s1902 + $0x4] sm:$0xf]
      %v1905 = vld [vmem:[%s1902 + $0x8] sm:$0xf]
      %v1906 = vld [vmem:[%s1902 + $0xc] sm:$0xf]
      %s1907 = scalar_lea.vmem %s6, 11
      %v1908 = vld [vmem:[%s1907] sm:$0x1]
      %v1910 = vlaneseq
      %v1911 = vshrl.u32 %v1910, 7
      %v1912 = vsub.s32 0, %v1911
      %v1913 = vrot.slane %v1908, %v1912
      %v1919 = vunpack.c.l.b16 %v1903
      %v1920 = vunpack.c.l.b16 %v1904
      %v1921 = vunpack.c.l.b16 %v1905
      %v1922 = vunpack.c.l.b16 %v1906
      %v1923 = vpack.c.b16 %v1920, %v1919
      %v1924 = vpack.c.b16 %v1922, %v1921
      %1927 = vmatprep.subr.bf16.mxu0 0
      %1928 = vmatpush1.bf16.msra.mxu0 %v1923
      %1929 = vmatprep.subr.bf16.mxu0 0
      %1930 = vmatpush1.bf16.msra.mxu0 %v1924
      %1931 = vmatprep.subr.bf16.mxu0 0
      %1932 = vmatpush1.bf16.msra.mxu0 0
      %1933 = vmatprep.subr.bf16.mxu0 0
      %1934 = vmatpush1.bf16.msra.mxu0 0
      %1935 = vmatprep.subr.bf16.mxu0 0
      %1936 = vmatpush1.bf16.msra.mxu0 0
      %1937 = vmatprep.subr.bf16.mxu0 0
      %1938 = vmatpush1.bf16.msra.mxu0 0
      %1939 = vmatprep.subr.bf16.mxu0 0
      %1940 = vmatpush1.bf16.msra.mxu0 0
      %1941 = vmatprep.subr.bf16.mxu0 0
      %1942 = vmatpush1.bf16.msra.mxu0 0
      %1943 = vmatprep.subr.bf16.mxu0 0
      %1944 = vmatpush1.bf16.msra.mxu0 0
      %1945 = vmatprep.subr.bf16.mxu0 0
      %1946 = vmatpush1.bf16.msra.mxu0 0
      %1947 = vmatprep.subr.bf16.mxu0 0
      %1948 = vmatpush1.bf16.msra.mxu0 0
      %1949 = vmatprep.subr.bf16.mxu0 0
      %1950 = vmatpush1.bf16.msra.mxu0 0
      %1951 = vmatprep.subr.bf16.mxu0 0
      %1952 = vmatpush1.bf16.msra.mxu0 0
      %1953 = vmatprep.subr.bf16.mxu0 0
      %1954 = vmatpush1.bf16.msra.mxu0 0
      %1955 = vmatprep.subr.bf16.mxu0 0
      %1956 = vmatpush1.bf16.msra.mxu0 0
      %1957 = vmatprep.subr.bf16.mxu0 0
      %1958 = vmatpush1.bf16.msra.mxu0 0
      %1959 = vmatprep.mubr.bf16.mxu0 0
      %1960 = vmatmul.mubr.bf16.gmra.mrb[0].mxu0 %v732
      %v1961 = vpop.f32.mrb[0].mxu0
      %v1962 = vadd.f32 %v1913, %v1961
      %v1963 = vpop.f32.mrb[0].mxu0
      %v1964 = vpop.f32.mrb[0].mxu0
      %v1965 = vpop.f32.mrb[0].mxu0
      %1966 = vdwg.mxu0
      %v1967 = vpack.c.bf16 %v1832, %v1832
      %v1968 = vpack.c.bf16 %v1897, %v1897
      %v1970 = vsel %vm567, %v1967, 0
      %v1973 = vsel %vm567, %v1968, 0
      %1975 = vmatprep.subr.bf16.mxu0 0
      %1976 = vmatpush1.bf16.xpose.msra.mxu0 %v1973
      %1977 = vmatprep.subr.bf16.mxu0 0
      %1978 = vmatpush1.bf16.xpose.msra.mxu0 0
      %1979 = vmatprep.subr.bf16.mxu0 0
      %1980 = vmatpush1.bf16.xpose.msra.mxu0 0
      %1981 = vmatprep.subr.bf16.mxu0 0
      %1982 = vmatpush1.bf16.xpose.msra.mxu0 0
      %1983 = vmatprep.subr.bf16.mxu0 0
      %1984 = vmatpush1.bf16.xpose.msra.mxu0 0
      %1985 = vmatprep.subr.bf16.mxu0 0
      %1986 = vmatpush1.bf16.xpose.msra.mxu0 0
      %1987 = vmatprep.subr.bf16.mxu0 0
      %1988 = vmatpush1.bf16.xpose.msra.mxu0 0
      %1989 = vmatprep.subr.bf16.mxu0 0
      %1990 = vmatpush1.bf16.xpose.msra.mxu0 0
      %1991 = vmatprep.subr.bf16.mxu0 0
      %1992 = vmatpush1.bf16.xpose.msra.mxu0 0
      %1993 = vmatprep.subr.bf16.mxu0 0
      %1994 = vmatpush1.bf16.xpose.msra.mxu0 0
      %1995 = vmatprep.subr.bf16.mxu0 0
      %1996 = vmatpush1.bf16.xpose.msra.mxu0 0
      %1997 = vmatprep.subr.bf16.mxu0 0
      %1998 = vmatpush1.bf16.xpose.msra.mxu0 0
      %1999 = vmatprep.subr.bf16.mxu0 0
      %2000 = vmatpush1.bf16.xpose.msra.mxu0 0
      %2001 = vmatprep.subr.bf16.mxu0 0
      %2002 = vmatpush1.bf16.xpose.msra.mxu0 0
      %2003 = vmatprep.subr.bf16.mxu0 0
      %2004 = vmatpush1.bf16.xpose.msra.mxu0 0
      %2005 = vmatprep.subr.bf16.mxu0 0
      %2006 = vmatpush1.bf16.xpose.msra.mxu0 0
      %2007 = vmatprep.mubr.bf16.mxu0 0
      %2008 = vmatmul.mubr.bf16.gmra.mrb[0].mxu0 %v1970
      %v2009 = vpop.f32.mrb[0].mxu0
      %v2010 = vadd.f32 0.0, %v2009
      %v2011 = vpop.f32.mrb[0].mxu0
      %v2012 = vpop.f32.mrb[0].mxu0
      %v2013 = vpop.f32.mrb[0].mxu0
      %2014 = vdwg.mxu0
      %v2015 = vmul.f32 %v2010, 0.35355338
      %v2016 = vsel %vm953, -1e+09, %v2015
      %v2017 = vsel %vm567, %v2016, -inf
      %2018 = vmax.xlane.f32.xlu0 %v2017
      %v2019 = vpop.xlane.xlu0 %2018
      %v2020 = vsub.f32 %v2016, %v2019
      %v2021 = vmul.f32 %v2020, 1.442695
      %v2022 = vpow.pop %v2021
      %v2023 = vsel %vm567, %v2022, 0.0
      %2024 = vadd.xlane.f32.xlu0 %v2023
      %v2025 = vpop.xlane.xlu0 %2024
      %v2026 = vrcp.pop %v2025
      %v2027 = vmul.f32 %v2022, %v2026
      %v2028 = vadd.f32 %v2027, %v707
      %v2029 = vpack.c.bf16 %v2028, %v2028
      %v2030 = vpack.c.bf16 %v1962, %v1962
      %v2032 = vsel %vm567, %v2029, 0
      %v2035 = vsel %vm571, %v2030, 0
      %2037 = vmatprep.subr.bf16.mxu0 0
      %2038 = vmatpush1.bf16.msra.mxu0 %v2035
      %2039 = vmatprep.subr.bf16.mxu0 0
      %2040 = vmatpush1.bf16.msra.mxu0 0
      %2041 = vmatprep.subr.bf16.mxu0 0
      %2042 = vmatpush1.bf16.msra.mxu0 0
      %2043 = vmatprep.subr.bf16.mxu0 0
      %2044 = vmatpush1.bf16.msra.mxu0 0
      %2045 = vmatprep.subr.bf16.mxu0 0
      %2046 = vmatpush1.bf16.msra.mxu0 0
      %2047 = vmatprep.subr.bf16.mxu0 0
      %2048 = vmatpush1.bf16.msra.mxu0 0
      %2049 = vmatprep.subr.bf16.mxu0 0
      %2050 = vmatpush1.bf16.msra.mxu0 0
      %2051 = vmatprep.subr.bf16.mxu0 0
      %2052 = vmatpush1.bf16.msra.mxu0 0
      %2053 = vmatprep.subr.bf16.mxu0 0
      %2054 = vmatpush1.bf16.msra.mxu0 0
      %2055 = vmatprep.subr.bf16.mxu0 0
      %2056 = vmatpush1.bf16.msra.mxu0 0
      %2057 = vmatprep.subr.bf16.mxu0 0
      %2058 = vmatpush1.bf16.msra.mxu0 0
      %2059 = vmatprep.subr.bf16.mxu0 0
      %2060 = vmatpush1.bf16.msra.mxu0 0
      %2061 = vmatprep.subr.bf16.mxu0 0
      %2062 = vmatpush1.bf16.msra.mxu0 0
      %2063 = vmatprep.subr.bf16.mxu0 0
      %2064 = vmatpush1.bf16.msra.mxu0 0
      %2065 = vmatprep.subr.bf16.mxu0 0
      %2066 = vmatpush1.bf16.msra.mxu0 0
      %2067 = vmatprep.subr.bf16.mxu0 0
      %2068 = vmatpush1.bf16.msra.mxu0 0
      %2069 = vmatprep.mubr.bf16.mxu0 0
      %2070 = vmatmul.mubr.bf16.gmra.mrb[0].mxu0 %v2032
      %v2071 = vpop.f32.mrb[0].mxu0
      %v2072 = vadd.f32 0.0, %v2071
      %v2073 = vpop.f32.mrb[0].mxu0
      %v2074 = vpop.f32.mrb[0].mxu0
      %v2075 = vpop.f32.mrb[0].mxu0
      %2076 = vdwg.mxu0
      %v2077 = vpack.c.bf16 %v2072, %v2072
      %s2078 = scalar_lea.vmem %s9, 12
      %v2079 = vld [vmem:[%s2078] sm:$0xf]
      %v2081 = vsel %vm567, %v2077, 0
      %v2084 = vsel %vm571, %v2079, 0
      %2086 = vmatprep.subr.bf16.mxu0 0
      %2087 = vmatpush1.bf16.msra.mxu0 %v2084
      %2088 = vmatprep.subr.bf16.mxu0 0
      %2089 = vmatpush1.bf16.msra.mxu0 0
      %2090 = vmatprep.subr.bf16.mxu0 0
      %2091 = vmatpush1.bf16.msra.mxu0 0
      %2092 = vmatprep.subr.bf16.mxu0 0
      %2093 = vmatpush1.bf16.msra.mxu0 0
      %2094 = vmatprep.subr.bf16.mxu0 0
      %2095 = vmatpush1.bf16.msra.mxu0 0
      %2096 = vmatprep.subr.bf16.mxu0 0
      %2097 = vmatpush1.bf16.msra.mxu0 0
      %2098 = vmatprep.subr.bf16.mxu0 0
      %2099 = vmatpush1.bf16.msra.mxu0 0
      %2100 = vmatprep.subr.bf16.mxu0 0
      %2101 = vmatpush1.bf16.msra.mxu0 0
      %2102 = vmatprep.subr.bf16.mxu0 0
      %2103 = vmatpush1.bf16.msra.mxu0 0
      %2104 = vmatprep.subr.bf16.mxu0 0
      %2105 = vmatpush1.bf16.msra.mxu0 0
      %2106 = vmatprep.subr.bf16.mxu0 0
      %2107 = vmatpush1.bf16.msra.mxu0 0
      %2108 = vmatprep.subr.bf16.mxu0 0
      %2109 = vmatpush1.bf16.msra.mxu0 0
      %2110 = vmatprep.subr.bf16.mxu0 0
      %2111 = vmatpush1.bf16.msra.mxu0 0
      %2112 = vmatprep.subr.bf16.mxu0 0
      %2113 = vmatpush1.bf16.msra.mxu0 0
      %2114 = vmatprep.subr.bf16.mxu0 0
      %2115 = vmatpush1.bf16.msra.mxu0 0
      %2116 = vmatprep.subr.bf16.mxu0 0
      %2117 = vmatpush1.bf16.msra.mxu0 0
      %2118 = vmatprep.mubr.bf16.mxu0 0
      %2119 = vmatmul.mubr.bf16.gmra.mrb[0].mxu0 %v2081
      %v2120 = vpop.f32.mrb[0].mxu0
      %v2121 = vadd.f32 0.0, %v2120
      %v2122 = vpop.f32.mrb[0].mxu0
      %v2123 = vpop.f32.mrb[0].mxu0
      %v2124 = vpop.f32.mrb[0].mxu0
      %2125 = vdwg.mxu0
      %v2126 = vadd.f32 %v1771, %v2121
      %v2127 = vadd.f32 %v448, %v2126
      %v2128 = vld [vmem:[%s10] sm:$0x1]
      %v2130 = vlaneseq
      %v2131 = vshrl.u32 %v2130, 7
      %v2132 = vsub.s32 0, %v2131
      %v2133 = vrot.slane %v2128, %v2132
      %v2135 = vadd.f32 %v2127, %v2133
      %2136 = vst.msk [vmem:[%s446] sm:$0xff] %vm452, %v2135
      %p2137 = scmp.lt.s32.totalorder %s24, 1
      %s2138 = scalar_select %p2137, %s24, 1
      %s2139 = smul.addr %s2138, 8
      %s2140 = scalar_lea.vmem %s12, %s2139
      // Predicated region
      $region69: #{transformer_formula_encoder.6} parent=67 // pred_check
        %p2141 = pneg %p309
      $region70: #{transformer_formula_encoder.6} parent=67 // pred_check_branch
        %2143 = sbr.rel (%p2141) target = $region72
      $region71: #{transformer_formula_encoder.6} parent=67 // pred_region
        _
      $region72: #{transformer_formula_encoder.6} parent=67 // pred_fallthru
        _
    $region68: #{transformer_formula_encoder.6} parent=5 // pred_fallthru
      _
    %p2144 = scmp.le.s32.totalorder 2, %s19
    // Predicated region
    $region73: #{transformer_formula_encoder.6} parent=5 // pred_check
      %p2145 = pneg %p2144
    $region74: #{transformer_formula_encoder.6} parent=5 // pred_check_branch
      %2147 = sbr.rel (%p2145) target = $region76
    $region75: #{transformer_formula_encoder.6} parent=5 // pred_region
      %s2148 = ssub.s32 %s19, 2
      // Predicated region
      $region77: #{transformer_formula_encoder.6} parent=75 // pred_check
        %p2149 = pneg %p315
      $region78: #{transformer_formula_encoder.6} parent=75 // pred_check_branch
        %2151 = sbr.rel (%p2149) target = $region80
      $region79: #{transformer_formula_encoder.6} parent=75 // pred_region
        %p2152 = scmp.lt.s32.totalorder %s25, 1
        %s2153 = scalar_select %p2152, %s25, 1
        %s2154 = smul.addr %s2153, 8
        %s2155 = scalar_lea.vmem %s12, %s2154
      $region80: #{transformer_formula_encoder.6} parent=75 // pred_fallthru
        _
    $region76: #{transformer_formula_encoder.6} parent=5 // pred_fallthru
      _
  $region6: #{transformer_formula_encoder.6} parent=0 // loop_footer
    %s23 = sadd.s32 1, %s19
  $region7: #{transformer_formula_encoder.6} parent=0 // loop_footer_branch
    %18 = sbr.rel target = $region3
  $region8: #{transformer_formula_encoder.6} parent=0 // loop_exit
    _

</llo_original>
